<compile_context>
chip_gen: v7x
topology: tpu7x:2x2x1
jax: 0.10.0
libtpu: 0.0.40
codegen_flags: <defaults>
</compile_context>

<pallas_src>
import numpy as np

import jax
import jax.numpy as jnp
from jax.experimental import pallas as pl
from jax.experimental.pallas import tpu as pltpu


# --------------------------- small host-side helpers -------------------------
def _interp_matrix_1d_align_corners(n_in, n_out):
    """Row-stochastic (n_out, n_in) linear-interp operator, align_corners=True."""
    m = np.zeros((n_out, n_in), np.float32)
    if n_out == 1:
        m[0, 0] = 1.0
        return m
    scale = (n_in - 1) / (n_out - 1)
    for i in range(n_out):
        p = i * scale
        p0 = min(int(np.floor(p)), n_in - 1)
        p1 = min(p0 + 1, n_in - 1)
        w = p - p0
        m[i, p0] += 1.0 - w
        m[i, p1] += w
    return m


def _bilinear_x2_matrix_T(h_in, w_in):
    """Transposed separable x2 bilinear operator: (h_in*w_in, 2h_in*2w_in)."""
    uy = _interp_matrix_1d_align_corners(h_in, 2 * h_in)   # (2h, h)
    ux = _interp_matrix_1d_align_corners(w_in, 2 * w_in)   # (2w, w)
    ups = np.kron(uy, ux)                                  # (2h*2w, h*w)
    return jnp.asarray(ups.T, dtype=jnp.float32)           # (h*w, 2h*2w)


def _hwio_to_mat(w_hwio):
    """(3,3,Cin,Cout) HWIO -> (Cout, 9*Cin), matching the in-kernel im2col order."""
    kh, kw, cin, cout = w_hwio.shape
    return jnp.transpose(w_hwio, (3, 0, 1, 2)).reshape(cout, kh * kw * cin)


def fold_bn(gamma, beta, running_mean, running_var, eps=1e-5):
    scale = gamma / jnp.sqrt(running_var + eps)
    bias = beta - running_mean * scale
    return scale, bias


# ------------------------------ fused Pallas kernel --------------------------
def _make_up_doubleconv_kernel(C1, C2, H1, W1, H2, W2, off_y, off_x):
    """Kernel for one batch image: upsample(x1) + pad + concat + DoubleConv."""
    Cin = C1 + C2
    H1u, W1u = 2 * H1, 2 * W1
    M = H2 * W2

    def _im2col(pad_ref, c):
        # (c, H2+2, W2+2) padded image -> (9*c, H2*W2); K=9*c for one MXU matmul.
        cols = []
        for dy in range(3):
            for dx in range(3):
                cols.append(pad_ref[:, dy:dy + H2, dx:dx + W2].reshape(c, M))
        return jnp.concatenate(cols, axis=0)

    def kernel(x1_ref, x2_ref, ups_ref, w1_ref, s1_ref, b1_ref,
               w2_ref, s2_ref, b2_ref, o_ref, xpad_ref, hpad_ref):
        # ---- fused: bilinear x2 upsample (align_corners=True) + F.pad + concat ----
        xpad_ref[...] = jnp.zeros_like(xpad_ref)
        # skip connection (torch.cat puts x2 first)
        xpad_ref[0:C2, 1:1 + H2, 1:1 + W2] = x2_ref[0].astype(jnp.float32)
        # upsample x1 as a single lane-dense matmul with the kron(Uy,Ux) operator
        x1_up = jnp.dot(x1_ref[0].astype(jnp.float32), ups_ref[...],
                        preferred_element_type=jnp.float32)          # (C1, H1u*W1u)
        xpad_ref[C2:C2 + C1,
                 1 + off_y:1 + off_y + H1u,
                 1 + off_x:1 + off_x + W1u] = x1_up.reshape(C1, H1u, W1u)

        # ---- conv1 (3x3, pad=1, no bias) + folded BN + ReLU -----------------
        cols1 = _im2col(xpad_ref, Cin).astype(jnp.bfloat16)           # (9*Cin, M)
        y1 = jnp.dot(w1_ref[...], cols1,
                     preferred_element_type=jnp.float32)              # (Cmid, M)
        h = jnp.maximum(y1 * s1_ref[...] + b1_ref[...], 0.0)          # f32 epilogue

        # intermediate stays in VMEM (no HBM round-trip between the two convs)
        hpad_ref[...] = jnp.zeros_like(hpad_ref)
        hpad_ref[:, 1:1 + H2, 1:1 + W2] = h.reshape(h.shape[0], H2, W2)

        # ---- conv2 (3x3, pad=1, no bias) + folded BN + ReLU -----------------
        Cmid = hpad_ref.shape[0]
        cols2 = _im2col(hpad_ref, Cmid).astype(jnp.bfloat16)          # (9*Cmid, M)
        y2 = jnp.dot(w2_ref[...], cols2,
                     preferred_element_type=jnp.float32)              # (Cout, M)
        o_ref[0] = jnp.maximum(y2 * s2_ref[...] + b2_ref[...], 0.0).astype(o_ref.dtype)

    return kernel


# ----------------------------------- wrapper ---------------------------------
def up_forward(params, x1_nchw, x2_nchw):
    """Matches Up(in_ch, out_ch, bilinear=True).forward(x1, x2); NCHW in/out."""
    N, C1, H1, W1 = x1_nchw.shape
    N2, C2, H2, W2 = x2_nchw.shape
    assert N2 == N
    H1u, W1u = 2 * H1, 2 * W1
    diffY, diffX = H2 - H1u, W2 - W1u
    off_y, off_x = diffY // 2, diffX // 2
    Cin = C1 + C2
    M = H2 * W2

    # Pre-reshaped bf16 conv weights (one K=9*Cin matmul per conv on the MXU).
    w1m = _hwio_to_mat(params["w1"]).astype(jnp.bfloat16)        # (Cmid, 9*Cin)
    w2m = _hwio_to_mat(params["w2"]).astype(jnp.bfloat16)        # (Cout, 9*Cmid)
    Cmid, Cout = w1m.shape[0], w2m.shape[0]
    s1 = params["scale1"].reshape(Cmid, 1).astype(jnp.float32)
    b1 = params["bias1"].reshape(Cmid, 1).astype(jnp.float32)
    s2 = params["scale2"].reshape(Cout, 1).astype(jnp.float32)
    b2 = params["bias2"].reshape(Cout, 1).astype(jnp.float32)

    ups_t = _bilinear_x2_matrix_T(H1, W1)                        # (H1*W1, H1u*W1u)
    x1_flat = x1_nchw.reshape(N, C1, H1 * W1)                    # free (contiguous)

    kernel = _make_up_doubleconv_kernel(C1, C2, H1, W1, H2, W2, off_y, off_x)

    flops = 2 * N * (C1 * (H1 * W1) * (H1u * W1u)                # upsample matmul
                     + M * (9 * Cin) * Cmid                      # conv1
                     + M * (9 * Cmid) * Cout)                    # conv2
    bytes_accessed = int(
        x1_flat.size * x1_flat.dtype.itemsize
        + x2_nchw.size * x2_nchw.dtype.itemsize
        + ups_t.size * 4 + w1m.size * 2 + w2m.size * 2
        + (Cmid + Cout) * 2 * 4
        + N * Cout * M * x2_nchw.dtype.itemsize)
    cost = pl.CostEstimate(flops=flops, transcendentals=0,
                           bytes_accessed=bytes_accessed)

    out = pl.pallas_call(
        kernel,
        out_shape=jax.ShapeDtypeStruct((N, Cout, M), x2_nchw.dtype),
        grid=(N,),
        in_specs=[
            pl.BlockSpec((1, C1, H1 * W1), lambda n: (n, 0, 0)),       # x1 (flat)
            pl.BlockSpec((1, C2, H2, W2), lambda n: (n, 0, 0, 0)),     # x2 (skip)
            pl.BlockSpec((H1 * W1, H1u * W1u), lambda n: (0, 0)),      # upsample op
            pl.BlockSpec((Cmid, 9 * Cin), lambda n: (0, 0)),           # w1 (bf16)
            pl.BlockSpec((Cmid, 1), lambda n: (0, 0)),                 # bn1 scale
            pl.BlockSpec((Cmid, 1), lambda n: (0, 0)),                 # bn1 bias
            pl.BlockSpec((Cout, 9 * Cmid), lambda n: (0, 0)),          # w2 (bf16)
            pl.BlockSpec((Cout, 1), lambda n: (0, 0)),                 # bn2 scale
            pl.BlockSpec((Cout, 1), lambda n: (0, 0)),                 # bn2 bias
        ],
        # lane-dense output: minor dim is H*W (>=128), not Cout
        out_specs=pl.BlockSpec((1, Cout, M), lambda n: (n, 0, 0)),
        scratch_shapes=[
            pltpu.VMEM((Cin, H2 + 2, W2 + 2), jnp.float32),    # padded concat input
            pltpu.VMEM((Cmid, H2 + 2, W2 + 2), jnp.float32),   # padded intermediate
        ],
        compiler_params=pltpu.CompilerParams(
            dimension_semantics=("parallel",)),                # batch across TCs
        cost_estimate=cost,
    )(x1_flat, x2_nchw, ups_t, w1m, s1, b1, w2m, s2, b2)

    # contiguous reshape back to NCHW (free; no transpose needed)
    return out.reshape(N, Cout, H2, W2)


# ----------------------------- synthetic parameters --------------------------
def make_up_params(key, in_channels, out_channels):
    """Deterministic params for Up(in_channels, out_channels, bilinear=True)."""
    mid_channels = in_channels // 2
    k1, k2 = jax.random.split(key)
    # conv weights in HWIO layout (PyTorch OIHW transposed).
    w1 = 0.1 * jax.random.normal(k1, (3, 3, in_channels, mid_channels), jnp.float32)
    w2 = 0.1 * jax.random.normal(k2, (3, 3, mid_channels, out_channels), jnp.float32)
    # BatchNorm2d default init, eval-mode running stats (mean=0, var=1).
    # TODO(synk): training-mode BatchNorm (batch statistics) would need a
    # cross-batch reduction pass; eval-mode folded BN is what is implemented.
    g1 = jnp.ones((mid_channels,), jnp.float32)
    b1 = jnp.zeros((mid_channels,), jnp.float32)
    g2 = jnp.ones((out_channels,), jnp.float32)
    b2 = jnp.zeros((out_channels,), jnp.float32)
    s1, sb1 = fold_bn(g1, b1, jnp.zeros_like(g1), jnp.ones_like(g1))
    s2, sb2 = fold_bn(g2, b2, jnp.zeros_like(g2), jnp.ones_like(g2))
    return dict(w1=w1, scale1=s1, bias1=sb1, w2=w2, scale2=s2, bias2=sb2)


# --------------------------------------- main --------------------------------
if __name__ == "__main__":
    key = jax.random.PRNGKey(0)
    k_x1, k_x2, k_p = jax.random.split(key, 3)

    # Up(in_channels=8, out_channels=8): x1 and x2 each carry in_channels//2=4
    # channels; x1 is at half resolution of x2 (standard UNet decoder step).
    N, C_half = 2, 4
    H1, W1 = 8, 8
    H2, W2 = 16, 16

    x1 = jax.random.normal(k_x1, (N, C_half, H1, W1), jnp.float32)  # NCHW
    x2 = jax.random.normal(k_x2, (N, C_half, H2, W2), jnp.float32)  # NCHW

    params = make_up_params(k_p, in_channels=2 * C_half, out_channels=8)

    out = up_forward(params, x1, x2)
    jax.block_until_ready(out)

    assert out.shape == (N, 8, H2, W2), out.shape
    print("KERNEL_OK")
</pallas_src>

<mosaic_0001>
module attributes {stable_mosaic.version = 11 : i64} {
  func.func @kernel(%arg0: i32, %arg1: memref<1x4x64xf32, #tpu.memory_space<vmem>>, %arg2: memref<1x4x16x16xf32, #tpu.memory_space<vmem>>, %arg3: memref<64x256xf32, #tpu.memory_space<vmem>>, %arg4: memref<4x72xbf16, #tpu.memory_space<vmem>>, %arg5: memref<4x1xf32, #tpu.memory_space<vmem>>, %arg6: memref<4x1xf32, #tpu.memory_space<vmem>>, %arg7: memref<8x36xbf16, #tpu.memory_space<vmem>>, %arg8: memref<8x1xf32, #tpu.memory_space<vmem>>, %arg9: memref<8x1xf32, #tpu.memory_space<vmem>>, %arg10: memref<1x8x256xf32, #tpu.memory_space<vmem>>, %arg11: memref<8x18x18xf32, #tpu.memory_space<vmem>>, %arg12: memref<4x18x18xf32, #tpu.memory_space<vmem>>) attributes {dimension_semantics = [#tpu.dimension_semantics<parallel>], iteration_bounds = array<i64: 2>, scalar_prefetch = 0 : i64, scratch_operands = 2 : i64, tpu.core_type = #tpu.core_type<tc>, window_params = [{transform_indices = @transform_0, window_bounds = array<i64: 1, 4, 64>}, {transform_indices = @transform_1, window_bounds = array<i64: 1, 4, 16, 16>}, {pipeline_mode = #tpu.pipeline_mode<synchronous>, transform_indices = @transform_2, window_bounds = array<i64: 64, 256>}, {pipeline_mode = #tpu.pipeline_mode<synchronous>, transform_indices = @transform_3, window_bounds = array<i64: 4, 72>}, {pipeline_mode = #tpu.pipeline_mode<synchronous>, transform_indices = @transform_4, window_bounds = array<i64: 4, 1>}, {pipeline_mode = #tpu.pipeline_mode<synchronous>, transform_indices = @transform_5, window_bounds = array<i64: 4, 1>}, {pipeline_mode = #tpu.pipeline_mode<synchronous>, transform_indices = @transform_6, window_bounds = array<i64: 8, 36>}, {pipeline_mode = #tpu.pipeline_mode<synchronous>, transform_indices = @transform_7, window_bounds = array<i64: 8, 1>}, {pipeline_mode = #tpu.pipeline_mode<synchronous>, transform_indices = @transform_8, window_bounds = array<i64: 8, 1>}, {transform_indices = @transform_9, window_bounds = array<i64: 1, 8, 256>}]} {
    %cst = arith.constant 0.000000e+00 : f32
    %0 = vector.broadcast %cst : f32 to vector<8x18x18xf32>
    %c0 = arith.constant 0 : index
    %c0_0 = arith.constant 0 : index
    %c0_1 = arith.constant 0 : index
    %1 = vector.load %arg11[%c0, %c0_0, %c0_1] : memref<8x18x18xf32, #tpu.memory_space<vmem>>, vector<8x18x18xf32>
    tpu.vector_store %arg11[%c0, %c0_0, %c0_1], %0 {strides = array<i32>} : memref<8x18x18xf32, #tpu.memory_space<vmem>>, vector<8x18x18xf32>,
    %c0_2 = arith.constant 0 : index
    %c0_3 = arith.constant 0 : index
    %c0_4 = arith.constant 0 : index
    %c0_5 = arith.constant 0 : index
    %2 = vector.load %arg2[%c0_2, %c0_3, %c0_4, %c0_5] : memref<1x4x16x16xf32, #tpu.memory_space<vmem>>, vector<1x4x16x16xf32>
    %3 = vector.shape_cast %2 : vector<1x4x16x16xf32> to vector<4x16x16xf32>
    %c0_6 = arith.constant 0 : index
    %c1 = arith.constant 1 : index
    %c1_7 = arith.constant 1 : index
    %4 = vector.load %arg11[%c0_6, %c1, %c1_7] : memref<8x18x18xf32, #tpu.memory_space<vmem>>, vector<4x16x16xf32>
    tpu.vector_store %arg11[%c0_6, %c1, %c1_7], %3 {strides = array<i32>} : memref<8x18x18xf32, #tpu.memory_space<vmem>>, vector<4x16x16xf32>,
    %c0_8 = arith.constant 0 : index
    %c0_9 = arith.constant 0 : index
    %c0_10 = arith.constant 0 : index
    %5 = vector.load %arg1[%c0_8, %c0_9, %c0_10] : memref<1x4x64xf32, #tpu.memory_space<vmem>>, vector<1x4x64xf32>
    %6 = vector.shape_cast %5 : vector<1x4x64xf32> to vector<4x64xf32>
    %c0_11 = arith.constant 0 : index
    %c0_12 = arith.constant 0 : index
    %7 = vector.load %arg3[%c0_11, %c0_12] : memref<64x256xf32, #tpu.memory_space<vmem>>, vector<64x256xf32>
    %cst_13 = arith.constant dense<0.000000e+00> : vector<4x256xf32>
    %8 = tpu.matmul %6, %7, %cst_13 {dimension_numbers = #tpu.dot_dimension_numbers<[1], [0], [0], [1], [0, 0, 1, 1], [], []>} : vector<4x64xf32>, vector<64x256xf32>, vector<4x256xf32> -> vector<4x256xf32>
    %9 = vector.shape_cast %8 : vector<4x256xf32> to vector<4x16x16xf32>
    %c4 = arith.constant 4 : index
    %c1_14 = arith.constant 1 : index
    %c1_15 = arith.constant 1 : index
    %10 = vector.load %arg11[%c4, %c1_14, %c1_15] : memref<8x18x18xf32, #tpu.memory_space<vmem>>, vector<4x16x16xf32>
    tpu.vector_store %arg11[%c4, %c1_14, %c1_15], %9 {strides = array<i32>} : memref<8x18x18xf32, #tpu.memory_space<vmem>>, vector<4x16x16xf32>,
    %c0_16 = arith.constant 0 : index
    %c0_17 = arith.constant 0 : index
    %c0_18 = arith.constant 0 : index
    %11 = vector.load %arg11[%c0_16, %c0_17, %c0_18] : memref<8x18x18xf32, #tpu.memory_space<vmem>>, vector<8x16x16xf32>
    %12 = vector.shape_cast %11 : vector<8x16x16xf32> to vector<8x256xf32>
    %c0_19 = arith.constant 0 : index
    %c0_20 = arith.constant 0 : index
    %c1_21 = arith.constant 1 : index
    %13 = vector.load %arg11[%c0_19, %c0_20, %c1_21] : memref<8x18x18xf32, #tpu.memory_space<vmem>>, vector<8x16x16xf32>
    %14 = vector.shape_cast %13 : vector<8x16x16xf32> to vector<8x256xf32>
    %c0_22 = arith.constant 0 : index
    %c0_23 = arith.constant 0 : index
    %c2 = arith.constant 2 : index
    %15 = vector.load %arg11[%c0_22, %c0_23, %c2] : memref<8x18x18xf32, #tpu.memory_space<vmem>>, vector<8x16x16xf32>
    %16 = vector.shape_cast %15 : vector<8x16x16xf32> to vector<8x256xf32>
    %c0_24 = arith.constant 0 : index
    %c1_25 = arith.constant 1 : index
    %c0_26 = arith.constant 0 : index
    %17 = vector.load %arg11[%c0_24, %c1_25, %c0_26] : memref<8x18x18xf32, #tpu.memory_space<vmem>>, vector<8x16x16xf32>
    %18 = vector.shape_cast %17 : vector<8x16x16xf32> to vector<8x256xf32>
    %c0_27 = arith.constant 0 : index
    %c1_28 = arith.constant 1 : index
    %c1_29 = arith.constant 1 : index
    %19 = vector.load %arg11[%c0_27, %c1_28, %c1_29] : memref<8x18x18xf32, #tpu.memory_space<vmem>>, vector<8x16x16xf32>
    %20 = vector.shape_cast %19 : vector<8x16x16xf32> to vector<8x256xf32>
    %c0_30 = arith.constant 0 : index
    %c1_31 = arith.constant 1 : index
    %c2_32 = arith.constant 2 : index
    %21 = vector.load %arg11[%c0_30, %c1_31, %c2_32] : memref<8x18x18xf32, #tpu.memory_space<vmem>>, vector<8x16x16xf32>
    %22 = vector.shape_cast %21 : vector<8x16x16xf32> to vector<8x256xf32>
    %c0_33 = arith.constant 0 : index
    %c2_34 = arith.constant 2 : index
    %c0_35 = arith.constant 0 : index
    %23 = vector.load %arg11[%c0_33, %c2_34, %c0_35] : memref<8x18x18xf32, #tpu.memory_space<vmem>>, vector<8x16x16xf32>
    %24 = vector.shape_cast %23 : vector<8x16x16xf32> to vector<8x256xf32>
    %c0_36 = arith.constant 0 : index
    %c2_37 = arith.constant 2 : index
    %c1_38 = arith.constant 1 : index
    %25 = vector.load %arg11[%c0_36, %c2_37, %c1_38] : memref<8x18x18xf32, #tpu.memory_space<vmem>>, vector<8x16x16xf32>
    %26 = vector.shape_cast %25 : vector<8x16x16xf32> to vector<8x256xf32>
    %c0_39 = arith.constant 0 : index
    %c2_40 = arith.constant 2 : index
    %c2_41 = arith.constant 2 : index
    %27 = vector.load %arg11[%c0_39, %c2_40, %c2_41] : memref<8x18x18xf32, #tpu.memory_space<vmem>>, vector<8x16x16xf32>
    %28 = vector.shape_cast %27 : vector<8x16x16xf32> to vector<8x256xf32>
    %29 = tpu.concatenate %12, %14, %16, %18, %20, %22, %24, %26, %28 in 0 : vector<8x256xf32>, vector<8x256xf32>, vector<8x256xf32>, vector<8x256xf32>, vector<8x256xf32>, vector<8x256xf32>, vector<8x256xf32>, vector<8x256xf32>, vector<8x256xf32> -> vector<72x256xf32>
    %30 = arith.truncf %29 : vector<72x256xf32> to vector<72x256xbf16>
    %c0_42 = arith.constant 0 : index
    %c0_43 = arith.constant 0 : index
    %31 = vector.load %arg4[%c0_42, %c0_43] : memref<4x72xbf16, #tpu.memory_space<vmem>>, vector<4x72xbf16>
    %cst_44 = arith.constant dense<0.000000e+00> : vector<4x256xf32>
    %32 = tpu.matmul %31, %30, %cst_44 {dimension_numbers = #tpu.dot_dimension_numbers<[1], [0], [0], [1], [0, 0, 1, 1], [], []>} : vector<4x72xbf16>, vector<72x256xbf16>, vector<4x256xf32> -> vector<4x256xf32>
    %c0_45 = arith.constant 0 : index
    %c0_46 = arith.constant 0 : index
    %33 = vector.load %arg5[%c0_45, %c0_46] : memref<4x1xf32, #tpu.memory_space<vmem>>, vector<4x1xf32>
    %34 = vector.broadcast %33 : vector<4x1xf32> to vector<4x256xf32>
    %35 = arith.mulf %32, %34 : vector<4x256xf32>
    %c0_47 = arith.constant 0 : index
    %c0_48 = arith.constant 0 : index
    %36 = vector.load %arg6[%c0_47, %c0_48] : memref<4x1xf32, #tpu.memory_space<vmem>>, vector<4x1xf32>
    %37 = vector.broadcast %36 : vector<4x1xf32> to vector<4x256xf32>
    %38 = arith.addf %35, %37 : vector<4x256xf32>
    %cst_49 = arith.constant 0.000000e+00 : f32
    %39 = vector.broadcast %cst_49 : f32 to vector<4x256xf32>
    %40 = arith.maximumf %38, %39 : vector<4x256xf32>
    %cst_50 = arith.constant 0.000000e+00 : f32
    %41 = vector.broadcast %cst_50 : f32 to vector<4x18x18xf32>
    %c0_51 = arith.constant 0 : index
    %c0_52 = arith.constant 0 : index
    %c0_53 = arith.constant 0 : index
    %42 = vector.load %arg12[%c0_51, %c0_52, %c0_53] : memref<4x18x18xf32, #tpu.memory_space<vmem>>, vector<4x18x18xf32>
    tpu.vector_store %arg12[%c0_51, %c0_52, %c0_53], %41 {strides = array<i32>} : memref<4x18x18xf32, #tpu.memory_space<vmem>>, vector<4x18x18xf32>,
    %43 = vector.shape_cast %40 : vector<4x256xf32> to vector<4x16x16xf32>
    %c0_54 = arith.constant 0 : index
    %c1_55 = arith.constant 1 : index
    %c1_56 = arith.constant 1 : index
    %44 = vector.load %arg12[%c0_54, %c1_55, %c1_56] : memref<4x18x18xf32, #tpu.memory_space<vmem>>, vector<4x16x16xf32>
    tpu.vector_store %arg12[%c0_54, %c1_55, %c1_56], %43 {strides = array<i32>} : memref<4x18x18xf32, #tpu.memory_space<vmem>>, vector<4x16x16xf32>,
    %c0_57 = arith.constant 0 : index
    %c0_58 = arith.constant 0 : index
    %c0_59 = arith.constant 0 : index
    %45 = vector.load %arg12[%c0_57, %c0_58, %c0_59] : memref<4x18x18xf32, #tpu.memory_space<vmem>>, vector<4x16x16xf32>
    %46 = vector.shape_cast %45 : vector<4x16x16xf32> to vector<4x256xf32>
    %c0_60 = arith.constant 0 : index
    %c0_61 = arith.constant 0 : index
    %c1_62 = arith.constant 1 : index
    %47 = vector.load %arg12[%c0_60, %c0_61, %c1_62] : memref<4x18x18xf32, #tpu.memory_space<vmem>>, vector<4x16x16xf32>
    %48 = vector.shape_cast %47 : vector<4x16x16xf32> to vector<4x256xf32>
    %c0_63 = arith.constant 0 : index
    %c0_64 = arith.constant 0 : index
    %c2_65 = arith.constant 2 : index
    %49 = vector.load %arg12[%c0_63, %c0_64, %c2_65] : memref<4x18x18xf32, #tpu.memory_space<vmem>>, vector<4x16x16xf32>
    %50 = vector.shape_cast %49 : vector<4x16x16xf32> to vector<4x256xf32>
    %c0_66 = arith.constant 0 : index
    %c1_67 = arith.constant 1 : index
    %c0_68 = arith.constant 0 : index
    %51 = vector.load %arg12[%c0_66, %c1_67, %c0_68] : memref<4x18x18xf32, #tpu.memory_space<vmem>>, vector<4x16x16xf32>
    %52 = vector.shape_cast %51 : vector<4x16x16xf32> to vector<4x256xf32>
    %c0_69 = arith.constant 0 : index
    %c1_70 = arith.constant 1 : index
    %c1_71 = arith.constant 1 : index
    %53 = vector.load %arg12[%c0_69, %c1_70, %c1_71] : memref<4x18x18xf32, #tpu.memory_space<vmem>>, vector<4x16x16xf32>
    %54 = vector.shape_cast %53 : vector<4x16x16xf32> to vector<4x256xf32>
    %c0_72 = arith.constant 0 : index
    %c1_73 = arith.constant 1 : index
    %c2_74 = arith.constant 2 : index
    %55 = vector.load %arg12[%c0_72, %c1_73, %c2_74] : memref<4x18x18xf32, #tpu.memory_space<vmem>>, vector<4x16x16xf32>
    %56 = vector.shape_cast %55 : vector<4x16x16xf32> to vector<4x256xf32>
    %c0_75 = arith.constant 0 : index
    %c2_76 = arith.constant 2 : index
    %c0_77 = arith.constant 0 : index
    %57 = vector.load %arg12[%c0_75, %c2_76, %c0_77] : memref<4x18x18xf32, #tpu.memory_space<vmem>>, vector<4x16x16xf32>
    %58 = vector.shape_cast %57 : vector<4x16x16xf32> to vector<4x256xf32>
    %c0_78 = arith.constant 0 : index
    %c2_79 = arith.constant 2 : index
    %c1_80 = arith.constant 1 : index
    %59 = vector.load %arg12[%c0_78, %c2_79, %c1_80] : memref<4x18x18xf32, #tpu.memory_space<vmem>>, vector<4x16x16xf32>
    %60 = vector.shape_cast %59 : vector<4x16x16xf32> to vector<4x256xf32>
    %c0_81 = arith.constant 0 : index
    %c2_82 = arith.constant 2 : index
    %c2_83 = arith.constant 2 : index
    %61 = vector.load %arg12[%c0_81, %c2_82, %c2_83] : memref<4x18x18xf32, #tpu.memory_space<vmem>>, vector<4x16x16xf32>
    %62 = vector.shape_cast %61 : vector<4x16x16xf32> to vector<4x256xf32>
    %63 = tpu.concatenate %46, %48, %50, %52, %54, %56, %58, %60, %62 in 0 : vector<4x256xf32>, vector<4x256xf32>, vector<4x256xf32>, vector<4x256xf32>, vector<4x256xf32>, vector<4x256xf32>, vector<4x256xf32>, vector<4x256xf32>, vector<4x256xf32> -> vector<36x256xf32>
    %64 = arith.truncf %63 : vector<36x256xf32> to vector<36x256xbf16>
    %c0_84 = arith.constant 0 : index
    %c0_85 = arith.constant 0 : index
    %65 = vector.load %arg7[%c0_84, %c0_85] : memref<8x36xbf16, #tpu.memory_space<vmem>>, vector<8x36xbf16>
    %cst_86 = arith.constant dense<0.000000e+00> : vector<8x256xf32>
    %66 = tpu.matmul %65, %64, %cst_86 {dimension_numbers = #tpu.dot_dimension_numbers<[1], [0], [0], [1], [0, 0, 1, 1], [], []>} : vector<8x36xbf16>, vector<36x256xbf16>, vector<8x256xf32> -> vector<8x256xf32>
    %c0_87 = arith.constant 0 : index
    %c0_88 = arith.constant 0 : index
    %67 = vector.load %arg8[%c0_87, %c0_88] : memref<8x1xf32, #tpu.memory_space<vmem>>, vector<8x1xf32>
    %68 = vector.broadcast %67 : vector<8x1xf32> to vector<8x256xf32>
    %69 = arith.mulf %66, %68 : vector<8x256xf32>
    %c0_89 = arith.constant 0 : index
    %c0_90 = arith.constant 0 : index
    %70 = vector.load %arg9[%c0_89, %c0_90] : memref<8x1xf32, #tpu.memory_space<vmem>>, vector<8x1xf32>
    %71 = vector.broadcast %70 : vector<8x1xf32> to vector<8x256xf32>
    %72 = arith.addf %69, %71 : vector<8x256xf32>
    %cst_91 = arith.constant 0.000000e+00 : f32
    %73 = vector.broadcast %cst_91 : f32 to vector<8x256xf32>
    %74 = arith.maximumf %72, %73 : vector<8x256xf32>
    %c0_92 = arith.constant 0 : index
    %c0_93 = arith.constant 0 : index
    %c0_94 = arith.constant 0 : index
    %75 = vector.load %arg10[%c0_92, %c0_93, %c0_94] : memref<1x8x256xf32, #tpu.memory_space<vmem>>, vector<1x8x256xf32>
    %76 = vector.shape_cast %75 : vector<1x8x256xf32> to vector<8x256xf32>
    %77 = vector.shape_cast %74 : vector<8x256xf32> to vector<1x8x256xf32>
    tpu.vector_store %arg10[%c0_92, %c0_93, %c0_94], %77 {strides = array<i32>} : memref<1x8x256xf32, #tpu.memory_space<vmem>>, vector<1x8x256xf32>,
    return
  }
  func.func @transform_0(%arg0: i32) -> (i32, i32, i32) {
    %c0_i32 = arith.constant 0 : i32
    %c0_i32_0 = arith.constant 0 : i32
    %c0_i32_1 = arith.constant 0 : i32
    return %arg0, %c0_i32, %c0_i32_0 : i32, i32, i32
  }
  func.func @transform_1(%arg0: i32) -> (i32, i32, i32, i32) {
    %c0_i32 = arith.constant 0 : i32
    %c0_i32_0 = arith.constant 0 : i32
    %c0_i32_1 = arith.constant 0 : i32
    %c0_i32_2 = arith.constant 0 : i32
    return %arg0, %c0_i32, %c0_i32_0, %c0_i32_1 : i32, i32, i32, i32
  }
  func.func @transform_2(%arg0: i32) -> (i32, i32) {
    %c0_i32 = arith.constant 0 : i32
    %c0_i32_0 = arith.constant 0 : i32
    %c0_i32_1 = arith.constant 0 : i32
    return %c0_i32, %c0_i32_0 : i32, i32
  }
  func.func @transform_3(%arg0: i32) -> (i32, i32) {
    %c0_i32 = arith.constant 0 : i32
    %c0_i32_0 = arith.constant 0 : i32
    %c0_i32_1 = arith.constant 0 : i32
    return %c0_i32, %c0_i32_0 : i32, i32
  }
  func.func @transform_4(%arg0: i32) -> (i32, i32) {
    %c0_i32 = arith.constant 0 : i32
    %c0_i32_0 = arith.constant 0 : i32
    %c0_i32_1 = arith.constant 0 : i32
    return %c0_i32, %c0_i32_0 : i32, i32
  }
  func.func @transform_5(%arg0: i32) -> (i32, i32) {
    %c0_i32 = arith.constant 0 : i32
    %c0_i32_0 = arith.constant 0 : i32
    %c0_i32_1 = arith.constant 0 : i32
    return %c0_i32, %c0_i32_0 : i32, i32
  }
  func.func @transform_6(%arg0: i32) -> (i32, i32) {
    %c0_i32 = arith.constant 0 : i32
    %c0_i32_0 = arith.constant 0 : i32
    %c0_i32_1 = arith.constant 0 : i32
    return %c0_i32, %c0_i32_0 : i32, i32
  }
  func.func @transform_7(%arg0: i32) -> (i32, i32) {
    %c0_i32 = arith.constant 0 : i32
    %c0_i32_0 = arith.constant 0 : i32
    %c0_i32_1 = arith.constant 0 : i32
    return %c0_i32, %c0_i32_0 : i32, i32
  }
  func.func @transform_8(%arg0: i32) -> (i32, i32) {
    %c0_i32 = arith.constant 0 : i32
    %c0_i32_0 = arith.constant 0 : i32
    %c0_i32_1 = arith.constant 0 : i32
    return %c0_i32, %c0_i32_0 : i32, i32
  }
  func.func @transform_9(%arg0: i32) -> (i32, i32, i32) {
    %c0_i32 = arith.constant 0 : i32
    %c0_i32_0 = arith.constant 0 : i32
    %c0_i32_1 = arith.constant 0 : i32
    return %arg0, %c0_i32, %c0_i32_0 : i32, i32, i32
  }
}

</mosaic_0001>

<llo_original>
// kernel: tpu_custom_call.1
$region0: #{tpu_custom_call.1}
  #allocation0 [shape = 'u32[]', space=smem, size = 0x4, offset = 0x4, fixed_abs, tag = 'smem constant byte address 0x4 - core index']
  #allocation1 [shape = 'u32[144,128]{1,0:T(1,128)}', space=vmem, size = 0x12000, scoped, tag = 'internal scratch']
  #allocation2 [shape = 'f32[8,18,18]{2,1,0:T(8,128)}', space=vmem, size = 0x18000, scoped, tag = 'scratch operand']
  #allocation3 [shape = 'f32[4,18,18]{2,1,0:T(8,128)}', space=vmem, size = 0xc000, scoped, tag = 'scratch operand']
  %s0 = inlined_call_operand.vmem [shape: f32[2,4,64], index: 0, kind: input, shape index: {}]
  %s1 = inlined_call_operand.hbm [shape: f32[2,4,16,16], index: 1, kind: input, shape index: {}]
  %s2 = inlined_call_operand.hbm [shape: f32[64,256], index: 2, kind: input, shape index: {}]
  %s3 = inlined_call_operand.vmem [shape: bf16[4,72], index: 3, kind: input, shape index: {}]
  %s4 = inlined_call_operand.vmem [shape: f32[4,1], index: 4, kind: input, shape index: {}]
  %s5 = inlined_call_operand.vmem [shape: f32[4,1], index: 5, kind: input, shape index: {}]
  %s6 = inlined_call_operand.vmem [shape: bf16[8,36], index: 6, kind: input, shape index: {}]
  %s7 = inlined_call_operand.vmem [shape: f32[8,1], index: 7, kind: input, shape index: {}]
  %s8 = inlined_call_operand.vmem [shape: f32[8,1], index: 8, kind: input, shape index: {}]
  %s9 = inlined_call_operand.hbm [shape: f32[2,8,256], index: 9, kind: output, shape index: {}]
  %s10 = sld [smem:[#allocation0]]
  $region77: #{tpu_custom_call.1} parent=0
    _
  %s12 = ssub.s32 1, %s10
  %s13 = scalar_select 0, %s12, %s10
  $region1: #{tpu_custom_call.1} parent=0
    #allocation4 [shape = 'u8[65536]{0}', space=vmem, size = 0x10000, scoped, tag = 'input window, operand 1']
    #allocation5 [shape = 's32[2]{0}', space=sflag, size = 0x8, scoped, tag = 'scoped memory for tpu_custom_call.1']
    #allocation6 [shape = 's32[2]{0}', space=sflag, size = 0x8, scoped, tag = 'scoped memory for tpu_custom_call.1']
    #allocation7 [shape = 'u8[65536]{0}', space=vmem, size = 0x10000, scoped, tag = 'input window, operand 2, single buffered']
    #allocation8 [shape = 's32[1]{0}', space=sflag, size = 0x4, scoped, tag = 'scoped memory for tpu_custom_call.1']
    #allocation9 [shape = 'u8[16384]{0}', space=vmem, size = 0x4000, scoped, tag = 'output window, operand 0']
    %14 = vsyncpa [#allocation5], 0
    %s15 = scalar_lea.sflag [#allocation5], 1
    %16 = vsyncpa %s15, 0
    %17 = vsyncpa [#allocation8], 0
    %18 = vsyncpa [#allocation6], 0
    %s19 = scalar_lea.sflag [#allocation6], 1
    %20 = vsyncpa %s19, 0
    loop: start=0, step=1, limit=4
    $region2: #{tpu_custom_call.1} parent=1 // loop_pre_header
      _
    $region3: #{tpu_custom_call.1} parent=1 // loop_header
      %s22 = sphi 0, %s26
      %p23 = scmp.ge.s32.totalorder %s22, 4
      %s32 = sphi 0, %s34
      %s35 = sphi 0, %s32
      %s36 = sphi 0, %s35
      %s52 = sphi 0, %s36
      %s58 = sphi 0, %s60
      %s61 = sphi 0, %s58
      %s62 = sphi 0, %s61
      %s78 = sphi 0, %s62
      %s82 = sphi 0, %s82
      %s84 = sphi 0, %s82
      %s85 = sphi 0, %s84
      %s99 = sphi 0, %s85
      %s103 = sphi 0, %s103
      %s105 = sphi 0, %s103
      %s106 = sphi 0, %s105
      %s120 = sphi 0, %s106
      %s124 = sphi 0, %s124
      %s126 = sphi 0, %s124
      %s127 = sphi 0, %s126
      %s141 = sphi 0, %s127
      %s145 = sphi 0, %s145
      %s147 = sphi 0, %s145
      %s148 = sphi 0, %s147
      %s162 = sphi 0, %s148
      %s166 = sphi 0, %s166
      %s168 = sphi 0, %s166
      %s169 = sphi 0, %s168
      %s183 = sphi 0, %s169
      %s187 = sphi 0, %s187
      %s189 = sphi 0, %s187
      %s190 = sphi 0, %s189
      %s204 = sphi 0, %s190
      %s208 = sphi 0, %s208
      %s210 = sphi 0, %s208
      %s211 = sphi 0, %s210
      %s225 = sphi 0, %s211
      %s231 = sphi 0, %s233
      %s234 = sphi 0, %s231
      %s235 = sphi 0, %s234
      %s251 = sphi 0, %s235
    $region4: #{tpu_custom_call.1} parent=1 // loop_header_branch
      %25 = sbr.rel (%p23) target = $region8
    $region5: #{tpu_custom_call.1} parent=1 // loop_body
      %s27 = ssub.s32 %s22, 1
      %s28 = ssub.s32 %s22, 2
      %s29 = sadd.s32 %s22, 1
      %s30 = ssub.s32 %s22, %s29
      %p31 = scmp.eq.s32.totalorder %s30, 0
      %s33 = sadd.s32 %s32, 1
      %s34 = scalar_select %p31, %s32, %s33
      %p37 = pneg %p31
      %p38 = scmp.eq.s32.totalorder %s22, 1
      %p39 = por %p37, %p38
      %p40 = scmp.ne.s32.totalorder %s32, %s35
      %p41 = scmp.eq.s32.totalorder %s22, 0
      %p42 = por %p40, %p41
      %p43 = scmp.ne.s32.totalorder %s32, %s35
      %p44 = scmp.eq.s32.totalorder %s27, 1
      %p45 = por %p43, %p44
      %p46 = scmp.ne.s32.totalorder %s35, %s36
      %p47 = scmp.eq.s32.totalorder %s27, 0
      %p48 = por %p46, %p47
      %p49 = scmp.ne.s32.totalorder %s35, %s36
      %p50 = scmp.eq.s32.totalorder %s28, 1
      %p51 = por %p49, %p50
      %p53 = scmp.ne.s32.totalorder %s36, %s52
      %p54 = scmp.eq.s32.totalorder %s28, 0
      %p55 = por %p53, %p54
      %s56 = ssub.s32 %s22, %s29
      %p57 = scmp.eq.s32.totalorder %s56, 0
      %s59 = sadd.s32 %s58, 1
      %s60 = scalar_select %p57, %s58, %s59
      %p63 = pneg %p57
      %p64 = scmp.eq.s32.totalorder %s22, 1
      %p65 = por %p63, %p64
      %p66 = scmp.ne.s32.totalorder %s58, %s61
      %p67 = scmp.eq.s32.totalorder %s22, 0
      %p68 = por %p66, %p67
      %p69 = scmp.ne.s32.totalorder %s58, %s61
      %p70 = scmp.eq.s32.totalorder %s27, 1
      %p71 = por %p69, %p70
      %p72 = scmp.ne.s32.totalorder %s61, %s62
      %p73 = scmp.eq.s32.totalorder %s27, 0
      %p74 = por %p72, %p73
      %p75 = scmp.ne.s32.totalorder %s61, %s62
      %p76 = scmp.eq.s32.totalorder %s28, 1
      %p77 = por %p75, %p76
      %p79 = scmp.ne.s32.totalorder %s62, %s78
      %p80 = scmp.eq.s32.totalorder %s28, 0
      %p81 = por %p79, %p80
      %s83 = sadd.s32 %s82, 1
      %p86 = scmp.eq.s32.totalorder %s22, 1
      %p87 = scmp.ne.s32.totalorder %s82, %s84
      %p88 = scmp.eq.s32.totalorder %s22, 0
      %p89 = por %p87, %p88
      %p90 = scmp.ne.s32.totalorder %s82, %s84
      %p91 = scmp.eq.s32.totalorder %s27, 1
      %p92 = por %p90, %p91
      %p93 = scmp.ne.s32.totalorder %s84, %s85
      %p94 = scmp.eq.s32.totalorder %s27, 0
      %p95 = por %p93, %p94
      %p96 = scmp.ne.s32.totalorder %s84, %s85
      %p97 = scmp.eq.s32.totalorder %s28, 1
      %p98 = por %p96, %p97
      %p100 = scmp.ne.s32.totalorder %s85, %s99
      %p101 = scmp.eq.s32.totalorder %s28, 0
      %p102 = por %p100, %p101
      %s104 = sadd.s32 %s103, 1
      %p107 = scmp.eq.s32.totalorder %s22, 1
      %p108 = scmp.ne.s32.totalorder %s103, %s105
      %p109 = scmp.eq.s32.totalorder %s22, 0
      %p110 = por %p108, %p109
      %p111 = scmp.ne.s32.totalorder %s103, %s105
      %p112 = scmp.eq.s32.totalorder %s27, 1
      %p113 = por %p111, %p112
      %p114 = scmp.ne.s32.totalorder %s105, %s106
      %p115 = scmp.eq.s32.totalorder %s27, 0
      %p116 = por %p114, %p115
      %p117 = scmp.ne.s32.totalorder %s105, %s106
      %p118 = scmp.eq.s32.totalorder %s28, 1
      %p119 = por %p117, %p118
      %p121 = scmp.ne.s32.totalorder %s106, %s120
      %p122 = scmp.eq.s32.totalorder %s28, 0
      %p123 = por %p121, %p122
      %s125 = sadd.s32 %s124, 1
      %p128 = scmp.eq.s32.totalorder %s22, 1
      %p129 = scmp.ne.s32.totalorder %s124, %s126
      %p130 = scmp.eq.s32.totalorder %s22, 0
      %p131 = por %p129, %p130
      %p132 = scmp.ne.s32.totalorder %s124, %s126
      %p133 = scmp.eq.s32.totalorder %s27, 1
      %p134 = por %p132, %p133
      %p135 = scmp.ne.s32.totalorder %s126, %s127
      %p136 = scmp.eq.s32.totalorder %s27, 0
      %p137 = por %p135, %p136
      %p138 = scmp.ne.s32.totalorder %s126, %s127
      %p139 = scmp.eq.s32.totalorder %s28, 1
      %p140 = por %p138, %p139
      %p142 = scmp.ne.s32.totalorder %s127, %s141
      %p143 = scmp.eq.s32.totalorder %s28, 0
      %p144 = por %p142, %p143
      %s146 = sadd.s32 %s145, 1
      %p149 = scmp.eq.s32.totalorder %s22, 1
      %p150 = scmp.ne.s32.totalorder %s145, %s147
      %p151 = scmp.eq.s32.totalorder %s22, 0
      %p152 = por %p150, %p151
      %p153 = scmp.ne.s32.totalorder %s145, %s147
      %p154 = scmp.eq.s32.totalorder %s27, 1
      %p155 = por %p153, %p154
      %p156 = scmp.ne.s32.totalorder %s147, %s148
      %p157 = scmp.eq.s32.totalorder %s27, 0
      %p158 = por %p156, %p157
      %p159 = scmp.ne.s32.totalorder %s147, %s148
      %p160 = scmp.eq.s32.totalorder %s28, 1
      %p161 = por %p159, %p160
      %p163 = scmp.ne.s32.totalorder %s148, %s162
      %p164 = scmp.eq.s32.totalorder %s28, 0
      %p165 = por %p163, %p164
      %s167 = sadd.s32 %s166, 1
      %p170 = scmp.eq.s32.totalorder %s22, 1
      %p171 = scmp.ne.s32.totalorder %s166, %s168
      %p172 = scmp.eq.s32.totalorder %s22, 0
      %p173 = por %p171, %p172
      %p174 = scmp.ne.s32.totalorder %s166, %s168
      %p175 = scmp.eq.s32.totalorder %s27, 1
      %p176 = por %p174, %p175
      %p177 = scmp.ne.s32.totalorder %s168, %s169
      %p178 = scmp.eq.s32.totalorder %s27, 0
      %p179 = por %p177, %p178
      %p180 = scmp.ne.s32.totalorder %s168, %s169
      %p181 = scmp.eq.s32.totalorder %s28, 1
      %p182 = por %p180, %p181
      %p184 = scmp.ne.s32.totalorder %s169, %s183
      %p185 = scmp.eq.s32.totalorder %s28, 0
      %p186 = por %p184, %p185
      %s188 = sadd.s32 %s187, 1
      %p191 = scmp.eq.s32.totalorder %s22, 1
      %p192 = scmp.ne.s32.totalorder %s187, %s189
      %p193 = scmp.eq.s32.totalorder %s22, 0
      %p194 = por %p192, %p193
      %p195 = scmp.ne.s32.totalorder %s187, %s189
      %p196 = scmp.eq.s32.totalorder %s27, 1
      %p197 = por %p195, %p196
      %p198 = scmp.ne.s32.totalorder %s189, %s190
      %p199 = scmp.eq.s32.totalorder %s27, 0
      %p200 = por %p198, %p199
      %p201 = scmp.ne.s32.totalorder %s189, %s190
      %p202 = scmp.eq.s32.totalorder %s28, 1
      %p203 = por %p201, %p202
      %p205 = scmp.ne.s32.totalorder %s190, %s204
      %p206 = scmp.eq.s32.totalorder %s28, 0
      %p207 = por %p205, %p206
      %s209 = sadd.s32 %s208, 1
      %p212 = scmp.eq.s32.totalorder %s22, 1
      %p213 = scmp.ne.s32.totalorder %s208, %s210
      %p214 = scmp.eq.s32.totalorder %s22, 0
      %p215 = por %p213, %p214
      %p216 = scmp.ne.s32.totalorder %s208, %s210
      %p217 = scmp.eq.s32.totalorder %s27, 1
      %p218 = por %p216, %p217
      %p219 = scmp.ne.s32.totalorder %s210, %s211
      %p220 = scmp.eq.s32.totalorder %s27, 0
      %p221 = por %p219, %p220
      %p222 = scmp.ne.s32.totalorder %s210, %s211
      %p223 = scmp.eq.s32.totalorder %s28, 1
      %p224 = por %p222, %p223
      %p226 = scmp.ne.s32.totalorder %s211, %s225
      %p227 = scmp.eq.s32.totalorder %s28, 0
      %p228 = por %p226, %p227
      %s229 = ssub.s32 %s22, %s29
      %p230 = scmp.eq.s32.totalorder %s229, 0
      %s232 = sadd.s32 %s231, 1
      %s233 = scalar_select %p230, %s231, %s232
      %p236 = pneg %p230
      %p237 = scmp.eq.s32.totalorder %s22, 1
      %p238 = por %p236, %p237
      %p239 = scmp.ne.s32.totalorder %s231, %s234
      %p240 = scmp.eq.s32.totalorder %s22, 0
      %p241 = por %p239, %p240
      %p242 = scmp.ne.s32.totalorder %s231, %s234
      %p243 = scmp.eq.s32.totalorder %s27, 1
      %p244 = por %p242, %p243
      %p245 = scmp.ne.s32.totalorder %s234, %s235
      %p246 = scmp.eq.s32.totalorder %s27, 0
      %p247 = por %p245, %p246
      %p248 = scmp.ne.s32.totalorder %s234, %s235
      %p249 = scmp.eq.s32.totalorder %s28, 1
      %p250 = por %p248, %p249
      %p252 = scmp.ne.s32.totalorder %s235, %s251
      %p253 = scmp.eq.s32.totalorder %s28, 0
      %p254 = por %p252, %p253
      %p255 = scmp.le.s32.totalorder 1, %s22
      %p256 = scmp.lt.s32.totalorder %s22, 3
      %p257 = pnand %p255, %p256
      %p258 = pneg %p257
      // Predicated region
      $region9: #{tpu_custom_call.1} parent=5 // pred_check
        _
      $region10: #{tpu_custom_call.1} parent=5 // pred_check_branch
        %260 = sbr.rel (%p257) target = $region12
      $region11: #{tpu_custom_call.1} parent=5 // pred_region
        %s261 = ssub.s32 %s22, 1
        // Predicated region
        $region13: #{tpu_custom_call.1} parent=11 // pred_check
          %p262 = pneg %p95
        $region14: #{tpu_custom_call.1} parent=11 // pred_check_branch
          %264 = sbr.rel (%p262) target = $region16
        $region15: #{tpu_custom_call.1} parent=11 // pred_region
          %s266 = ssub.s32 2048, 2048
          %267 = vsyncadd [#allocation8], %s266
          %s268 = sshll.u32 [#allocation7], 4
          %s269 = int_to_ptr.vmem [resolvable:$true] %s268
          %274 = dma.hbm_to_vmem [thread:$0]  %s2, 2048, %s269, [#allocation8], 256, 256, 16
        $region16: #{tpu_custom_call.1} parent=11 // pred_fallthru
          _
        // Predicated region
        $region17: #{tpu_custom_call.1} parent=11 // pred_check
          %p275 = pneg %p116
        $region18: #{tpu_custom_call.1} parent=11 // pred_check_branch
          %277 = sbr.rel (%p275) target = $region20
        $region19: #{tpu_custom_call.1} parent=11 // pred_region
          _
        $region20: #{tpu_custom_call.1} parent=11 // pred_fallthru
          _
        // Predicated region
        $region21: #{tpu_custom_call.1} parent=11 // pred_check
          %p278 = pneg %p137
        $region22: #{tpu_custom_call.1} parent=11 // pred_check_branch
          %280 = sbr.rel (%p278) target = $region24
        $region23: #{tpu_custom_call.1} parent=11 // pred_region
          _
        $region24: #{tpu_custom_call.1} parent=11 // pred_fallthru
          _
        // Predicated region
        $region25: #{tpu_custom_call.1} parent=11 // pred_check
          %p281 = pneg %p158
        $region26: #{tpu_custom_call.1} parent=11 // pred_check_branch
          %283 = sbr.rel (%p281) target = $region28
        $region27: #{tpu_custom_call.1} parent=11 // pred_region
          _
        $region28: #{tpu_custom_call.1} parent=11 // pred_fallthru
          _
        // Predicated region
        $region29: #{tpu_custom_call.1} parent=11 // pred_check
          %p284 = pneg %p179
        $region30: #{tpu_custom_call.1} parent=11 // pred_check_branch
          %286 = sbr.rel (%p284) target = $region32
        $region31: #{tpu_custom_call.1} parent=11 // pred_region
          _
        $region32: #{tpu_custom_call.1} parent=11 // pred_fallthru
          _
        // Predicated region
        $region33: #{tpu_custom_call.1} parent=11 // pred_check
          %p287 = pneg %p200
        $region34: #{tpu_custom_call.1} parent=11 // pred_check_branch
          %289 = sbr.rel (%p287) target = $region36
        $region35: #{tpu_custom_call.1} parent=11 // pred_region
          _
        $region36: #{tpu_custom_call.1} parent=11 // pred_fallthru
          _
        // Predicated region
        $region37: #{tpu_custom_call.1} parent=11 // pred_check
          %p290 = pneg %p221
        $region38: #{tpu_custom_call.1} parent=11 // pred_check_branch
          %292 = sbr.rel (%p290) target = $region40
        $region39: #{tpu_custom_call.1} parent=11 // pred_region
          _
        $region40: #{tpu_custom_call.1} parent=11 // pred_fallthru
          _
      $region12: #{tpu_custom_call.1} parent=5 // pred_fallthru
        _
      %p293 = scmp.lt.s32.totalorder %s22, 2
      // Predicated region
      $region41: #{tpu_custom_call.1} parent=5 // pred_check
        %p294 = pneg %p293
      $region42: #{tpu_custom_call.1} parent=5 // pred_check_branch
        %296 = sbr.rel (%p294) target = $region44
      $region43: #{tpu_custom_call.1} parent=5 // pred_region
        // Predicated region
        $region45: #{tpu_custom_call.1} parent=43 // pred_check
          %p297 = pneg %p42
        $region46: #{tpu_custom_call.1} parent=43 // pred_check_branch
          %299 = sbr.rel (%p297) target = $region48
        $region47: #{tpu_custom_call.1} parent=43 // pred_region
          %p300 = scmp.lt.s32.totalorder %s22, 1
          %s301 = scalar_select %p300, %s22, 1
          %s302 = smul.addr %s301, 4
          %s303 = scalar_lea.vmem %s0, %s302
        $region48: #{tpu_custom_call.1} parent=43 // pred_fallthru
          _
        // Predicated region
        $region49: #{tpu_custom_call.1} parent=43 // pred_check
          %p304 = pneg %p68
        $region50: #{tpu_custom_call.1} parent=43 // pred_check_branch
          %306 = sbr.rel (%p304) target = $region52
        $region51: #{tpu_custom_call.1} parent=43 // pred_region
          %s307 = sand.u32 %s58, 1
          %s308 = scalar_lea.sflag [#allocation5], %s307
          %s309 = sand.u32 %s58, 1
          %s310 = smul.addr %s309, 64
          %s311 = scalar_lea.vmem [#allocation4], %s310
          %s313 = ssub.s32 1024, 1024
          %314 = vsyncadd %s308, %s313
          %s315 = smul.addr %s22, 8
          %s316 = smul.addr %s315, 128
          %s317 = scalar_lea.hbm %s1, %s316
          %s318 = sshll.u32 %s311, 4
          %s319 = int_to_ptr.vmem [resolvable:$true] %s318
          %324 = dma.hbm_to_vmem [thread:$0]  %s317, 1024, %s319, %s308, 128, 128, 8
        $region52: #{tpu_custom_call.1} parent=43 // pred_fallthru
          _
      $region44: #{tpu_custom_call.1} parent=5 // pred_fallthru
        _
      %p325 = scmp.le.s32.totalorder 1, %s22
      %p326 = scmp.lt.s32.totalorder %s22, 3
      %p327 = pnand %p325, %p326
      %p328 = pneg %p327
      // Predicated region
      $region53: #{tpu_custom_call.1} parent=5 // pred_check
        _
      $region54: #{tpu_custom_call.1} parent=5 // pred_check_branch
        %330 = sbr.rel (%p327) target = $region56
      $region55: #{tpu_custom_call.1} parent=5 // pred_region
        %s331 = ssub.s32 %s22, 1
        %s332 = sand.u32 %s61, 1
        %s333 = scalar_lea.sflag [#allocation5], %s332
        %s334 = sand.u32 %s61, 1
        %s335 = smul.addr %s334, 64
        %s336 = scalar_lea.vmem [#allocation4], %s335
        // Predicated region
        $region57: #{tpu_custom_call.1} parent=55 // pred_check
          %p337 = pneg %p74
        $region58: #{tpu_custom_call.1} parent=55 // pred_check_branch
          %339 = sbr.rel (%p337) target = $region60
        $region59: #{tpu_custom_call.1} parent=55 // pred_region
          %340 = dma.done %s333, 1024
        $region60: #{tpu_custom_call.1} parent=55 // pred_fallthru
          _
        // Predicated region
        $region61: #{tpu_custom_call.1} parent=55 // pred_check
          %p341 = pneg %p95
        $region62: #{tpu_custom_call.1} parent=55 // pred_check_branch
          %343 = sbr.rel (%p341) target = $region64
        $region63: #{tpu_custom_call.1} parent=55 // pred_region
          %344 = dma.done [#allocation8], 2048
        $region64: #{tpu_custom_call.1} parent=55 // pred_fallthru
          _
        %p345 = scmp.lt.s32.totalorder %s27, 1
        %s346 = scalar_select %p345, %s27, 1
        %s347 = smul.addr %s346, 4
        %s348 = scalar_lea.vmem %s0, %s347
        %p349 = pneg %p48
        %p350 = pneg %p45
        %s351 = sand.u32 %s61, 1
        %s352 = scalar_lea.sflag [#allocation5], %s351
        %s353 = sand.u32 %s61, 1
        %s354 = smul.addr %s353, 64
        %s355 = scalar_lea.vmem [#allocation4], %s354
        %p356 = pneg %p74
        %p357 = pneg %p71
        %p358 = pneg %p95
        %p359 = pneg %p92
        %p360 = pneg %p116
        %p361 = pneg %p113
        %p362 = pneg %p137
        %p363 = pneg %p134
        %p364 = pneg %p158
        %p365 = pneg %p155
        %p366 = pneg %p179
        %p367 = pneg %p176
        %p368 = pneg %p200
        %p369 = pneg %p197
        %p370 = pneg %p221
        %p371 = pneg %p218
        %p372 = pneg %p247
        %p373 = pneg %p244
        %s374 = sand.u32 %s234, 1
        %s375 = scalar_lea.sflag [#allocation6], %s374
        %s376 = sand.u32 %s234, 1
        %s377 = smul.addr %s376, 16
        %s378 = scalar_lea.vmem [#allocation9], %s377
        %p379 = scmp.lt.s32.totalorder %s27, 1
        %s380 = scalar_select %p379, %s27, 1
        %s381 = smul.addr %s380, 4
        %s382 = scalar_lea.vmem %s0, %s381
        %vm384 = vcmask 146432
        %385 = vst.msk [vmem:[#allocation2] sm:$0xff] %vm384, 0.0
        %386 = vst.msk [vmem:[#allocation2 + $0x8] sm:$0xff] %vm384, 0.0
        %vm387 = vcmask 140288
        %388 = vst.msk [vmem:[#allocation2 + $0x10] sm:$0x3] %vm387, 0.0
        %389 = vst.msk [vmem:[#allocation2 + $0x18] sm:$0xff] %vm384, 0.0
        %390 = vst.msk [vmem:[#allocation2 + $0x20] sm:$0xff] %vm384, 0.0
        %391 = vst.msk [vmem:[#allocation2 + $0x28] sm:$0x3] %vm387, 0.0
        %392 = vst.msk [vmem:[#allocation2 + $0x30] sm:$0xff] %vm384, 0.0
        %393 = vst.msk [vmem:[#allocation2 + $0x38] sm:$0xff] %vm384, 0.0
        %394 = vst.msk [vmem:[#allocation2 + $0x40] sm:$0x3] %vm387, 0.0
        %395 = vst.msk [vmem:[#allocation2 + $0x48] sm:$0xff] %vm384, 0.0
        %396 = vst.msk [vmem:[#allocation2 + $0x50] sm:$0xff] %vm384, 0.0
        %397 = vst.msk [vmem:[#allocation2 + $0x58] sm:$0x3] %vm387, 0.0
        %398 = vst.msk [vmem:[#allocation2 + $0x60] sm:$0xff] %vm384, 0.0
        %399 = vst.msk [vmem:[#allocation2 + $0x68] sm:$0xff] %vm384, 0.0
        %400 = vst.msk [vmem:[#allocation2 + $0x70] sm:$0x3] %vm387, 0.0
        %401 = vst.msk [vmem:[#allocation2 + $0x78] sm:$0xff] %vm384, 0.0
        %402 = vst.msk [vmem:[#allocation2 + $0x80] sm:$0xff] %vm384, 0.0
        %403 = vst.msk [vmem:[#allocation2 + $0x88] sm:$0x3] %vm387, 0.0
        %404 = vst.msk [vmem:[#allocation2 + $0x90] sm:$0xff] %vm384, 0.0
        %405 = vst.msk [vmem:[#allocation2 + $0x98] sm:$0xff] %vm384, 0.0
        %406 = vst.msk [vmem:[#allocation2 + $0xa0] sm:$0x3] %vm387, 0.0
        %407 = vst.msk [vmem:[#allocation2 + $0xa8] sm:$0xff] %vm384, 0.0
        %408 = vst.msk [vmem:[#allocation2 + $0xb0] sm:$0xff] %vm384, 0.0
        %409 = vst.msk [vmem:[#allocation2 + $0xb8] sm:$0x3] %vm387, 0.0
        %v410 = vld [vmem:[%s336] sm:$0xff]
        %v411 = vld [vmem:[%s336 + $0x8] sm:$0xff]
        %v412 = vld [vmem:[%s336 + $0x10] sm:$0xff]
        %v413 = vld [vmem:[%s336 + $0x18] sm:$0xff]
        %v414 = vld [vmem:[%s336 + $0x20] sm:$0xff]
        %v415 = vld [vmem:[%s336 + $0x28] sm:$0xff]
        %v416 = vld [vmem:[%s336 + $0x30] sm:$0xff]
        %v417 = vld [vmem:[%s336 + $0x38] sm:$0xff]
        %426 = vrot.lane.b32.xlu0 %v410, 1
        %v427 = vpop.permute.xlu0 %426
        %428 = vrot.lane.b32.xlu0 %v411, 1
        %v429 = vpop.permute.xlu0 %428
        %430 = vrot.lane.b32.xlu0 %v412, 1
        %v431 = vpop.permute.xlu0 %430
        %432 = vrot.lane.b32.xlu0 %v413, 1
        %v433 = vpop.permute.xlu0 %432
        %434 = vrot.lane.b32.xlu0 %v414, 1
        %v435 = vpop.permute.xlu0 %434
        %436 = vrot.lane.b32.xlu0 %v415, 1
        %v437 = vpop.permute.xlu0 %436
        %438 = vrot.lane.b32.xlu0 %v416, 1
        %v439 = vpop.permute.xlu0 %438
        %440 = vrot.lane.b32.xlu0 %v417, 1
        %v441 = vpop.permute.xlu0 %440
        %vm450 = vcmask 138248
        %451 = vst.msk [vmem:[#allocation2 + $0x1] sm:$0xff] %vm450, %v427
        %452 = vst.msk [vmem:[#allocation2 + $0x9] sm:$0xff] %vm450, %v429
        %453 = vst.msk [vmem:[#allocation2 + $0x19] sm:$0xff] %vm450, %v431
        %454 = vst.msk [vmem:[#allocation2 + $0x21] sm:$0xff] %vm450, %v433
        %455 = vst.msk [vmem:[#allocation2 + $0x31] sm:$0xff] %vm450, %v435
        %456 = vst.msk [vmem:[#allocation2 + $0x39] sm:$0xff] %vm450, %v437
        %457 = vst.msk [vmem:[#allocation2 + $0x49] sm:$0xff] %vm450, %v439
        %458 = vst.msk [vmem:[#allocation2 + $0x51] sm:$0xff] %vm450, %v441
        %v459 = vld [vmem:[%s382] sm:$0xf]
        %v460 = vld [vmem:[#allocation7] sm:$0xff]
        %v461 = vld [vmem:[#allocation7 + $0x8] sm:$0xff]
        %v462 = vld [vmem:[#allocation7 + $0x10] sm:$0xff]
        %v463 = vld [vmem:[#allocation7 + $0x18] sm:$0xff]
        %v464 = vld [vmem:[#allocation7 + $0x20] sm:$0xff]
        %v465 = vld [vmem:[#allocation7 + $0x28] sm:$0xff]
        %v466 = vld [vmem:[#allocation7 + $0x30] sm:$0xff]
        %v467 = vld [vmem:[#allocation7 + $0x38] sm:$0xff]
        %v468 = vld [vmem:[#allocation7 + $0x40] sm:$0xff]
        %v469 = vld [vmem:[#allocation7 + $0x48] sm:$0xff]
        %v470 = vld [vmem:[#allocation7 + $0x50] sm:$0xff]
        %v471 = vld [vmem:[#allocation7 + $0x58] sm:$0xff]
        %v472 = vld [vmem:[#allocation7 + $0x60] sm:$0xff]
        %v473 = vld [vmem:[#allocation7 + $0x68] sm:$0xff]
        %v474 = vld [vmem:[#allocation7 + $0x70] sm:$0xff]
        %v475 = vld [vmem:[#allocation7 + $0x78] sm:$0xff]
        %vm476 = vcmask 523264
        %v478 = vsel %vm476, %v459, 0
        %480 = vmatprep.subr.mxu0 %v461
        %481 = vmatpush1.msra.mxu0 %v460
        %482 = vmatprep.subr.mxu0 %v463
        %483 = vmatpush1.msra.mxu0 %v462
        %484 = vmatprep.subr.mxu0 %v465
        %485 = vmatpush1.msra.mxu0 %v464
        %486 = vmatprep.subr.mxu0 %v467
        %487 = vmatpush1.msra.mxu0 %v466
        %488 = vmatprep.subr.mxu0 %v469
        %489 = vmatpush1.msra.mxu0 %v468
        %490 = vmatprep.subr.mxu0 %v471
        %491 = vmatpush1.msra.mxu0 %v470
        %492 = vmatprep.subr.mxu0 %v473
        %493 = vmatpush1.msra.mxu0 %v472
        %494 = vmatprep.subr.mxu0 %v475
        %495 = vmatpush1.msra.mxu0 %v474
        %496 = vmatprep.subr.mxu0 0.0
        %497 = vmatpush1.msra.mxu0 0.0
        %498 = vmatprep.subr.mxu0 0.0
        %499 = vmatpush1.msra.mxu0 0.0
        %500 = vmatprep.subr.mxu0 0.0
        %501 = vmatpush1.msra.mxu0 0.0
        %502 = vmatprep.subr.mxu0 0.0
        %503 = vmatpush1.msra.mxu0 0.0
        %504 = vmatprep.subr.mxu0 0.0
        %505 = vmatpush1.msra.mxu0 0.0
        %506 = vmatprep.subr.mxu0 0.0
        %507 = vmatpush1.msra.mxu0 0.0
        %508 = vmatprep.subr.mxu0 0.0
        %509 = vmatpush1.msra.mxu0 0.0
        %510 = vmatprep.subr.mxu0 0.0
        %511 = vmatpush1.msra.mxu0 0.0
        %512 = vmatprep.subr.mxu0 0.0
        %513 = vmatpush1.msra.mxu0 0.0
        %514 = vmatprep.subr.mxu0 0.0
        %515 = vmatpush1.msra.mxu0 0.0
        %516 = vmatprep.subr.mxu0 0.0
        %517 = vmatpush1.msra.mxu0 0.0
        %518 = vmatprep.subr.mxu0 0.0
        %519 = vmatpush1.msra.mxu0 0.0
        %520 = vmatprep.subr.mxu0 0.0
        %521 = vmatpush1.msra.mxu0 0.0
        %522 = vmatprep.subr.mxu0 0.0
        %523 = vmatpush1.msra.mxu0 0.0
        %524 = vmatprep.subr.mxu0 0.0
        %525 = vmatpush1.msra.mxu0 0.0
        %526 = vmatprep.subr.mxu0 0.0
        %527 = vmatpush1.msra.mxu0 0.0
        %528 = vmatprep.subr.mxu0 0.0
        %529 = vmatpush1.msra.mxu0 0.0
        %530 = vmatprep.subr.mxu0 0.0
        %531 = vmatpush1.msra.mxu0 0.0
        %532 = vmatprep.subr.mxu0 0.0
        %533 = vmatpush1.msra.mxu0 0.0
        %534 = vmatprep.subr.mxu0 0.0
        %535 = vmatpush1.msra.mxu0 0.0
        %536 = vmatprep.subr.mxu0 0.0
        %537 = vmatpush1.msra.mxu0 0.0
        %538 = vmatprep.subr.mxu0 0.0
        %539 = vmatpush1.msra.mxu0 0.0
        %540 = vmatprep.subr.mxu0 0.0
        %541 = vmatpush1.msra.mxu0 0.0
        %542 = vmatprep.subr.mxu0 0.0
        %543 = vmatpush1.msra.mxu0 0.0
        %544 = vmatprep.mubr.f32.mxu0 0.0
        %545 = vmatmul.mubr.f32.gmra.mrb[0].mxu0 %v478
        %v546 = vpop.f32.mrb[0].mxu0
        %v547 = vadd.f32 0.0, %v546
        %v548 = vpop.f32.mrb[0].mxu0
        %v549 = vadd.f32 0.0, %v548
        %550 = vdwg.mxu0
        %552 = vrot.lane.b32.xlu0 %v547, 112
        %v553 = vpop.permute.xlu0 %552
        %555 = vrot.lane.b32.xlu0 %v547, 96
        %v556 = vpop.permute.xlu0 %555
        %558 = vrot.lane.b32.xlu0 %v547, 80
        %v559 = vpop.permute.xlu0 %558
        %561 = vrot.lane.b32.xlu0 %v547, 64
        %v562 = vpop.permute.xlu0 %561
        %564 = vrot.lane.b32.xlu0 %v547, 48
        %v565 = vpop.permute.xlu0 %564
        %567 = vrot.lane.b32.xlu0 %v547, 32
        %v568 = vpop.permute.xlu0 %567
        %570 = vrot.lane.b32.xlu0 %v547, 16
        %v571 = vpop.permute.xlu0 %570
        %574 = vrot.lane.b32.xlu0 %v549, 112
        %v575 = vpop.permute.xlu0 %574
        %577 = vrot.lane.b32.xlu0 %v549, 96
        %v578 = vpop.permute.xlu0 %577
        %580 = vrot.lane.b32.xlu0 %v549, 80
        %v581 = vpop.permute.xlu0 %580
        %583 = vrot.lane.b32.xlu0 %v549, 64
        %v584 = vpop.permute.xlu0 %583
        %586 = vrot.lane.b32.xlu0 %v549, 48
        %v587 = vpop.permute.xlu0 %586
        %589 = vrot.lane.b32.xlu0 %v549, 32
        %v590 = vpop.permute.xlu0 %589
        %592 = vrot.lane.b32.xlu0 %v549, 16
        %v593 = vpop.permute.xlu0 %592
        %v595 = vcombine.low %v547, %v556
        %v597 = vunpack.c.l.s4 1983009808
        %v598 = vunpack.c.0.s8 %v597
        %v599 = vlaneseq
        %v600 = vshrl.u32 %v599, 7
        %v601 = vsub.s32 %v598, %v600
        %v602 = vrot.slane %v595, %v601
        %v603 = vcombine.low %v553, %v559
        %v605 = vunpack.c.l.s4 1983009808
        %v606 = vunpack.c.0.s8 %v605
        %v607 = vlaneseq
        %v608 = vshrl.u32 %v607, 7
        %v609 = vsub.s32 %v606, %v608
        %v610 = vrot.slane %v603, %v609
        %v611 = vcombine.low %v562, %v568
        %v613 = vunpack.c.l.s4 1983009808
        %v614 = vunpack.c.0.s8 %v613
        %v615 = vlaneseq
        %v616 = vshrl.u32 %v615, 7
        %v617 = vsub.s32 %v614, %v616
        %v618 = vrot.slane %v611, %v617
        %v619 = vcombine.low %v565, %v571
        %v621 = vunpack.c.l.s4 1983009808
        %v622 = vunpack.c.0.s8 %v621
        %v623 = vlaneseq
        %v624 = vshrl.u32 %v623, 7
        %v625 = vsub.s32 %v622, %v624
        %v626 = vrot.slane %v619, %v625
        %v627 = vcombine.low %v602, %v610
        %v628 = vcombine.high %v602, %v610
        %v630 = vunpack.c.l.s4 1934713408
        %v631 = vunpack.c.0.s8 %v630
        %v632 = vlaneseq
        %v633 = vshrl.u32 %v632, 7
        %v634 = vsub.s32 %v631, %v633
        %v635 = vrot.slane %v627, %v634
        %v637 = vunpack.c.l.s4 1934713408
        %v638 = vunpack.c.0.s8 %v637
        %v639 = vlaneseq
        %v640 = vshrl.u32 %v639, 7
        %v641 = vsub.s32 %v638, %v640
        %v642 = vrot.slane %v628, %v641
        %v643 = vcombine.low %v618, %v626
        %v644 = vcombine.high %v618, %v626
        %v646 = vunpack.c.l.s4 1934713408
        %v647 = vunpack.c.0.s8 %v646
        %v648 = vlaneseq
        %v649 = vshrl.u32 %v648, 7
        %v650 = vsub.s32 %v647, %v649
        %v651 = vrot.slane %v643, %v650
        %v653 = vunpack.c.l.s4 1934713408
        %v654 = vunpack.c.0.s8 %v653
        %v655 = vlaneseq
        %v656 = vshrl.u32 %v655, 7
        %v657 = vsub.s32 %v654, %v656
        %v658 = vrot.slane %v644, %v657
        %v659 = vcombine.low %v635, %v651
        %v660 = vcombine.high %v635, %v651
        %v661 = vcombine.low %v642, %v658
        %v662 = vcombine.high %v642, %v658
        %v663 = vcombine.low %v549, %v578
        %v665 = vunpack.c.l.s4 1983009808
        %v666 = vunpack.c.0.s8 %v665
        %v667 = vlaneseq
        %v668 = vshrl.u32 %v667, 7
        %v669 = vsub.s32 %v666, %v668
        %v670 = vrot.slane %v663, %v669
        %v671 = vcombine.low %v575, %v581
        %v673 = vunpack.c.l.s4 1983009808
        %v674 = vunpack.c.0.s8 %v673
        %v675 = vlaneseq
        %v676 = vshrl.u32 %v675, 7
        %v677 = vsub.s32 %v674, %v676
        %v678 = vrot.slane %v671, %v677
        %v679 = vcombine.low %v584, %v590
        %v681 = vunpack.c.l.s4 1983009808
        %v682 = vunpack.c.0.s8 %v681
        %v683 = vlaneseq
        %v684 = vshrl.u32 %v683, 7
        %v685 = vsub.s32 %v682, %v684
        %v686 = vrot.slane %v679, %v685
        %v687 = vcombine.low %v587, %v593
        %v689 = vunpack.c.l.s4 1983009808
        %v690 = vunpack.c.0.s8 %v689
        %v691 = vlaneseq
        %v692 = vshrl.u32 %v691, 7
        %v693 = vsub.s32 %v690, %v692
        %v694 = vrot.slane %v687, %v693
        %v695 = vcombine.low %v670, %v678
        %v696 = vcombine.high %v670, %v678
        %v698 = vunpack.c.l.s4 1934713408
        %v699 = vunpack.c.0.s8 %v698
        %v700 = vlaneseq
        %v701 = vshrl.u32 %v700, 7
        %v702 = vsub.s32 %v699, %v701
        %v703 = vrot.slane %v695, %v702
        %v705 = vunpack.c.l.s4 1934713408
        %v706 = vunpack.c.0.s8 %v705
        %v707 = vlaneseq
        %v708 = vshrl.u32 %v707, 7
        %v709 = vsub.s32 %v706, %v708
        %v710 = vrot.slane %v696, %v709
        %v711 = vcombine.low %v686, %v694
        %v712 = vcombine.high %v686, %v694
        %v714 = vunpack.c.l.s4 1934713408
        %v715 = vunpack.c.0.s8 %v714
        %v716 = vlaneseq
        %v717 = vshrl.u32 %v716, 7
        %v718 = vsub.s32 %v715, %v717
        %v719 = vrot.slane %v711, %v718
        %v721 = vunpack.c.l.s4 1934713408
        %v722 = vunpack.c.0.s8 %v721
        %v723 = vlaneseq
        %v724 = vshrl.u32 %v723, 7
        %v725 = vsub.s32 %v722, %v724
        %v726 = vrot.slane %v712, %v725
        %v727 = vcombine.low %v703, %v719
        %v728 = vcombine.high %v703, %v719
        %v729 = vcombine.low %v710, %v726
        %v730 = vcombine.high %v710, %v726
        %739 = vrot.lane.b32.xlu0 %v659, 1
        %v740 = vpop.permute.xlu0 %739
        %741 = vrot.lane.b32.xlu0 %v727, 1
        %v742 = vpop.permute.xlu0 %741
        %743 = vrot.lane.b32.xlu0 %v660, 1
        %v744 = vpop.permute.xlu0 %743
        %745 = vrot.lane.b32.xlu0 %v728, 1
        %v746 = vpop.permute.xlu0 %745
        %747 = vrot.lane.b32.xlu0 %v661, 1
        %v748 = vpop.permute.xlu0 %747
        %749 = vrot.lane.b32.xlu0 %v729, 1
        %v750 = vpop.permute.xlu0 %749
        %751 = vrot.lane.b32.xlu0 %v662, 1
        %v752 = vpop.permute.xlu0 %751
        %753 = vrot.lane.b32.xlu0 %v730, 1
        %v754 = vpop.permute.xlu0 %753
        %s763 = scalar_lea.vmem [#allocation2], 96
        %764 = vst.msk [vmem:[%s763 + $0x1] sm:$0xff] %vm450, %v740
        %765 = vst.msk [vmem:[%s763 + $0x9] sm:$0xff] %vm450, %v742
        %766 = vst.msk [vmem:[%s763 + $0x19] sm:$0xff] %vm450, %v744
        %767 = vst.msk [vmem:[%s763 + $0x21] sm:$0xff] %vm450, %v746
        %768 = vst.msk [vmem:[%s763 + $0x31] sm:$0xff] %vm450, %v748
        %769 = vst.msk [vmem:[%s763 + $0x39] sm:$0xff] %vm450, %v750
        %770 = vst.msk [vmem:[%s763 + $0x49] sm:$0xff] %vm450, %v752
        %771 = vst.msk [vmem:[%s763 + $0x51] sm:$0xff] %vm450, %v754
        %v772 = vld [vmem:[#allocation2] sm:$0xff]
        %v773 = vld [vmem:[#allocation2 + $0x8] sm:$0xff]
        %v774 = vld [vmem:[#allocation2 + $0x18] sm:$0xff]
        %v775 = vld [vmem:[#allocation2 + $0x20] sm:$0xff]
        %v776 = vld [vmem:[#allocation2 + $0x30] sm:$0xff]
        %v777 = vld [vmem:[#allocation2 + $0x38] sm:$0xff]
        %v778 = vld [vmem:[#allocation2 + $0x48] sm:$0xff]
        %v779 = vld [vmem:[#allocation2 + $0x50] sm:$0xff]
        %v780 = vld [vmem:[#allocation2 + $0x60] sm:$0xff]
        %v781 = vld [vmem:[#allocation2 + $0x68] sm:$0xff]
        %v782 = vld [vmem:[#allocation2 + $0x78] sm:$0xff]
        %v783 = vld [vmem:[#allocation2 + $0x80] sm:$0xff]
        %v784 = vld [vmem:[#allocation2 + $0x90] sm:$0xff]
        %v785 = vld [vmem:[#allocation2 + $0x98] sm:$0xff]
        %v786 = vld [vmem:[#allocation2 + $0xa8] sm:$0xff]
        %v787 = vld [vmem:[#allocation2 + $0xb0] sm:$0xff]
        %v788 = vcombine.low %v772, %v776
        %v789 = vcombine.high %v772, %v776
        %v791 = vunpack.c.l.s4 1983009808
        %v792 = vunpack.c.0.s8 %v791
        %v793 = vlaneseq
        %v794 = vshrl.u32 %v793, 7
        %v795 = vsub.s32 %v792, %v794
        %v796 = vrot.slane %v788, %v795
        %v798 = vunpack.c.l.s4 1983009808
        %v799 = vunpack.c.0.s8 %v798
        %v800 = vlaneseq
        %v801 = vshrl.u32 %v800, 7
        %v802 = vsub.s32 %v799, %v801
        %v803 = vrot.slane %v789, %v802
        %v804 = vcombine.low %v774, %v778
        %v805 = vcombine.high %v774, %v778
        %v807 = vunpack.c.l.s4 1983009808
        %v808 = vunpack.c.0.s8 %v807
        %v809 = vlaneseq
        %v810 = vshrl.u32 %v809, 7
        %v811 = vsub.s32 %v808, %v810
        %v812 = vrot.slane %v804, %v811
        %v814 = vunpack.c.l.s4 1983009808
        %v815 = vunpack.c.0.s8 %v814
        %v816 = vlaneseq
        %v817 = vshrl.u32 %v816, 7
        %v818 = vsub.s32 %v815, %v817
        %v819 = vrot.slane %v805, %v818
        %v820 = vcombine.low %v780, %v784
        %v821 = vcombine.high %v780, %v784
        %v823 = vunpack.c.l.s4 1983009808
        %v824 = vunpack.c.0.s8 %v823
        %v825 = vlaneseq
        %v826 = vshrl.u32 %v825, 7
        %v827 = vsub.s32 %v824, %v826
        %v828 = vrot.slane %v820, %v827
        %v830 = vunpack.c.l.s4 1983009808
        %v831 = vunpack.c.0.s8 %v830
        %v832 = vlaneseq
        %v833 = vshrl.u32 %v832, 7
        %v834 = vsub.s32 %v831, %v833
        %v835 = vrot.slane %v821, %v834
        %v836 = vcombine.low %v782, %v786
        %v837 = vcombine.high %v782, %v786
        %v839 = vunpack.c.l.s4 1983009808
        %v840 = vunpack.c.0.s8 %v839
        %v841 = vlaneseq
        %v842 = vshrl.u32 %v841, 7
        %v843 = vsub.s32 %v840, %v842
        %v844 = vrot.slane %v836, %v843
        %v846 = vunpack.c.l.s4 1983009808
        %v847 = vunpack.c.0.s8 %v846
        %v848 = vlaneseq
        %v849 = vshrl.u32 %v848, 7
        %v850 = vsub.s32 %v847, %v849
        %v851 = vrot.slane %v837, %v850
        %v852 = vcombine.low %v796, %v812
        %v853 = vcombine.high %v796, %v812
        %v855 = vunpack.c.l.s4 1934713408
        %v856 = vunpack.c.0.s8 %v855
        %v857 = vlaneseq
        %v858 = vshrl.u32 %v857, 7
        %v859 = vsub.s32 %v856, %v858
        %v860 = vrot.slane %v852, %v859
        %v862 = vunpack.c.l.s4 1934713408
        %v863 = vunpack.c.0.s8 %v862
        %v864 = vlaneseq
        %v865 = vshrl.u32 %v864, 7
        %v866 = vsub.s32 %v863, %v865
        %v867 = vrot.slane %v853, %v866
        %v868 = vcombine.low %v803, %v819
        %v869 = vcombine.high %v803, %v819
        %v871 = vunpack.c.l.s4 1934713408
        %v872 = vunpack.c.0.s8 %v871
        %v873 = vlaneseq
        %v874 = vshrl.u32 %v873, 7
        %v875 = vsub.s32 %v872, %v874
        %v876 = vrot.slane %v868, %v875
        %v878 = vunpack.c.l.s4 1934713408
        %v879 = vunpack.c.0.s8 %v878
        %v880 = vlaneseq
        %v881 = vshrl.u32 %v880, 7
        %v882 = vsub.s32 %v879, %v881
        %v883 = vrot.slane %v869, %v882
        %v884 = vcombine.low %v828, %v844
        %v885 = vcombine.high %v828, %v844
        %v887 = vunpack.c.l.s4 1934713408
        %v888 = vunpack.c.0.s8 %v887
        %v889 = vlaneseq
        %v890 = vshrl.u32 %v889, 7
        %v891 = vsub.s32 %v888, %v890
        %v892 = vrot.slane %v884, %v891
        %v894 = vunpack.c.l.s4 1934713408
        %v895 = vunpack.c.0.s8 %v894
        %v896 = vlaneseq
        %v897 = vshrl.u32 %v896, 7
        %v898 = vsub.s32 %v895, %v897
        %v899 = vrot.slane %v885, %v898
        %v900 = vcombine.low %v835, %v851
        %v901 = vcombine.high %v835, %v851
        %v903 = vunpack.c.l.s4 1934713408
        %v904 = vunpack.c.0.s8 %v903
        %v905 = vlaneseq
        %v906 = vshrl.u32 %v905, 7
        %v907 = vsub.s32 %v904, %v906
        %v908 = vrot.slane %v900, %v907
        %v910 = vunpack.c.l.s4 1934713408
        %v911 = vunpack.c.0.s8 %v910
        %v912 = vlaneseq
        %v913 = vshrl.u32 %v912, 7
        %v914 = vsub.s32 %v911, %v913
        %v915 = vrot.slane %v901, %v914
        %v916 = vcombine.low %v860, %v892
        %v917 = vcombine.high %v860, %v892
        %v918 = vcombine.low %v867, %v899
        %v919 = vcombine.high %v867, %v899
        %v920 = vcombine.low %v876, %v908
        %v921 = vcombine.high %v876, %v908
        %v922 = vcombine.low %v883, %v915
        %v923 = vcombine.high %v883, %v915
        %v924 = vcombine.low %v773, %v777
        %v925 = vcombine.high %v773, %v777
        %v927 = vunpack.c.l.s4 1983009808
        %v928 = vunpack.c.0.s8 %v927
        %v929 = vlaneseq
        %v930 = vshrl.u32 %v929, 7
        %v931 = vsub.s32 %v928, %v930
        %v932 = vrot.slane %v924, %v931
        %v934 = vunpack.c.l.s4 1983009808
        %v935 = vunpack.c.0.s8 %v934
        %v936 = vlaneseq
        %v937 = vshrl.u32 %v936, 7
        %v938 = vsub.s32 %v935, %v937
        %v939 = vrot.slane %v925, %v938
        %v940 = vcombine.low %v775, %v779
        %v941 = vcombine.high %v775, %v779
        %v943 = vunpack.c.l.s4 1983009808
        %v944 = vunpack.c.0.s8 %v943
        %v945 = vlaneseq
        %v946 = vshrl.u32 %v945, 7
        %v947 = vsub.s32 %v944, %v946
        %v948 = vrot.slane %v940, %v947
        %v950 = vunpack.c.l.s4 1983009808
        %v951 = vunpack.c.0.s8 %v950
        %v952 = vlaneseq
        %v953 = vshrl.u32 %v952, 7
        %v954 = vsub.s32 %v951, %v953
        %v955 = vrot.slane %v941, %v954
        %v956 = vcombine.low %v781, %v785
        %v957 = vcombine.high %v781, %v785
        %v959 = vunpack.c.l.s4 1983009808
        %v960 = vunpack.c.0.s8 %v959
        %v961 = vlaneseq
        %v962 = vshrl.u32 %v961, 7
        %v963 = vsub.s32 %v960, %v962
        %v964 = vrot.slane %v956, %v963
        %v966 = vunpack.c.l.s4 1983009808
        %v967 = vunpack.c.0.s8 %v966
        %v968 = vlaneseq
        %v969 = vshrl.u32 %v968, 7
        %v970 = vsub.s32 %v967, %v969
        %v971 = vrot.slane %v957, %v970
        %v972 = vcombine.low %v783, %v787
        %v973 = vcombine.high %v783, %v787
        %v975 = vunpack.c.l.s4 1983009808
        %v976 = vunpack.c.0.s8 %v975
        %v977 = vlaneseq
        %v978 = vshrl.u32 %v977, 7
        %v979 = vsub.s32 %v976, %v978
        %v980 = vrot.slane %v972, %v979
        %v982 = vunpack.c.l.s4 1983009808
        %v983 = vunpack.c.0.s8 %v982
        %v984 = vlaneseq
        %v985 = vshrl.u32 %v984, 7
        %v986 = vsub.s32 %v983, %v985
        %v987 = vrot.slane %v973, %v986
        %v988 = vcombine.low %v932, %v948
        %v989 = vcombine.high %v932, %v948
        %v991 = vunpack.c.l.s4 1934713408
        %v992 = vunpack.c.0.s8 %v991
        %v993 = vlaneseq
        %v994 = vshrl.u32 %v993, 7
        %v995 = vsub.s32 %v992, %v994
        %v996 = vrot.slane %v988, %v995
        %v998 = vunpack.c.l.s4 1934713408
        %v999 = vunpack.c.0.s8 %v998
        %v1000 = vlaneseq
        %v1001 = vshrl.u32 %v1000, 7
        %v1002 = vsub.s32 %v999, %v1001
        %v1003 = vrot.slane %v989, %v1002
        %v1004 = vcombine.low %v939, %v955
        %v1005 = vcombine.high %v939, %v955
        %v1007 = vunpack.c.l.s4 1934713408
        %v1008 = vunpack.c.0.s8 %v1007
        %v1009 = vlaneseq
        %v1010 = vshrl.u32 %v1009, 7
        %v1011 = vsub.s32 %v1008, %v1010
        %v1012 = vrot.slane %v1004, %v1011
        %v1014 = vunpack.c.l.s4 1934713408
        %v1015 = vunpack.c.0.s8 %v1014
        %v1016 = vlaneseq
        %v1017 = vshrl.u32 %v1016, 7
        %v1018 = vsub.s32 %v1015, %v1017
        %v1019 = vrot.slane %v1005, %v1018
        %v1020 = vcombine.low %v964, %v980
        %v1021 = vcombine.high %v964, %v980
        %v1023 = vunpack.c.l.s4 1934713408
        %v1024 = vunpack.c.0.s8 %v1023
        %v1025 = vlaneseq
        %v1026 = vshrl.u32 %v1025, 7
        %v1027 = vsub.s32 %v1024, %v1026
        %v1028 = vrot.slane %v1020, %v1027
        %v1030 = vunpack.c.l.s4 1934713408
        %v1031 = vunpack.c.0.s8 %v1030
        %v1032 = vlaneseq
        %v1033 = vshrl.u32 %v1032, 7
        %v1034 = vsub.s32 %v1031, %v1033
        %v1035 = vrot.slane %v1021, %v1034
        %v1036 = vcombine.low %v971, %v987
        %v1037 = vcombine.high %v971, %v987
        %v1039 = vunpack.c.l.s4 1934713408
        %v1040 = vunpack.c.0.s8 %v1039
        %v1041 = vlaneseq
        %v1042 = vshrl.u32 %v1041, 7
        %v1043 = vsub.s32 %v1040, %v1042
        %v1044 = vrot.slane %v1036, %v1043
        %v1046 = vunpack.c.l.s4 1934713408
        %v1047 = vunpack.c.0.s8 %v1046
        %v1048 = vlaneseq
        %v1049 = vshrl.u32 %v1048, 7
        %v1050 = vsub.s32 %v1047, %v1049
        %v1051 = vrot.slane %v1037, %v1050
        %v1052 = vcombine.low %v996, %v1028
        %v1053 = vcombine.high %v996, %v1028
        %v1054 = vcombine.low %v1003, %v1035
        %v1055 = vcombine.high %v1003, %v1035
        %v1056 = vcombine.low %v1012, %v1044
        %v1057 = vcombine.high %v1012, %v1044
        %v1058 = vcombine.low %v1019, %v1051
        %v1059 = vcombine.high %v1019, %v1051
        %1061 = vrot.lane.b32.xlu0 %v917, 16
        %v1062 = vpop.permute.xlu0 %1061
        %1065 = vrot.lane.b32.xlu0 %v918, 32
        %v1066 = vpop.permute.xlu0 %1065
        %1069 = vrot.lane.b32.xlu0 %v919, 48
        %v1070 = vpop.permute.xlu0 %1069
        %1073 = vrot.lane.b32.xlu0 %v920, 64
        %v1074 = vpop.permute.xlu0 %1073
        %1077 = vrot.lane.b32.xlu0 %v921, 80
        %v1078 = vpop.permute.xlu0 %1077
        %1081 = vrot.lane.b32.xlu0 %v922, 96
        %v1082 = vpop.permute.xlu0 %1081
        %1085 = vrot.lane.b32.xlu0 %v923, 112
        %v1086 = vpop.permute.xlu0 %1085
        %1089 = vrot.lane.b32.xlu0 %v1053, 16
        %v1090 = vpop.permute.xlu0 %1089
        %1093 = vrot.lane.b32.xlu0 %v1054, 32
        %v1094 = vpop.permute.xlu0 %1093
        %1097 = vrot.lane.b32.xlu0 %v1055, 48
        %v1098 = vpop.permute.xlu0 %1097
        %1101 = vrot.lane.b32.xlu0 %v1056, 64
        %v1102 = vpop.permute.xlu0 %1101
        %1105 = vrot.lane.b32.xlu0 %v1057, 80
        %v1106 = vpop.permute.xlu0 %1105
        %1109 = vrot.lane.b32.xlu0 %v1058, 96
        %v1110 = vpop.permute.xlu0 %1109
        %1113 = vrot.lane.b32.xlu0 %v1059, 112
        %v1114 = vpop.permute.xlu0 %1113
        %vm1116 = vcmask 130048
        %v1117 = vsel %vm1116, %v916, %v1062
        %vm1118 = vcmask 261120
        %v1119 = vsel %vm1118, %v1117, %v1066
        %vm1120 = vcmask 392192
        %v1121 = vsel %vm1120, %v1119, %v1070
        %v1122 = vsel %vm476, %v1121, %v1074
        %vm1123 = vcmask 654336
        %v1124 = vsel %vm1123, %v1122, %v1078
        %vm1125 = vcmask 785408
        %v1126 = vsel %vm1125, %v1124, %v1082
        %vm1127 = vcmask 916480
        %v1128 = vsel %vm1127, %v1126, %v1086
        %v1129 = vsel %vm1116, %v1052, %v1090
        %v1130 = vsel %vm1118, %v1129, %v1094
        %v1131 = vsel %vm1120, %v1130, %v1098
        %v1132 = vsel %vm476, %v1131, %v1102
        %v1133 = vsel %vm1123, %v1132, %v1106
        %v1134 = vsel %vm1125, %v1133, %v1110
        %v1135 = vsel %vm1127, %v1134, %v1114
        %1152 = vrot.lane.b32.xlu0 %v772, 127
        %v1153 = vpop.permute.xlu0 %1152
        %1154 = vrot.lane.b32.xlu0 %v773, 127
        %v1155 = vpop.permute.xlu0 %1154
        %1156 = vrot.lane.b32.xlu0 %v774, 127
        %v1157 = vpop.permute.xlu0 %1156
        %1158 = vrot.lane.b32.xlu0 %v775, 127
        %v1159 = vpop.permute.xlu0 %1158
        %1160 = vrot.lane.b32.xlu0 %v776, 127
        %v1161 = vpop.permute.xlu0 %1160
        %1162 = vrot.lane.b32.xlu0 %v777, 127
        %v1163 = vpop.permute.xlu0 %1162
        %1164 = vrot.lane.b32.xlu0 %v778, 127
        %v1165 = vpop.permute.xlu0 %1164
        %1166 = vrot.lane.b32.xlu0 %v779, 127
        %v1167 = vpop.permute.xlu0 %1166
        %1168 = vrot.lane.b32.xlu0 %v780, 127
        %v1169 = vpop.permute.xlu0 %1168
        %1170 = vrot.lane.b32.xlu0 %v781, 127
        %v1171 = vpop.permute.xlu0 %1170
        %1172 = vrot.lane.b32.xlu0 %v782, 127
        %v1173 = vpop.permute.xlu0 %1172
        %1174 = vrot.lane.b32.xlu0 %v783, 127
        %v1175 = vpop.permute.xlu0 %1174
        %1176 = vrot.lane.b32.xlu0 %v784, 127
        %v1177 = vpop.permute.xlu0 %1176
        %1178 = vrot.lane.b32.xlu0 %v785, 127
        %v1179 = vpop.permute.xlu0 %1178
        %1180 = vrot.lane.b32.xlu0 %v786, 127
        %v1181 = vpop.permute.xlu0 %1180
        %1182 = vrot.lane.b32.xlu0 %v787, 127
        %v1183 = vpop.permute.xlu0 %1182
        %v1200 = vcombine.low %v1153, %v1161
        %v1201 = vcombine.high %v1153, %v1161
        %v1203 = vunpack.c.l.s4 1983009808
        %v1204 = vunpack.c.0.s8 %v1203
        %v1205 = vlaneseq
        %v1206 = vshrl.u32 %v1205, 7
        %v1207 = vsub.s32 %v1204, %v1206
        %v1208 = vrot.slane %v1200, %v1207
        %v1210 = vunpack.c.l.s4 1983009808
        %v1211 = vunpack.c.0.s8 %v1210
        %v1212 = vlaneseq
        %v1213 = vshrl.u32 %v1212, 7
        %v1214 = vsub.s32 %v1211, %v1213
        %v1215 = vrot.slane %v1201, %v1214
        %v1216 = vcombine.low %v1157, %v1165
        %v1217 = vcombine.high %v1157, %v1165
        %v1219 = vunpack.c.l.s4 1983009808
        %v1220 = vunpack.c.0.s8 %v1219
        %v1221 = vlaneseq
        %v1222 = vshrl.u32 %v1221, 7
        %v1223 = vsub.s32 %v1220, %v1222
        %v1224 = vrot.slane %v1216, %v1223
        %v1226 = vunpack.c.l.s4 1983009808
        %v1227 = vunpack.c.0.s8 %v1226
        %v1228 = vlaneseq
        %v1229 = vshrl.u32 %v1228, 7
        %v1230 = vsub.s32 %v1227, %v1229
        %v1231 = vrot.slane %v1217, %v1230
        %v1232 = vcombine.low %v1169, %v1177
        %v1233 = vcombine.high %v1169, %v1177
        %v1235 = vunpack.c.l.s4 1983009808
        %v1236 = vunpack.c.0.s8 %v1235
        %v1237 = vlaneseq
        %v1238 = vshrl.u32 %v1237, 7
        %v1239 = vsub.s32 %v1236, %v1238
        %v1240 = vrot.slane %v1232, %v1239
        %v1242 = vunpack.c.l.s4 1983009808
        %v1243 = vunpack.c.0.s8 %v1242
        %v1244 = vlaneseq
        %v1245 = vshrl.u32 %v1244, 7
        %v1246 = vsub.s32 %v1243, %v1245
        %v1247 = vrot.slane %v1233, %v1246
        %v1248 = vcombine.low %v1173, %v1181
        %v1249 = vcombine.high %v1173, %v1181
        %v1251 = vunpack.c.l.s4 1983009808
        %v1252 = vunpack.c.0.s8 %v1251
        %v1253 = vlaneseq
        %v1254 = vshrl.u32 %v1253, 7
        %v1255 = vsub.s32 %v1252, %v1254
        %v1256 = vrot.slane %v1248, %v1255
        %v1258 = vunpack.c.l.s4 1983009808
        %v1259 = vunpack.c.0.s8 %v1258
        %v1260 = vlaneseq
        %v1261 = vshrl.u32 %v1260, 7
        %v1262 = vsub.s32 %v1259, %v1261
        %v1263 = vrot.slane %v1249, %v1262
        %v1264 = vcombine.low %v1208, %v1224
        %v1265 = vcombine.high %v1208, %v1224
        %v1267 = vunpack.c.l.s4 1934713408
        %v1268 = vunpack.c.0.s8 %v1267
        %v1269 = vlaneseq
        %v1270 = vshrl.u32 %v1269, 7
        %v1271 = vsub.s32 %v1268, %v1270
        %v1272 = vrot.slane %v1264, %v1271
        %v1274 = vunpack.c.l.s4 1934713408
        %v1275 = vunpack.c.0.s8 %v1274
        %v1276 = vlaneseq
        %v1277 = vshrl.u32 %v1276, 7
        %v1278 = vsub.s32 %v1275, %v1277
        %v1279 = vrot.slane %v1265, %v1278
        %v1280 = vcombine.low %v1215, %v1231
        %v1281 = vcombine.high %v1215, %v1231
        %v1283 = vunpack.c.l.s4 1934713408
        %v1284 = vunpack.c.0.s8 %v1283
        %v1285 = vlaneseq
        %v1286 = vshrl.u32 %v1285, 7
        %v1287 = vsub.s32 %v1284, %v1286
        %v1288 = vrot.slane %v1280, %v1287
        %v1290 = vunpack.c.l.s4 1934713408
        %v1291 = vunpack.c.0.s8 %v1290
        %v1292 = vlaneseq
        %v1293 = vshrl.u32 %v1292, 7
        %v1294 = vsub.s32 %v1291, %v1293
        %v1295 = vrot.slane %v1281, %v1294
        %v1296 = vcombine.low %v1240, %v1256
        %v1297 = vcombine.high %v1240, %v1256
        %v1299 = vunpack.c.l.s4 1934713408
        %v1300 = vunpack.c.0.s8 %v1299
        %v1301 = vlaneseq
        %v1302 = vshrl.u32 %v1301, 7
        %v1303 = vsub.s32 %v1300, %v1302
        %v1304 = vrot.slane %v1296, %v1303
        %v1306 = vunpack.c.l.s4 1934713408
        %v1307 = vunpack.c.0.s8 %v1306
        %v1308 = vlaneseq
        %v1309 = vshrl.u32 %v1308, 7
        %v1310 = vsub.s32 %v1307, %v1309
        %v1311 = vrot.slane %v1297, %v1310
        %v1312 = vcombine.low %v1247, %v1263
        %v1313 = vcombine.high %v1247, %v1263
        %v1315 = vunpack.c.l.s4 1934713408
        %v1316 = vunpack.c.0.s8 %v1315
        %v1317 = vlaneseq
        %v1318 = vshrl.u32 %v1317, 7
        %v1319 = vsub.s32 %v1316, %v1318
        %v1320 = vrot.slane %v1312, %v1319
        %v1322 = vunpack.c.l.s4 1934713408
        %v1323 = vunpack.c.0.s8 %v1322
        %v1324 = vlaneseq
        %v1325 = vshrl.u32 %v1324, 7
        %v1326 = vsub.s32 %v1323, %v1325
        %v1327 = vrot.slane %v1313, %v1326
        %v1328 = vcombine.low %v1272, %v1304
        %v1329 = vcombine.high %v1272, %v1304
        %v1330 = vcombine.low %v1279, %v1311
        %v1331 = vcombine.high %v1279, %v1311
        %v1332 = vcombine.low %v1288, %v1320
        %v1333 = vcombine.high %v1288, %v1320
        %v1334 = vcombine.low %v1295, %v1327
        %v1335 = vcombine.high %v1295, %v1327
        %v1336 = vcombine.low %v1155, %v1163
        %v1337 = vcombine.high %v1155, %v1163
        %v1339 = vunpack.c.l.s4 1983009808
        %v1340 = vunpack.c.0.s8 %v1339
        %v1341 = vlaneseq
        %v1342 = vshrl.u32 %v1341, 7
        %v1343 = vsub.s32 %v1340, %v1342
        %v1344 = vrot.slane %v1336, %v1343
        %v1346 = vunpack.c.l.s4 1983009808
        %v1347 = vunpack.c.0.s8 %v1346
        %v1348 = vlaneseq
        %v1349 = vshrl.u32 %v1348, 7
        %v1350 = vsub.s32 %v1347, %v1349
        %v1351 = vrot.slane %v1337, %v1350
        %v1352 = vcombine.low %v1159, %v1167
        %v1353 = vcombine.high %v1159, %v1167
        %v1355 = vunpack.c.l.s4 1983009808
        %v1356 = vunpack.c.0.s8 %v1355
        %v1357 = vlaneseq
        %v1358 = vshrl.u32 %v1357, 7
        %v1359 = vsub.s32 %v1356, %v1358
        %v1360 = vrot.slane %v1352, %v1359
        %v1362 = vunpack.c.l.s4 1983009808
        %v1363 = vunpack.c.0.s8 %v1362
        %v1364 = vlaneseq
        %v1365 = vshrl.u32 %v1364, 7
        %v1366 = vsub.s32 %v1363, %v1365
        %v1367 = vrot.slane %v1353, %v1366
        %v1368 = vcombine.low %v1171, %v1179
        %v1369 = vcombine.high %v1171, %v1179
        %v1371 = vunpack.c.l.s4 1983009808
        %v1372 = vunpack.c.0.s8 %v1371
        %v1373 = vlaneseq
        %v1374 = vshrl.u32 %v1373, 7
        %v1375 = vsub.s32 %v1372, %v1374
        %v1376 = vrot.slane %v1368, %v1375
        %v1378 = vunpack.c.l.s4 1983009808
        %v1379 = vunpack.c.0.s8 %v1378
        %v1380 = vlaneseq
        %v1381 = vshrl.u32 %v1380, 7
        %v1382 = vsub.s32 %v1379, %v1381
        %v1383 = vrot.slane %v1369, %v1382
        %v1384 = vcombine.low %v1175, %v1183
        %v1385 = vcombine.high %v1175, %v1183
        %v1387 = vunpack.c.l.s4 1983009808
        %v1388 = vunpack.c.0.s8 %v1387
        %v1389 = vlaneseq
        %v1390 = vshrl.u32 %v1389, 7
        %v1391 = vsub.s32 %v1388, %v1390
        %v1392 = vrot.slane %v1384, %v1391
        %v1394 = vunpack.c.l.s4 1983009808
        %v1395 = vunpack.c.0.s8 %v1394
        %v1396 = vlaneseq
        %v1397 = vshrl.u32 %v1396, 7
        %v1398 = vsub.s32 %v1395, %v1397
        %v1399 = vrot.slane %v1385, %v1398
        %v1400 = vcombine.low %v1344, %v1360
        %v1401 = vcombine.high %v1344, %v1360
        %v1403 = vunpack.c.l.s4 1934713408
        %v1404 = vunpack.c.0.s8 %v1403
        %v1405 = vlaneseq
        %v1406 = vshrl.u32 %v1405, 7
        %v1407 = vsub.s32 %v1404, %v1406
        %v1408 = vrot.slane %v1400, %v1407
        %v1410 = vunpack.c.l.s4 1934713408
        %v1411 = vunpack.c.0.s8 %v1410
        %v1412 = vlaneseq
        %v1413 = vshrl.u32 %v1412, 7
        %v1414 = vsub.s32 %v1411, %v1413
        %v1415 = vrot.slane %v1401, %v1414
        %v1416 = vcombine.low %v1351, %v1367
        %v1417 = vcombine.high %v1351, %v1367
        %v1419 = vunpack.c.l.s4 1934713408
        %v1420 = vunpack.c.0.s8 %v1419
        %v1421 = vlaneseq
        %v1422 = vshrl.u32 %v1421, 7
        %v1423 = vsub.s32 %v1420, %v1422
        %v1424 = vrot.slane %v1416, %v1423
        %v1426 = vunpack.c.l.s4 1934713408
        %v1427 = vunpack.c.0.s8 %v1426
        %v1428 = vlaneseq
        %v1429 = vshrl.u32 %v1428, 7
        %v1430 = vsub.s32 %v1427, %v1429
        %v1431 = vrot.slane %v1417, %v1430
        %v1432 = vcombine.low %v1376, %v1392
        %v1433 = vcombine.high %v1376, %v1392
        %v1435 = vunpack.c.l.s4 1934713408
        %v1436 = vunpack.c.0.s8 %v1435
        %v1437 = vlaneseq
        %v1438 = vshrl.u32 %v1437, 7
        %v1439 = vsub.s32 %v1436, %v1438
        %v1440 = vrot.slane %v1432, %v1439
        %v1442 = vunpack.c.l.s4 1934713408
        %v1443 = vunpack.c.0.s8 %v1442
        %v1444 = vlaneseq
        %v1445 = vshrl.u32 %v1444, 7
        %v1446 = vsub.s32 %v1443, %v1445
        %v1447 = vrot.slane %v1433, %v1446
        %v1448 = vcombine.low %v1383, %v1399
        %v1449 = vcombine.high %v1383, %v1399
        %v1451 = vunpack.c.l.s4 1934713408
        %v1452 = vunpack.c.0.s8 %v1451
        %v1453 = vlaneseq
        %v1454 = vshrl.u32 %v1453, 7
        %v1455 = vsub.s32 %v1452, %v1454
        %v1456 = vrot.slane %v1448, %v1455
        %v1458 = vunpack.c.l.s4 1934713408
        %v1459 = vunpack.c.0.s8 %v1458
        %v1460 = vlaneseq
        %v1461 = vshrl.u32 %v1460, 7
        %v1462 = vsub.s32 %v1459, %v1461
        %v1463 = vrot.slane %v1449, %v1462
        %v1464 = vcombine.low %v1408, %v1440
        %v1465 = vcombine.high %v1408, %v1440
        %v1466 = vcombine.low %v1415, %v1447
        %v1467 = vcombine.high %v1415, %v1447
        %v1468 = vcombine.low %v1424, %v1456
        %v1469 = vcombine.high %v1424, %v1456
        %v1470 = vcombine.low %v1431, %v1463
        %v1471 = vcombine.high %v1431, %v1463
        %1473 = vrot.lane.b32.xlu0 %v1329, 16
        %v1474 = vpop.permute.xlu0 %1473
        %1477 = vrot.lane.b32.xlu0 %v1330, 32
        %v1478 = vpop.permute.xlu0 %1477
        %1481 = vrot.lane.b32.xlu0 %v1331, 48
        %v1482 = vpop.permute.xlu0 %1481
        %1485 = vrot.lane.b32.xlu0 %v1332, 64
        %v1486 = vpop.permute.xlu0 %1485
        %1489 = vrot.lane.b32.xlu0 %v1333, 80
        %v1490 = vpop.permute.xlu0 %1489
        %1493 = vrot.lane.b32.xlu0 %v1334, 96
        %v1494 = vpop.permute.xlu0 %1493
        %1497 = vrot.lane.b32.xlu0 %v1335, 112
        %v1498 = vpop.permute.xlu0 %1497
        %1501 = vrot.lane.b32.xlu0 %v1465, 16
        %v1502 = vpop.permute.xlu0 %1501
        %1505 = vrot.lane.b32.xlu0 %v1466, 32
        %v1506 = vpop.permute.xlu0 %1505
        %1509 = vrot.lane.b32.xlu0 %v1467, 48
        %v1510 = vpop.permute.xlu0 %1509
        %1513 = vrot.lane.b32.xlu0 %v1468, 64
        %v1514 = vpop.permute.xlu0 %1513
        %1517 = vrot.lane.b32.xlu0 %v1469, 80
        %v1518 = vpop.permute.xlu0 %1517
        %1521 = vrot.lane.b32.xlu0 %v1470, 96
        %v1522 = vpop.permute.xlu0 %1521
        %1525 = vrot.lane.b32.xlu0 %v1471, 112
        %v1526 = vpop.permute.xlu0 %1525
        %v1528 = vsel %vm1116, %v1328, %v1474
        %v1529 = vsel %vm1118, %v1528, %v1478
        %v1530 = vsel %vm1120, %v1529, %v1482
        %v1531 = vsel %vm476, %v1530, %v1486
        %v1532 = vsel %vm1123, %v1531, %v1490
        %v1533 = vsel %vm1125, %v1532, %v1494
        %v1534 = vsel %vm1127, %v1533, %v1498
        %v1535 = vsel %vm1116, %v1464, %v1502
        %v1536 = vsel %vm1118, %v1535, %v1506
        %v1537 = vsel %vm1120, %v1536, %v1510
        %v1538 = vsel %vm476, %v1537, %v1514
        %v1539 = vsel %vm1123, %v1538, %v1518
        %v1540 = vsel %vm1125, %v1539, %v1522
        %v1541 = vsel %vm1127, %v1540, %v1526
        %1542 = vrot.lane.b32.xlu0 %v772, 126
        %v1543 = vpop.permute.xlu0 %1542
        %1544 = vrot.lane.b32.xlu0 %v773, 126
        %v1545 = vpop.permute.xlu0 %1544
        %1546 = vrot.lane.b32.xlu0 %v774, 126
        %v1547 = vpop.permute.xlu0 %1546
        %1548 = vrot.lane.b32.xlu0 %v775, 126
        %v1549 = vpop.permute.xlu0 %1548
        %1550 = vrot.lane.b32.xlu0 %v776, 126
        %v1551 = vpop.permute.xlu0 %1550
        %1552 = vrot.lane.b32.xlu0 %v777, 126
        %v1553 = vpop.permute.xlu0 %1552
        %1554 = vrot.lane.b32.xlu0 %v778, 126
        %v1555 = vpop.permute.xlu0 %1554
        %1556 = vrot.lane.b32.xlu0 %v779, 126
        %v1557 = vpop.permute.xlu0 %1556
        %1558 = vrot.lane.b32.xlu0 %v780, 126
        %v1559 = vpop.permute.xlu0 %1558
        %1560 = vrot.lane.b32.xlu0 %v781, 126
        %v1561 = vpop.permute.xlu0 %1560
        %1562 = vrot.lane.b32.xlu0 %v782, 126
        %v1563 = vpop.permute.xlu0 %1562
        %1564 = vrot.lane.b32.xlu0 %v783, 126
        %v1565 = vpop.permute.xlu0 %1564
        %1566 = vrot.lane.b32.xlu0 %v784, 126
        %v1567 = vpop.permute.xlu0 %1566
        %1568 = vrot.lane.b32.xlu0 %v785, 126
        %v1569 = vpop.permute.xlu0 %1568
        %1570 = vrot.lane.b32.xlu0 %v786, 126
        %v1571 = vpop.permute.xlu0 %1570
        %1572 = vrot.lane.b32.xlu0 %v787, 126
        %v1573 = vpop.permute.xlu0 %1572
        %v1590 = vcombine.low %v1543, %v1551
        %v1591 = vcombine.high %v1543, %v1551
        %v1593 = vunpack.c.l.s4 1983009808
        %v1594 = vunpack.c.0.s8 %v1593
        %v1595 = vlaneseq
        %v1596 = vshrl.u32 %v1595, 7
        %v1597 = vsub.s32 %v1594, %v1596
        %v1598 = vrot.slane %v1590, %v1597
        %v1600 = vunpack.c.l.s4 1983009808
        %v1601 = vunpack.c.0.s8 %v1600
        %v1602 = vlaneseq
        %v1603 = vshrl.u32 %v1602, 7
        %v1604 = vsub.s32 %v1601, %v1603
        %v1605 = vrot.slane %v1591, %v1604
        %v1606 = vcombine.low %v1547, %v1555
        %v1607 = vcombine.high %v1547, %v1555
        %v1609 = vunpack.c.l.s4 1983009808
        %v1610 = vunpack.c.0.s8 %v1609
        %v1611 = vlaneseq
        %v1612 = vshrl.u32 %v1611, 7
        %v1613 = vsub.s32 %v1610, %v1612
        %v1614 = vrot.slane %v1606, %v1613
        %v1616 = vunpack.c.l.s4 1983009808
        %v1617 = vunpack.c.0.s8 %v1616
        %v1618 = vlaneseq
        %v1619 = vshrl.u32 %v1618, 7
        %v1620 = vsub.s32 %v1617, %v1619
        %v1621 = vrot.slane %v1607, %v1620
        %v1622 = vcombine.low %v1559, %v1567
        %v1623 = vcombine.high %v1559, %v1567
        %v1625 = vunpack.c.l.s4 1983009808
        %v1626 = vunpack.c.0.s8 %v1625
        %v1627 = vlaneseq
        %v1628 = vshrl.u32 %v1627, 7
        %v1629 = vsub.s32 %v1626, %v1628
        %v1630 = vrot.slane %v1622, %v1629
        %v1632 = vunpack.c.l.s4 1983009808
        %v1633 = vunpack.c.0.s8 %v1632
        %v1634 = vlaneseq
        %v1635 = vshrl.u32 %v1634, 7
        %v1636 = vsub.s32 %v1633, %v1635
        %v1637 = vrot.slane %v1623, %v1636
        %v1638 = vcombine.low %v1563, %v1571
        %v1639 = vcombine.high %v1563, %v1571
        %v1641 = vunpack.c.l.s4 1983009808
        %v1642 = vunpack.c.0.s8 %v1641
        %v1643 = vlaneseq
        %v1644 = vshrl.u32 %v1643, 7
        %v1645 = vsub.s32 %v1642, %v1644
        %v1646 = vrot.slane %v1638, %v1645
        %v1648 = vunpack.c.l.s4 1983009808
        %v1649 = vunpack.c.0.s8 %v1648
        %v1650 = vlaneseq
        %v1651 = vshrl.u32 %v1650, 7
        %v1652 = vsub.s32 %v1649, %v1651
        %v1653 = vrot.slane %v1639, %v1652
        %v1654 = vcombine.low %v1598, %v1614
        %v1655 = vcombine.high %v1598, %v1614
        %v1657 = vunpack.c.l.s4 1934713408
        %v1658 = vunpack.c.0.s8 %v1657
        %v1659 = vlaneseq
        %v1660 = vshrl.u32 %v1659, 7
        %v1661 = vsub.s32 %v1658, %v1660
        %v1662 = vrot.slane %v1654, %v1661
        %v1664 = vunpack.c.l.s4 1934713408
        %v1665 = vunpack.c.0.s8 %v1664
        %v1666 = vlaneseq
        %v1667 = vshrl.u32 %v1666, 7
        %v1668 = vsub.s32 %v1665, %v1667
        %v1669 = vrot.slane %v1655, %v1668
        %v1670 = vcombine.low %v1605, %v1621
        %v1671 = vcombine.high %v1605, %v1621
        %v1673 = vunpack.c.l.s4 1934713408
        %v1674 = vunpack.c.0.s8 %v1673
        %v1675 = vlaneseq
        %v1676 = vshrl.u32 %v1675, 7
        %v1677 = vsub.s32 %v1674, %v1676
        %v1678 = vrot.slane %v1670, %v1677
        %v1680 = vunpack.c.l.s4 1934713408
        %v1681 = vunpack.c.0.s8 %v1680
        %v1682 = vlaneseq
        %v1683 = vshrl.u32 %v1682, 7
        %v1684 = vsub.s32 %v1681, %v1683
        %v1685 = vrot.slane %v1671, %v1684
        %v1686 = vcombine.low %v1630, %v1646
        %v1687 = vcombine.high %v1630, %v1646
        %v1689 = vunpack.c.l.s4 1934713408
        %v1690 = vunpack.c.0.s8 %v1689
        %v1691 = vlaneseq
        %v1692 = vshrl.u32 %v1691, 7
        %v1693 = vsub.s32 %v1690, %v1692
        %v1694 = vrot.slane %v1686, %v1693
        %v1696 = vunpack.c.l.s4 1934713408
        %v1697 = vunpack.c.0.s8 %v1696
        %v1698 = vlaneseq
        %v1699 = vshrl.u32 %v1698, 7
        %v1700 = vsub.s32 %v1697, %v1699
        %v1701 = vrot.slane %v1687, %v1700
        %v1702 = vcombine.low %v1637, %v1653
        %v1703 = vcombine.high %v1637, %v1653
        %v1705 = vunpack.c.l.s4 1934713408
        %v1706 = vunpack.c.0.s8 %v1705
        %v1707 = vlaneseq
        %v1708 = vshrl.u32 %v1707, 7
        %v1709 = vsub.s32 %v1706, %v1708
        %v1710 = vrot.slane %v1702, %v1709
        %v1712 = vunpack.c.l.s4 1934713408
        %v1713 = vunpack.c.0.s8 %v1712
        %v1714 = vlaneseq
        %v1715 = vshrl.u32 %v1714, 7
        %v1716 = vsub.s32 %v1713, %v1715
        %v1717 = vrot.slane %v1703, %v1716
        %v1718 = vcombine.low %v1662, %v1694
        %v1719 = vcombine.high %v1662, %v1694
        %v1720 = vcombine.low %v1669, %v1701
        %v1721 = vcombine.high %v1669, %v1701
        %v1722 = vcombine.low %v1678, %v1710
        %v1723 = vcombine.high %v1678, %v1710
        %v1724 = vcombine.low %v1685, %v1717
        %v1725 = vcombine.high %v1685, %v1717
        %v1726 = vcombine.low %v1545, %v1553
        %v1727 = vcombine.high %v1545, %v1553
        %v1729 = vunpack.c.l.s4 1983009808
        %v1730 = vunpack.c.0.s8 %v1729
        %v1731 = vlaneseq
        %v1732 = vshrl.u32 %v1731, 7
        %v1733 = vsub.s32 %v1730, %v1732
        %v1734 = vrot.slane %v1726, %v1733
        %v1736 = vunpack.c.l.s4 1983009808
        %v1737 = vunpack.c.0.s8 %v1736
        %v1738 = vlaneseq
        %v1739 = vshrl.u32 %v1738, 7
        %v1740 = vsub.s32 %v1737, %v1739
        %v1741 = vrot.slane %v1727, %v1740
        %v1742 = vcombine.low %v1549, %v1557
        %v1743 = vcombine.high %v1549, %v1557
        %v1745 = vunpack.c.l.s4 1983009808
        %v1746 = vunpack.c.0.s8 %v1745
        %v1747 = vlaneseq
        %v1748 = vshrl.u32 %v1747, 7
        %v1749 = vsub.s32 %v1746, %v1748
        %v1750 = vrot.slane %v1742, %v1749
        %v1752 = vunpack.c.l.s4 1983009808
        %v1753 = vunpack.c.0.s8 %v1752
        %v1754 = vlaneseq
        %v1755 = vshrl.u32 %v1754, 7
        %v1756 = vsub.s32 %v1753, %v1755
        %v1757 = vrot.slane %v1743, %v1756
        %v1758 = vcombine.low %v1561, %v1569
        %v1759 = vcombine.high %v1561, %v1569
        %v1761 = vunpack.c.l.s4 1983009808
        %v1762 = vunpack.c.0.s8 %v1761
        %v1763 = vlaneseq
        %v1764 = vshrl.u32 %v1763, 7
        %v1765 = vsub.s32 %v1762, %v1764
        %v1766 = vrot.slane %v1758, %v1765
        %v1768 = vunpack.c.l.s4 1983009808
        %v1769 = vunpack.c.0.s8 %v1768
        %v1770 = vlaneseq
        %v1771 = vshrl.u32 %v1770, 7
        %v1772 = vsub.s32 %v1769, %v1771
        %v1773 = vrot.slane %v1759, %v1772
        %v1774 = vcombine.low %v1565, %v1573
        %v1775 = vcombine.high %v1565, %v1573
        %v1777 = vunpack.c.l.s4 1983009808
        %v1778 = vunpack.c.0.s8 %v1777
        %v1779 = vlaneseq
        %v1780 = vshrl.u32 %v1779, 7
        %v1781 = vsub.s32 %v1778, %v1780
        %v1782 = vrot.slane %v1774, %v1781
        %v1784 = vunpack.c.l.s4 1983009808
        %v1785 = vunpack.c.0.s8 %v1784
        %v1786 = vlaneseq
        %v1787 = vshrl.u32 %v1786, 7
        %v1788 = vsub.s32 %v1785, %v1787
        %v1789 = vrot.slane %v1775, %v1788
        %v1790 = vcombine.low %v1734, %v1750
        %v1791 = vcombine.high %v1734, %v1750
        %v1793 = vunpack.c.l.s4 1934713408
        %v1794 = vunpack.c.0.s8 %v1793
        %v1795 = vlaneseq
        %v1796 = vshrl.u32 %v1795, 7
        %v1797 = vsub.s32 %v1794, %v1796
        %v1798 = vrot.slane %v1790, %v1797
        %v1800 = vunpack.c.l.s4 1934713408
        %v1801 = vunpack.c.0.s8 %v1800
        %v1802 = vlaneseq
        %v1803 = vshrl.u32 %v1802, 7
        %v1804 = vsub.s32 %v1801, %v1803
        %v1805 = vrot.slane %v1791, %v1804
        %v1806 = vcombine.low %v1741, %v1757
        %v1807 = vcombine.high %v1741, %v1757
        %v1809 = vunpack.c.l.s4 1934713408
        %v1810 = vunpack.c.0.s8 %v1809
        %v1811 = vlaneseq
        %v1812 = vshrl.u32 %v1811, 7
        %v1813 = vsub.s32 %v1810, %v1812
        %v1814 = vrot.slane %v1806, %v1813
        %v1816 = vunpack.c.l.s4 1934713408
        %v1817 = vunpack.c.0.s8 %v1816
        %v1818 = vlaneseq
        %v1819 = vshrl.u32 %v1818, 7
        %v1820 = vsub.s32 %v1817, %v1819
        %v1821 = vrot.slane %v1807, %v1820
        %v1822 = vcombine.low %v1766, %v1782
        %v1823 = vcombine.high %v1766, %v1782
        %v1825 = vunpack.c.l.s4 1934713408
        %v1826 = vunpack.c.0.s8 %v1825
        %v1827 = vlaneseq
        %v1828 = vshrl.u32 %v1827, 7
        %v1829 = vsub.s32 %v1826, %v1828
        %v1830 = vrot.slane %v1822, %v1829
        %v1832 = vunpack.c.l.s4 1934713408
        %v1833 = vunpack.c.0.s8 %v1832
        %v1834 = vlaneseq
        %v1835 = vshrl.u32 %v1834, 7
        %v1836 = vsub.s32 %v1833, %v1835
        %v1837 = vrot.slane %v1823, %v1836
        %v1838 = vcombine.low %v1773, %v1789
        %v1839 = vcombine.high %v1773, %v1789
        %v1841 = vunpack.c.l.s4 1934713408
        %v1842 = vunpack.c.0.s8 %v1841
        %v1843 = vlaneseq
        %v1844 = vshrl.u32 %v1843, 7
        %v1845 = vsub.s32 %v1842, %v1844
        %v1846 = vrot.slane %v1838, %v1845
        %v1848 = vunpack.c.l.s4 1934713408
        %v1849 = vunpack.c.0.s8 %v1848
        %v1850 = vlaneseq
        %v1851 = vshrl.u32 %v1850, 7
        %v1852 = vsub.s32 %v1849, %v1851
        %v1853 = vrot.slane %v1839, %v1852
        %v1854 = vcombine.low %v1798, %v1830
        %v1855 = vcombine.high %v1798, %v1830
        %v1856 = vcombine.low %v1805, %v1837
        %v1857 = vcombine.high %v1805, %v1837
        %v1858 = vcombine.low %v1814, %v1846
        %v1859 = vcombine.high %v1814, %v1846
        %v1860 = vcombine.low %v1821, %v1853
        %v1861 = vcombine.high %v1821, %v1853
        %1863 = vrot.lane.b32.xlu0 %v1719, 16
        %v1864 = vpop.permute.xlu0 %1863
        %1867 = vrot.lane.b32.xlu0 %v1720, 32
        %v1868 = vpop.permute.xlu0 %1867
        %1871 = vrot.lane.b32.xlu0 %v1721, 48
        %v1872 = vpop.permute.xlu0 %1871
        %1875 = vrot.lane.b32.xlu0 %v1722, 64
        %v1876 = vpop.permute.xlu0 %1875
        %1879 = vrot.lane.b32.xlu0 %v1723, 80
        %v1880 = vpop.permute.xlu0 %1879
        %1883 = vrot.lane.b32.xlu0 %v1724, 96
        %v1884 = vpop.permute.xlu0 %1883
        %1887 = vrot.lane.b32.xlu0 %v1725, 112
        %v1888 = vpop.permute.xlu0 %1887
        %1891 = vrot.lane.b32.xlu0 %v1855, 16
        %v1892 = vpop.permute.xlu0 %1891
        %1895 = vrot.lane.b32.xlu0 %v1856, 32
        %v1896 = vpop.permute.xlu0 %1895
        %1899 = vrot.lane.b32.xlu0 %v1857, 48
        %v1900 = vpop.permute.xlu0 %1899
        %1903 = vrot.lane.b32.xlu0 %v1858, 64
        %v1904 = vpop.permute.xlu0 %1903
        %1907 = vrot.lane.b32.xlu0 %v1859, 80
        %v1908 = vpop.permute.xlu0 %1907
        %1911 = vrot.lane.b32.xlu0 %v1860, 96
        %v1912 = vpop.permute.xlu0 %1911
        %1915 = vrot.lane.b32.xlu0 %v1861, 112
        %v1916 = vpop.permute.xlu0 %1915
        %v1918 = vsel %vm1116, %v1718, %v1864
        %v1919 = vsel %vm1118, %v1918, %v1868
        %v1920 = vsel %vm1120, %v1919, %v1872
        %v1921 = vsel %vm476, %v1920, %v1876
        %v1922 = vsel %vm1123, %v1921, %v1880
        %v1923 = vsel %vm1125, %v1922, %v1884
        %v1924 = vsel %vm1127, %v1923, %v1888
        %v1925 = vsel %vm1116, %v1854, %v1892
        %v1926 = vsel %vm1118, %v1925, %v1896
        %v1927 = vsel %vm1120, %v1926, %v1900
        %v1928 = vsel %vm476, %v1927, %v1904
        %v1929 = vsel %vm1123, %v1928, %v1908
        %v1930 = vsel %vm1125, %v1929, %v1912
        %v1931 = vsel %vm1127, %v1930, %v1916
        %v1932 = vld [vmem:[#allocation2 + $0x1] sm:$0xff]
        %v1933 = vld [vmem:[#allocation2 + $0x9] sm:$0xff]
        %v1934 = vld [vmem:[#allocation2 + $0x19] sm:$0xff]
        %v1935 = vld [vmem:[#allocation2 + $0x21] sm:$0xff]
        %v1936 = vld [vmem:[#allocation2 + $0x31] sm:$0xff]
        %v1937 = vld [vmem:[#allocation2 + $0x39] sm:$0xff]
        %v1938 = vld [vmem:[#allocation2 + $0x49] sm:$0xff]
        %v1939 = vld [vmem:[#allocation2 + $0x51] sm:$0xff]
        %v1940 = vld [vmem:[#allocation2 + $0x61] sm:$0xff]
        %v1941 = vld [vmem:[#allocation2 + $0x69] sm:$0xff]
        %v1942 = vld [vmem:[#allocation2 + $0x79] sm:$0xff]
        %v1943 = vld [vmem:[#allocation2 + $0x81] sm:$0xff]
        %v1944 = vld [vmem:[#allocation2 + $0x91] sm:$0xff]
        %v1945 = vld [vmem:[#allocation2 + $0x99] sm:$0xff]
        %v1946 = vld [vmem:[#allocation2 + $0xa9] sm:$0xff]
        %v1947 = vld [vmem:[#allocation2 + $0xb1] sm:$0xff]
        %v1948 = vcombine.low %v1932, %v1936
        %v1949 = vcombine.high %v1932, %v1936
        %v1951 = vunpack.c.l.s4 1983009808
        %v1952 = vunpack.c.0.s8 %v1951
        %v1953 = vlaneseq
        %v1954 = vshrl.u32 %v1953, 7
        %v1955 = vsub.s32 %v1952, %v1954
        %v1956 = vrot.slane %v1948, %v1955
        %v1958 = vunpack.c.l.s4 1983009808
        %v1959 = vunpack.c.0.s8 %v1958
        %v1960 = vlaneseq
        %v1961 = vshrl.u32 %v1960, 7
        %v1962 = vsub.s32 %v1959, %v1961
        %v1963 = vrot.slane %v1949, %v1962
        %v1964 = vcombine.low %v1934, %v1938
        %v1965 = vcombine.high %v1934, %v1938
        %v1967 = vunpack.c.l.s4 1983009808
        %v1968 = vunpack.c.0.s8 %v1967
        %v1969 = vlaneseq
        %v1970 = vshrl.u32 %v1969, 7
        %v1971 = vsub.s32 %v1968, %v1970
        %v1972 = vrot.slane %v1964, %v1971
        %v1974 = vunpack.c.l.s4 1983009808
        %v1975 = vunpack.c.0.s8 %v1974
        %v1976 = vlaneseq
        %v1977 = vshrl.u32 %v1976, 7
        %v1978 = vsub.s32 %v1975, %v1977
        %v1979 = vrot.slane %v1965, %v1978
        %v1980 = vcombine.low %v1940, %v1944
        %v1981 = vcombine.high %v1940, %v1944
        %v1983 = vunpack.c.l.s4 1983009808
        %v1984 = vunpack.c.0.s8 %v1983
        %v1985 = vlaneseq
        %v1986 = vshrl.u32 %v1985, 7
        %v1987 = vsub.s32 %v1984, %v1986
        %v1988 = vrot.slane %v1980, %v1987
        %v1990 = vunpack.c.l.s4 1983009808
        %v1991 = vunpack.c.0.s8 %v1990
        %v1992 = vlaneseq
        %v1993 = vshrl.u32 %v1992, 7
        %v1994 = vsub.s32 %v1991, %v1993
        %v1995 = vrot.slane %v1981, %v1994
        %v1996 = vcombine.low %v1942, %v1946
        %v1997 = vcombine.high %v1942, %v1946
        %v1999 = vunpack.c.l.s4 1983009808
        %v2000 = vunpack.c.0.s8 %v1999
        %v2001 = vlaneseq
        %v2002 = vshrl.u32 %v2001, 7
        %v2003 = vsub.s32 %v2000, %v2002
        %v2004 = vrot.slane %v1996, %v2003
        %v2006 = vunpack.c.l.s4 1983009808
        %v2007 = vunpack.c.0.s8 %v2006
        %v2008 = vlaneseq
        %v2009 = vshrl.u32 %v2008, 7
        %v2010 = vsub.s32 %v2007, %v2009
        %v2011 = vrot.slane %v1997, %v2010
        %v2012 = vcombine.low %v1956, %v1972
        %v2013 = vcombine.high %v1956, %v1972
        %v2015 = vunpack.c.l.s4 1934713408
        %v2016 = vunpack.c.0.s8 %v2015
        %v2017 = vlaneseq
        %v2018 = vshrl.u32 %v2017, 7
        %v2019 = vsub.s32 %v2016, %v2018
        %v2020 = vrot.slane %v2012, %v2019
        %v2022 = vunpack.c.l.s4 1934713408
        %v2023 = vunpack.c.0.s8 %v2022
        %v2024 = vlaneseq
        %v2025 = vshrl.u32 %v2024, 7
        %v2026 = vsub.s32 %v2023, %v2025
        %v2027 = vrot.slane %v2013, %v2026
        %v2028 = vcombine.low %v1963, %v1979
        %v2029 = vcombine.high %v1963, %v1979
        %v2031 = vunpack.c.l.s4 1934713408
        %v2032 = vunpack.c.0.s8 %v2031
        %v2033 = vlaneseq
        %v2034 = vshrl.u32 %v2033, 7
        %v2035 = vsub.s32 %v2032, %v2034
        %v2036 = vrot.slane %v2028, %v2035
        %v2038 = vunpack.c.l.s4 1934713408
        %v2039 = vunpack.c.0.s8 %v2038
        %v2040 = vlaneseq
        %v2041 = vshrl.u32 %v2040, 7
        %v2042 = vsub.s32 %v2039, %v2041
        %v2043 = vrot.slane %v2029, %v2042
        %v2044 = vcombine.low %v1988, %v2004
        %v2045 = vcombine.high %v1988, %v2004
        %v2047 = vunpack.c.l.s4 1934713408
        %v2048 = vunpack.c.0.s8 %v2047
        %v2049 = vlaneseq
        %v2050 = vshrl.u32 %v2049, 7
        %v2051 = vsub.s32 %v2048, %v2050
        %v2052 = vrot.slane %v2044, %v2051
        %v2054 = vunpack.c.l.s4 1934713408
        %v2055 = vunpack.c.0.s8 %v2054
        %v2056 = vlaneseq
        %v2057 = vshrl.u32 %v2056, 7
        %v2058 = vsub.s32 %v2055, %v2057
        %v2059 = vrot.slane %v2045, %v2058
        %v2060 = vcombine.low %v1995, %v2011
        %v2061 = vcombine.high %v1995, %v2011
        %v2063 = vunpack.c.l.s4 1934713408
        %v2064 = vunpack.c.0.s8 %v2063
        %v2065 = vlaneseq
        %v2066 = vshrl.u32 %v2065, 7
        %v2067 = vsub.s32 %v2064, %v2066
        %v2068 = vrot.slane %v2060, %v2067
        %v2070 = vunpack.c.l.s4 1934713408
        %v2071 = vunpack.c.0.s8 %v2070
        %v2072 = vlaneseq
        %v2073 = vshrl.u32 %v2072, 7
        %v2074 = vsub.s32 %v2071, %v2073
        %v2075 = vrot.slane %v2061, %v2074
        %v2076 = vcombine.low %v2020, %v2052
        %v2077 = vcombine.high %v2020, %v2052
        %v2078 = vcombine.low %v2027, %v2059
        %v2079 = vcombine.high %v2027, %v2059
        %v2080 = vcombine.low %v2036, %v2068
        %v2081 = vcombine.high %v2036, %v2068
        %v2082 = vcombine.low %v2043, %v2075
        %v2083 = vcombine.high %v2043, %v2075
        %v2084 = vcombine.low %v1933, %v1937
        %v2085 = vcombine.high %v1933, %v1937
        %v2087 = vunpack.c.l.s4 1983009808
        %v2088 = vunpack.c.0.s8 %v2087
        %v2089 = vlaneseq
        %v2090 = vshrl.u32 %v2089, 7
        %v2091 = vsub.s32 %v2088, %v2090
        %v2092 = vrot.slane %v2084, %v2091
        %v2094 = vunpack.c.l.s4 1983009808
        %v2095 = vunpack.c.0.s8 %v2094
        %v2096 = vlaneseq
        %v2097 = vshrl.u32 %v2096, 7
        %v2098 = vsub.s32 %v2095, %v2097
        %v2099 = vrot.slane %v2085, %v2098
        %v2100 = vcombine.low %v1935, %v1939
        %v2101 = vcombine.high %v1935, %v1939
        %v2103 = vunpack.c.l.s4 1983009808
        %v2104 = vunpack.c.0.s8 %v2103
        %v2105 = vlaneseq
        %v2106 = vshrl.u32 %v2105, 7
        %v2107 = vsub.s32 %v2104, %v2106
        %v2108 = vrot.slane %v2100, %v2107
        %v2110 = vunpack.c.l.s4 1983009808
        %v2111 = vunpack.c.0.s8 %v2110
        %v2112 = vlaneseq
        %v2113 = vshrl.u32 %v2112, 7
        %v2114 = vsub.s32 %v2111, %v2113
        %v2115 = vrot.slane %v2101, %v2114
        %v2116 = vcombine.low %v1941, %v1945
        %v2117 = vcombine.high %v1941, %v1945
        %v2119 = vunpack.c.l.s4 1983009808
        %v2120 = vunpack.c.0.s8 %v2119
        %v2121 = vlaneseq
        %v2122 = vshrl.u32 %v2121, 7
        %v2123 = vsub.s32 %v2120, %v2122
        %v2124 = vrot.slane %v2116, %v2123
        %v2126 = vunpack.c.l.s4 1983009808
        %v2127 = vunpack.c.0.s8 %v2126
        %v2128 = vlaneseq
        %v2129 = vshrl.u32 %v2128, 7
        %v2130 = vsub.s32 %v2127, %v2129
        %v2131 = vrot.slane %v2117, %v2130
        %v2132 = vcombine.low %v1943, %v1947
        %v2133 = vcombine.high %v1943, %v1947
        %v2135 = vunpack.c.l.s4 1983009808
        %v2136 = vunpack.c.0.s8 %v2135
        %v2137 = vlaneseq
        %v2138 = vshrl.u32 %v2137, 7
        %v2139 = vsub.s32 %v2136, %v2138
        %v2140 = vrot.slane %v2132, %v2139
        %v2142 = vunpack.c.l.s4 1983009808
        %v2143 = vunpack.c.0.s8 %v2142
        %v2144 = vlaneseq
        %v2145 = vshrl.u32 %v2144, 7
        %v2146 = vsub.s32 %v2143, %v2145
        %v2147 = vrot.slane %v2133, %v2146
        %v2148 = vcombine.low %v2092, %v2108
        %v2149 = vcombine.high %v2092, %v2108
        %v2151 = vunpack.c.l.s4 1934713408
        %v2152 = vunpack.c.0.s8 %v2151
        %v2153 = vlaneseq
        %v2154 = vshrl.u32 %v2153, 7
        %v2155 = vsub.s32 %v2152, %v2154
        %v2156 = vrot.slane %v2148, %v2155
        %v2158 = vunpack.c.l.s4 1934713408
        %v2159 = vunpack.c.0.s8 %v2158
        %v2160 = vlaneseq
        %v2161 = vshrl.u32 %v2160, 7
        %v2162 = vsub.s32 %v2159, %v2161
        %v2163 = vrot.slane %v2149, %v2162
        %v2164 = vcombine.low %v2099, %v2115
        %v2165 = vcombine.high %v2099, %v2115
        %v2167 = vunpack.c.l.s4 1934713408
        %v2168 = vunpack.c.0.s8 %v2167
        %v2169 = vlaneseq
        %v2170 = vshrl.u32 %v2169, 7
        %v2171 = vsub.s32 %v2168, %v2170
        %v2172 = vrot.slane %v2164, %v2171
        %v2174 = vunpack.c.l.s4 1934713408
        %v2175 = vunpack.c.0.s8 %v2174
        %v2176 = vlaneseq
        %v2177 = vshrl.u32 %v2176, 7
        %v2178 = vsub.s32 %v2175, %v2177
        %v2179 = vrot.slane %v2165, %v2178
        %v2180 = vcombine.low %v2124, %v2140
        %v2181 = vcombine.high %v2124, %v2140
        %v2183 = vunpack.c.l.s4 1934713408
        %v2184 = vunpack.c.0.s8 %v2183
        %v2185 = vlaneseq
        %v2186 = vshrl.u32 %v2185, 7
        %v2187 = vsub.s32 %v2184, %v2186
        %v2188 = vrot.slane %v2180, %v2187
        %v2190 = vunpack.c.l.s4 1934713408
        %v2191 = vunpack.c.0.s8 %v2190
        %v2192 = vlaneseq
        %v2193 = vshrl.u32 %v2192, 7
        %v2194 = vsub.s32 %v2191, %v2193
        %v2195 = vrot.slane %v2181, %v2194
        %v2196 = vcombine.low %v2131, %v2147
        %v2197 = vcombine.high %v2131, %v2147
        %v2199 = vunpack.c.l.s4 1934713408
        %v2200 = vunpack.c.0.s8 %v2199
        %v2201 = vlaneseq
        %v2202 = vshrl.u32 %v2201, 7
        %v2203 = vsub.s32 %v2200, %v2202
        %v2204 = vrot.slane %v2196, %v2203
        %v2206 = vunpack.c.l.s4 1934713408
        %v2207 = vunpack.c.0.s8 %v2206
        %v2208 = vlaneseq
        %v2209 = vshrl.u32 %v2208, 7
        %v2210 = vsub.s32 %v2207, %v2209
        %v2211 = vrot.slane %v2197, %v2210
        %v2212 = vcombine.low %v2156, %v2188
        %v2213 = vcombine.high %v2156, %v2188
        %v2214 = vcombine.low %v2163, %v2195
        %v2215 = vcombine.high %v2163, %v2195
        %v2216 = vcombine.low %v2172, %v2204
        %v2217 = vcombine.high %v2172, %v2204
        %v2218 = vcombine.low %v2179, %v2211
        %v2219 = vcombine.high %v2179, %v2211
        %2221 = vrot.lane.b32.xlu0 %v2077, 16
        %v2222 = vpop.permute.xlu0 %2221
        %2225 = vrot.lane.b32.xlu0 %v2078, 32
        %v2226 = vpop.permute.xlu0 %2225
        %2229 = vrot.lane.b32.xlu0 %v2079, 48
        %v2230 = vpop.permute.xlu0 %2229
        %2233 = vrot.lane.b32.xlu0 %v2080, 64
        %v2234 = vpop.permute.xlu0 %2233
        %2237 = vrot.lane.b32.xlu0 %v2081, 80
        %v2238 = vpop.permute.xlu0 %2237
        %2241 = vrot.lane.b32.xlu0 %v2082, 96
        %v2242 = vpop.permute.xlu0 %2241
        %2245 = vrot.lane.b32.xlu0 %v2083, 112
        %v2246 = vpop.permute.xlu0 %2245
        %2249 = vrot.lane.b32.xlu0 %v2213, 16
        %v2250 = vpop.permute.xlu0 %2249
        %2253 = vrot.lane.b32.xlu0 %v2214, 32
        %v2254 = vpop.permute.xlu0 %2253
        %2257 = vrot.lane.b32.xlu0 %v2215, 48
        %v2258 = vpop.permute.xlu0 %2257
        %2261 = vrot.lane.b32.xlu0 %v2216, 64
        %v2262 = vpop.permute.xlu0 %2261
        %2265 = vrot.lane.b32.xlu0 %v2217, 80
        %v2266 = vpop.permute.xlu0 %2265
        %2269 = vrot.lane.b32.xlu0 %v2218, 96
        %v2270 = vpop.permute.xlu0 %2269
        %2273 = vrot.lane.b32.xlu0 %v2219, 112
        %v2274 = vpop.permute.xlu0 %2273
        %v2276 = vsel %vm1116, %v2076, %v2222
        %v2277 = vsel %vm1118, %v2276, %v2226
        %v2278 = vsel %vm1120, %v2277, %v2230
        %v2279 = vsel %vm476, %v2278, %v2234
        %v2280 = vsel %vm1123, %v2279, %v2238
        %v2281 = vsel %vm1125, %v2280, %v2242
        %v2282 = vsel %vm1127, %v2281, %v2246
        %v2283 = vsel %vm1116, %v2212, %v2250
        %v2284 = vsel %vm1118, %v2283, %v2254
        %v2285 = vsel %vm1120, %v2284, %v2258
        %v2286 = vsel %vm476, %v2285, %v2262
        %v2287 = vsel %vm1123, %v2286, %v2266
        %v2288 = vsel %vm1125, %v2287, %v2270
        %v2289 = vsel %vm1127, %v2288, %v2274
        %2306 = vrot.lane.b32.xlu0 %v1932, 127
        %v2307 = vpop.permute.xlu0 %2306
        %2308 = vrot.lane.b32.xlu0 %v1933, 127
        %v2309 = vpop.permute.xlu0 %2308
        %2310 = vrot.lane.b32.xlu0 %v1934, 127
        %v2311 = vpop.permute.xlu0 %2310
        %2312 = vrot.lane.b32.xlu0 %v1935, 127
        %v2313 = vpop.permute.xlu0 %2312
        %2314 = vrot.lane.b32.xlu0 %v1936, 127
        %v2315 = vpop.permute.xlu0 %2314
        %2316 = vrot.lane.b32.xlu0 %v1937, 127
        %v2317 = vpop.permute.xlu0 %2316
        %2318 = vrot.lane.b32.xlu0 %v1938, 127
        %v2319 = vpop.permute.xlu0 %2318
        %2320 = vrot.lane.b32.xlu0 %v1939, 127
        %v2321 = vpop.permute.xlu0 %2320
        %2322 = vrot.lane.b32.xlu0 %v1940, 127
        %v2323 = vpop.permute.xlu0 %2322
        %2324 = vrot.lane.b32.xlu0 %v1941, 127
        %v2325 = vpop.permute.xlu0 %2324
        %2326 = vrot.lane.b32.xlu0 %v1942, 127
        %v2327 = vpop.permute.xlu0 %2326
        %2328 = vrot.lane.b32.xlu0 %v1943, 127
        %v2329 = vpop.permute.xlu0 %2328
        %2330 = vrot.lane.b32.xlu0 %v1944, 127
        %v2331 = vpop.permute.xlu0 %2330
        %2332 = vrot.lane.b32.xlu0 %v1945, 127
        %v2333 = vpop.permute.xlu0 %2332
        %2334 = vrot.lane.b32.xlu0 %v1946, 127
        %v2335 = vpop.permute.xlu0 %2334
        %2336 = vrot.lane.b32.xlu0 %v1947, 127
        %v2337 = vpop.permute.xlu0 %2336
        %v2354 = vcombine.low %v2307, %v2315
        %v2355 = vcombine.high %v2307, %v2315
        %v2357 = vunpack.c.l.s4 1983009808
        %v2358 = vunpack.c.0.s8 %v2357
        %v2359 = vlaneseq
        %v2360 = vshrl.u32 %v2359, 7
        %v2361 = vsub.s32 %v2358, %v2360
        %v2362 = vrot.slane %v2354, %v2361
        %v2364 = vunpack.c.l.s4 1983009808
        %v2365 = vunpack.c.0.s8 %v2364
        %v2366 = vlaneseq
        %v2367 = vshrl.u32 %v2366, 7
        %v2368 = vsub.s32 %v2365, %v2367
        %v2369 = vrot.slane %v2355, %v2368
        %v2370 = vcombine.low %v2311, %v2319
        %v2371 = vcombine.high %v2311, %v2319
        %v2373 = vunpack.c.l.s4 1983009808
        %v2374 = vunpack.c.0.s8 %v2373
        %v2375 = vlaneseq
        %v2376 = vshrl.u32 %v2375, 7
        %v2377 = vsub.s32 %v2374, %v2376
        %v2378 = vrot.slane %v2370, %v2377
        %v2380 = vunpack.c.l.s4 1983009808
        %v2381 = vunpack.c.0.s8 %v2380
        %v2382 = vlaneseq
        %v2383 = vshrl.u32 %v2382, 7
        %v2384 = vsub.s32 %v2381, %v2383
        %v2385 = vrot.slane %v2371, %v2384
        %v2386 = vcombine.low %v2323, %v2331
        %v2387 = vcombine.high %v2323, %v2331
        %v2389 = vunpack.c.l.s4 1983009808
        %v2390 = vunpack.c.0.s8 %v2389
        %v2391 = vlaneseq
        %v2392 = vshrl.u32 %v2391, 7
        %v2393 = vsub.s32 %v2390, %v2392
        %v2394 = vrot.slane %v2386, %v2393
        %v2396 = vunpack.c.l.s4 1983009808
        %v2397 = vunpack.c.0.s8 %v2396
        %v2398 = vlaneseq
        %v2399 = vshrl.u32 %v2398, 7
        %v2400 = vsub.s32 %v2397, %v2399
        %v2401 = vrot.slane %v2387, %v2400
        %v2402 = vcombine.low %v2327, %v2335
        %v2403 = vcombine.high %v2327, %v2335
        %v2405 = vunpack.c.l.s4 1983009808
        %v2406 = vunpack.c.0.s8 %v2405
        %v2407 = vlaneseq
        %v2408 = vshrl.u32 %v2407, 7
        %v2409 = vsub.s32 %v2406, %v2408
        %v2410 = vrot.slane %v2402, %v2409
        %v2412 = vunpack.c.l.s4 1983009808
        %v2413 = vunpack.c.0.s8 %v2412
        %v2414 = vlaneseq
        %v2415 = vshrl.u32 %v2414, 7
        %v2416 = vsub.s32 %v2413, %v2415
        %v2417 = vrot.slane %v2403, %v2416
        %v2418 = vcombine.low %v2362, %v2378
        %v2419 = vcombine.high %v2362, %v2378
        %v2421 = vunpack.c.l.s4 1934713408
        %v2422 = vunpack.c.0.s8 %v2421
        %v2423 = vlaneseq
        %v2424 = vshrl.u32 %v2423, 7
        %v2425 = vsub.s32 %v2422, %v2424
        %v2426 = vrot.slane %v2418, %v2425
        %v2428 = vunpack.c.l.s4 1934713408
        %v2429 = vunpack.c.0.s8 %v2428
        %v2430 = vlaneseq
        %v2431 = vshrl.u32 %v2430, 7
        %v2432 = vsub.s32 %v2429, %v2431
        %v2433 = vrot.slane %v2419, %v2432
        %v2434 = vcombine.low %v2369, %v2385
        %v2435 = vcombine.high %v2369, %v2385
        %v2437 = vunpack.c.l.s4 1934713408
        %v2438 = vunpack.c.0.s8 %v2437
        %v2439 = vlaneseq
        %v2440 = vshrl.u32 %v2439, 7
        %v2441 = vsub.s32 %v2438, %v2440
        %v2442 = vrot.slane %v2434, %v2441
        %v2444 = vunpack.c.l.s4 1934713408
        %v2445 = vunpack.c.0.s8 %v2444
        %v2446 = vlaneseq
        %v2447 = vshrl.u32 %v2446, 7
        %v2448 = vsub.s32 %v2445, %v2447
        %v2449 = vrot.slane %v2435, %v2448
        %v2450 = vcombine.low %v2394, %v2410
        %v2451 = vcombine.high %v2394, %v2410
        %v2453 = vunpack.c.l.s4 1934713408
        %v2454 = vunpack.c.0.s8 %v2453
        %v2455 = vlaneseq
        %v2456 = vshrl.u32 %v2455, 7
        %v2457 = vsub.s32 %v2454, %v2456
        %v2458 = vrot.slane %v2450, %v2457
        %v2460 = vunpack.c.l.s4 1934713408
        %v2461 = vunpack.c.0.s8 %v2460
        %v2462 = vlaneseq
        %v2463 = vshrl.u32 %v2462, 7
        %v2464 = vsub.s32 %v2461, %v2463
        %v2465 = vrot.slane %v2451, %v2464
        %v2466 = vcombine.low %v2401, %v2417
        %v2467 = vcombine.high %v2401, %v2417
        %v2469 = vunpack.c.l.s4 1934713408
        %v2470 = vunpack.c.0.s8 %v2469
        %v2471 = vlaneseq
        %v2472 = vshrl.u32 %v2471, 7
        %v2473 = vsub.s32 %v2470, %v2472
        %v2474 = vrot.slane %v2466, %v2473
        %v2476 = vunpack.c.l.s4 1934713408
        %v2477 = vunpack.c.0.s8 %v2476
        %v2478 = vlaneseq
        %v2479 = vshrl.u32 %v2478, 7
        %v2480 = vsub.s32 %v2477, %v2479
        %v2481 = vrot.slane %v2467, %v2480
        %v2482 = vcombine.low %v2426, %v2458
        %v2483 = vcombine.high %v2426, %v2458
        %v2484 = vcombine.low %v2433, %v2465
        %v2485 = vcombine.high %v2433, %v2465
        %v2486 = vcombine.low %v2442, %v2474
        %v2487 = vcombine.high %v2442, %v2474
        %v2488 = vcombine.low %v2449, %v2481
        %v2489 = vcombine.high %v2449, %v2481
        %v2490 = vcombine.low %v2309, %v2317
        %v2491 = vcombine.high %v2309, %v2317
        %v2493 = vunpack.c.l.s4 1983009808
        %v2494 = vunpack.c.0.s8 %v2493
        %v2495 = vlaneseq
        %v2496 = vshrl.u32 %v2495, 7
        %v2497 = vsub.s32 %v2494, %v2496
        %v2498 = vrot.slane %v2490, %v2497
        %v2500 = vunpack.c.l.s4 1983009808
        %v2501 = vunpack.c.0.s8 %v2500
        %v2502 = vlaneseq
        %v2503 = vshrl.u32 %v2502, 7
        %v2504 = vsub.s32 %v2501, %v2503
        %v2505 = vrot.slane %v2491, %v2504
        %v2506 = vcombine.low %v2313, %v2321
        %v2507 = vcombine.high %v2313, %v2321
        %v2509 = vunpack.c.l.s4 1983009808
        %v2510 = vunpack.c.0.s8 %v2509
        %v2511 = vlaneseq
        %v2512 = vshrl.u32 %v2511, 7
        %v2513 = vsub.s32 %v2510, %v2512
        %v2514 = vrot.slane %v2506, %v2513
        %v2516 = vunpack.c.l.s4 1983009808
        %v2517 = vunpack.c.0.s8 %v2516
        %v2518 = vlaneseq
        %v2519 = vshrl.u32 %v2518, 7
        %v2520 = vsub.s32 %v2517, %v2519
        %v2521 = vrot.slane %v2507, %v2520
        %v2522 = vcombine.low %v2325, %v2333
        %v2523 = vcombine.high %v2325, %v2333
        %v2525 = vunpack.c.l.s4 1983009808
        %v2526 = vunpack.c.0.s8 %v2525
        %v2527 = vlaneseq
        %v2528 = vshrl.u32 %v2527, 7
        %v2529 = vsub.s32 %v2526, %v2528
        %v2530 = vrot.slane %v2522, %v2529
        %v2532 = vunpack.c.l.s4 1983009808
        %v2533 = vunpack.c.0.s8 %v2532
        %v2534 = vlaneseq
        %v2535 = vshrl.u32 %v2534, 7
        %v2536 = vsub.s32 %v2533, %v2535
        %v2537 = vrot.slane %v2523, %v2536
        %v2538 = vcombine.low %v2329, %v2337
        %v2539 = vcombine.high %v2329, %v2337
        %v2541 = vunpack.c.l.s4 1983009808
        %v2542 = vunpack.c.0.s8 %v2541
        %v2543 = vlaneseq
        %v2544 = vshrl.u32 %v2543, 7
        %v2545 = vsub.s32 %v2542, %v2544
        %v2546 = vrot.slane %v2538, %v2545
        %v2548 = vunpack.c.l.s4 1983009808
        %v2549 = vunpack.c.0.s8 %v2548
        %v2550 = vlaneseq
        %v2551 = vshrl.u32 %v2550, 7
        %v2552 = vsub.s32 %v2549, %v2551
        %v2553 = vrot.slane %v2539, %v2552
        %v2554 = vcombine.low %v2498, %v2514
        %v2555 = vcombine.high %v2498, %v2514
        %v2557 = vunpack.c.l.s4 1934713408
        %v2558 = vunpack.c.0.s8 %v2557
        %v2559 = vlaneseq
        %v2560 = vshrl.u32 %v2559, 7
        %v2561 = vsub.s32 %v2558, %v2560
        %v2562 = vrot.slane %v2554, %v2561
        %v2564 = vunpack.c.l.s4 1934713408
        %v2565 = vunpack.c.0.s8 %v2564
        %v2566 = vlaneseq
        %v2567 = vshrl.u32 %v2566, 7
        %v2568 = vsub.s32 %v2565, %v2567
        %v2569 = vrot.slane %v2555, %v2568
        %v2570 = vcombine.low %v2505, %v2521
        %v2571 = vcombine.high %v2505, %v2521
        %v2573 = vunpack.c.l.s4 1934713408
        %v2574 = vunpack.c.0.s8 %v2573
        %v2575 = vlaneseq
        %v2576 = vshrl.u32 %v2575, 7
        %v2577 = vsub.s32 %v2574, %v2576
        %v2578 = vrot.slane %v2570, %v2577
        %v2580 = vunpack.c.l.s4 1934713408
        %v2581 = vunpack.c.0.s8 %v2580
        %v2582 = vlaneseq
        %v2583 = vshrl.u32 %v2582, 7
        %v2584 = vsub.s32 %v2581, %v2583
        %v2585 = vrot.slane %v2571, %v2584
        %v2586 = vcombine.low %v2530, %v2546
        %v2587 = vcombine.high %v2530, %v2546
        %v2589 = vunpack.c.l.s4 1934713408
        %v2590 = vunpack.c.0.s8 %v2589
        %v2591 = vlaneseq
        %v2592 = vshrl.u32 %v2591, 7
        %v2593 = vsub.s32 %v2590, %v2592
        %v2594 = vrot.slane %v2586, %v2593
        %v2596 = vunpack.c.l.s4 1934713408
        %v2597 = vunpack.c.0.s8 %v2596
        %v2598 = vlaneseq
        %v2599 = vshrl.u32 %v2598, 7
        %v2600 = vsub.s32 %v2597, %v2599
        %v2601 = vrot.slane %v2587, %v2600
        %v2602 = vcombine.low %v2537, %v2553
        %v2603 = vcombine.high %v2537, %v2553
        %v2605 = vunpack.c.l.s4 1934713408
        %v2606 = vunpack.c.0.s8 %v2605
        %v2607 = vlaneseq
        %v2608 = vshrl.u32 %v2607, 7
        %v2609 = vsub.s32 %v2606, %v2608
        %v2610 = vrot.slane %v2602, %v2609
        %v2612 = vunpack.c.l.s4 1934713408
        %v2613 = vunpack.c.0.s8 %v2612
        %v2614 = vlaneseq
        %v2615 = vshrl.u32 %v2614, 7
        %v2616 = vsub.s32 %v2613, %v2615
        %v2617 = vrot.slane %v2603, %v2616
        %v2618 = vcombine.low %v2562, %v2594
        %v2619 = vcombine.high %v2562, %v2594
        %v2620 = vcombine.low %v2569, %v2601
        %v2621 = vcombine.high %v2569, %v2601
        %v2622 = vcombine.low %v2578, %v2610
        %v2623 = vcombine.high %v2578, %v2610
        %v2624 = vcombine.low %v2585, %v2617
        %v2625 = vcombine.high %v2585, %v2617
        %2627 = vrot.lane.b32.xlu0 %v2483, 16
        %v2628 = vpop.permute.xlu0 %2627
        %2631 = vrot.lane.b32.xlu0 %v2484, 32
        %v2632 = vpop.permute.xlu0 %2631
        %2635 = vrot.lane.b32.xlu0 %v2485, 48
        %v2636 = vpop.permute.xlu0 %2635
        %2639 = vrot.lane.b32.xlu0 %v2486, 64
        %v2640 = vpop.permute.xlu0 %2639
        %2643 = vrot.lane.b32.xlu0 %v2487, 80
        %v2644 = vpop.permute.xlu0 %2643
        %2647 = vrot.lane.b32.xlu0 %v2488, 96
        %v2648 = vpop.permute.xlu0 %2647
        %2651 = vrot.lane.b32.xlu0 %v2489, 112
        %v2652 = vpop.permute.xlu0 %2651
        %2655 = vrot.lane.b32.xlu0 %v2619, 16
        %v2656 = vpop.permute.xlu0 %2655
        %2659 = vrot.lane.b32.xlu0 %v2620, 32
        %v2660 = vpop.permute.xlu0 %2659
        %2663 = vrot.lane.b32.xlu0 %v2621, 48
        %v2664 = vpop.permute.xlu0 %2663
        %2667 = vrot.lane.b32.xlu0 %v2622, 64
        %v2668 = vpop.permute.xlu0 %2667
        %2671 = vrot.lane.b32.xlu0 %v2623, 80
        %v2672 = vpop.permute.xlu0 %2671
        %2675 = vrot.lane.b32.xlu0 %v2624, 96
        %v2676 = vpop.permute.xlu0 %2675
        %2679 = vrot.lane.b32.xlu0 %v2625, 112
        %v2680 = vpop.permute.xlu0 %2679
        %v2682 = vsel %vm1116, %v2482, %v2628
        %v2683 = vsel %vm1118, %v2682, %v2632
        %v2684 = vsel %vm1120, %v2683, %v2636
        %v2685 = vsel %vm476, %v2684, %v2640
        %v2686 = vsel %vm1123, %v2685, %v2644
        %v2687 = vsel %vm1125, %v2686, %v2648
        %v2688 = vsel %vm1127, %v2687, %v2652
        %v2689 = vsel %vm1116, %v2618, %v2656
        %v2690 = vsel %vm1118, %v2689, %v2660
        %v2691 = vsel %vm1120, %v2690, %v2664
        %v2692 = vsel %vm476, %v2691, %v2668
        %v2693 = vsel %vm1123, %v2692, %v2672
        %v2694 = vsel %vm1125, %v2693, %v2676
        %v2695 = vsel %vm1127, %v2694, %v2680
        %2696 = vrot.lane.b32.xlu0 %v1932, 126
        %v2697 = vpop.permute.xlu0 %2696
        %2698 = vrot.lane.b32.xlu0 %v1933, 126
        %v2699 = vpop.permute.xlu0 %2698
        %2700 = vrot.lane.b32.xlu0 %v1934, 126
        %v2701 = vpop.permute.xlu0 %2700
        %2702 = vrot.lane.b32.xlu0 %v1935, 126
        %v2703 = vpop.permute.xlu0 %2702
        %2704 = vrot.lane.b32.xlu0 %v1936, 126
        %v2705 = vpop.permute.xlu0 %2704
        %2706 = vrot.lane.b32.xlu0 %v1937, 126
        %v2707 = vpop.permute.xlu0 %2706
        %2708 = vrot.lane.b32.xlu0 %v1938, 126
        %v2709 = vpop.permute.xlu0 %2708
        %2710 = vrot.lane.b32.xlu0 %v1939, 126
        %v2711 = vpop.permute.xlu0 %2710
        %2712 = vrot.lane.b32.xlu0 %v1940, 126
        %v2713 = vpop.permute.xlu0 %2712
        %2714 = vrot.lane.b32.xlu0 %v1941, 126
        %v2715 = vpop.permute.xlu0 %2714
        %2716 = vrot.lane.b32.xlu0 %v1942, 126
        %v2717 = vpop.permute.xlu0 %2716
        %2718 = vrot.lane.b32.xlu0 %v1943, 126
        %v2719 = vpop.permute.xlu0 %2718
        %2720 = vrot.lane.b32.xlu0 %v1944, 126
        %v2721 = vpop.permute.xlu0 %2720
        %2722 = vrot.lane.b32.xlu0 %v1945, 126
        %v2723 = vpop.permute.xlu0 %2722
        %2724 = vrot.lane.b32.xlu0 %v1946, 126
        %v2725 = vpop.permute.xlu0 %2724
        %2726 = vrot.lane.b32.xlu0 %v1947, 126
        %v2727 = vpop.permute.xlu0 %2726
        %v2744 = vcombine.low %v2697, %v2705
        %v2745 = vcombine.high %v2697, %v2705
        %v2747 = vunpack.c.l.s4 1983009808
        %v2748 = vunpack.c.0.s8 %v2747
        %v2749 = vlaneseq
        %v2750 = vshrl.u32 %v2749, 7
        %v2751 = vsub.s32 %v2748, %v2750
        %v2752 = vrot.slane %v2744, %v2751
        %v2754 = vunpack.c.l.s4 1983009808
        %v2755 = vunpack.c.0.s8 %v2754
        %v2756 = vlaneseq
        %v2757 = vshrl.u32 %v2756, 7
        %v2758 = vsub.s32 %v2755, %v2757
        %v2759 = vrot.slane %v2745, %v2758
        %v2760 = vcombine.low %v2701, %v2709
        %v2761 = vcombine.high %v2701, %v2709
        %v2763 = vunpack.c.l.s4 1983009808
        %v2764 = vunpack.c.0.s8 %v2763
        %v2765 = vlaneseq
        %v2766 = vshrl.u32 %v2765, 7
        %v2767 = vsub.s32 %v2764, %v2766
        %v2768 = vrot.slane %v2760, %v2767
        %v2770 = vunpack.c.l.s4 1983009808
        %v2771 = vunpack.c.0.s8 %v2770
        %v2772 = vlaneseq
        %v2773 = vshrl.u32 %v2772, 7
        %v2774 = vsub.s32 %v2771, %v2773
        %v2775 = vrot.slane %v2761, %v2774
        %v2776 = vcombine.low %v2713, %v2721
        %v2777 = vcombine.high %v2713, %v2721
        %v2779 = vunpack.c.l.s4 1983009808
        %v2780 = vunpack.c.0.s8 %v2779
        %v2781 = vlaneseq
        %v2782 = vshrl.u32 %v2781, 7
        %v2783 = vsub.s32 %v2780, %v2782
        %v2784 = vrot.slane %v2776, %v2783
        %v2786 = vunpack.c.l.s4 1983009808
        %v2787 = vunpack.c.0.s8 %v2786
        %v2788 = vlaneseq
        %v2789 = vshrl.u32 %v2788, 7
        %v2790 = vsub.s32 %v2787, %v2789
        %v2791 = vrot.slane %v2777, %v2790
        %v2792 = vcombine.low %v2717, %v2725
        %v2793 = vcombine.high %v2717, %v2725
        %v2795 = vunpack.c.l.s4 1983009808
        %v2796 = vunpack.c.0.s8 %v2795
        %v2797 = vlaneseq
        %v2798 = vshrl.u32 %v2797, 7
        %v2799 = vsub.s32 %v2796, %v2798
        %v2800 = vrot.slane %v2792, %v2799
        %v2802 = vunpack.c.l.s4 1983009808
        %v2803 = vunpack.c.0.s8 %v2802
        %v2804 = vlaneseq
        %v2805 = vshrl.u32 %v2804, 7
        %v2806 = vsub.s32 %v2803, %v2805
        %v2807 = vrot.slane %v2793, %v2806
        %v2808 = vcombine.low %v2752, %v2768
        %v2809 = vcombine.high %v2752, %v2768
        %v2811 = vunpack.c.l.s4 1934713408
        %v2812 = vunpack.c.0.s8 %v2811
        %v2813 = vlaneseq
        %v2814 = vshrl.u32 %v2813, 7
        %v2815 = vsub.s32 %v2812, %v2814
        %v2816 = vrot.slane %v2808, %v2815
        %v2818 = vunpack.c.l.s4 1934713408
        %v2819 = vunpack.c.0.s8 %v2818
        %v2820 = vlaneseq
        %v2821 = vshrl.u32 %v2820, 7
        %v2822 = vsub.s32 %v2819, %v2821
        %v2823 = vrot.slane %v2809, %v2822
        %v2824 = vcombine.low %v2759, %v2775
        %v2825 = vcombine.high %v2759, %v2775
        %v2827 = vunpack.c.l.s4 1934713408
        %v2828 = vunpack.c.0.s8 %v2827
        %v2829 = vlaneseq
        %v2830 = vshrl.u32 %v2829, 7
        %v2831 = vsub.s32 %v2828, %v2830
        %v2832 = vrot.slane %v2824, %v2831
        %v2834 = vunpack.c.l.s4 1934713408
        %v2835 = vunpack.c.0.s8 %v2834
        %v2836 = vlaneseq
        %v2837 = vshrl.u32 %v2836, 7
        %v2838 = vsub.s32 %v2835, %v2837
        %v2839 = vrot.slane %v2825, %v2838
        %v2840 = vcombine.low %v2784, %v2800
        %v2841 = vcombine.high %v2784, %v2800
        %v2843 = vunpack.c.l.s4 1934713408
        %v2844 = vunpack.c.0.s8 %v2843
        %v2845 = vlaneseq
        %v2846 = vshrl.u32 %v2845, 7
        %v2847 = vsub.s32 %v2844, %v2846
        %v2848 = vrot.slane %v2840, %v2847
        %v2850 = vunpack.c.l.s4 1934713408
        %v2851 = vunpack.c.0.s8 %v2850
        %v2852 = vlaneseq
        %v2853 = vshrl.u32 %v2852, 7
        %v2854 = vsub.s32 %v2851, %v2853
        %v2855 = vrot.slane %v2841, %v2854
        %v2856 = vcombine.low %v2791, %v2807
        %v2857 = vcombine.high %v2791, %v2807
        %v2859 = vunpack.c.l.s4 1934713408
        %v2860 = vunpack.c.0.s8 %v2859
        %v2861 = vlaneseq
        %v2862 = vshrl.u32 %v2861, 7
        %v2863 = vsub.s32 %v2860, %v2862
        %v2864 = vrot.slane %v2856, %v2863
        %v2866 = vunpack.c.l.s4 1934713408
        %v2867 = vunpack.c.0.s8 %v2866
        %v2868 = vlaneseq
        %v2869 = vshrl.u32 %v2868, 7
        %v2870 = vsub.s32 %v2867, %v2869
        %v2871 = vrot.slane %v2857, %v2870
        %v2872 = vcombine.low %v2816, %v2848
        %v2873 = vcombine.high %v2816, %v2848
        %v2874 = vcombine.low %v2823, %v2855
        %v2875 = vcombine.high %v2823, %v2855
        %v2876 = vcombine.low %v2832, %v2864
        %v2877 = vcombine.high %v2832, %v2864
        %v2878 = vcombine.low %v2839, %v2871
        %v2879 = vcombine.high %v2839, %v2871
        %v2880 = vcombine.low %v2699, %v2707
        %v2881 = vcombine.high %v2699, %v2707
        %v2883 = vunpack.c.l.s4 1983009808
        %v2884 = vunpack.c.0.s8 %v2883
        %v2885 = vlaneseq
        %v2886 = vshrl.u32 %v2885, 7
        %v2887 = vsub.s32 %v2884, %v2886
        %v2888 = vrot.slane %v2880, %v2887
        %v2890 = vunpack.c.l.s4 1983009808
        %v2891 = vunpack.c.0.s8 %v2890
        %v2892 = vlaneseq
        %v2893 = vshrl.u32 %v2892, 7
        %v2894 = vsub.s32 %v2891, %v2893
        %v2895 = vrot.slane %v2881, %v2894
        %v2896 = vcombine.low %v2703, %v2711
        %v2897 = vcombine.high %v2703, %v2711
        %v2899 = vunpack.c.l.s4 1983009808
        %v2900 = vunpack.c.0.s8 %v2899
        %v2901 = vlaneseq
        %v2902 = vshrl.u32 %v2901, 7
        %v2903 = vsub.s32 %v2900, %v2902
        %v2904 = vrot.slane %v2896, %v2903
        %v2906 = vunpack.c.l.s4 1983009808
        %v2907 = vunpack.c.0.s8 %v2906
        %v2908 = vlaneseq
        %v2909 = vshrl.u32 %v2908, 7
        %v2910 = vsub.s32 %v2907, %v2909
        %v2911 = vrot.slane %v2897, %v2910
        %v2912 = vcombine.low %v2715, %v2723
        %v2913 = vcombine.high %v2715, %v2723
        %v2915 = vunpack.c.l.s4 1983009808
        %v2916 = vunpack.c.0.s8 %v2915
        %v2917 = vlaneseq
        %v2918 = vshrl.u32 %v2917, 7
        %v2919 = vsub.s32 %v2916, %v2918
        %v2920 = vrot.slane %v2912, %v2919
        %v2922 = vunpack.c.l.s4 1983009808
        %v2923 = vunpack.c.0.s8 %v2922
        %v2924 = vlaneseq
        %v2925 = vshrl.u32 %v2924, 7
        %v2926 = vsub.s32 %v2923, %v2925
        %v2927 = vrot.slane %v2913, %v2926
        %v2928 = vcombine.low %v2719, %v2727
        %v2929 = vcombine.high %v2719, %v2727
        %v2931 = vunpack.c.l.s4 1983009808
        %v2932 = vunpack.c.0.s8 %v2931
        %v2933 = vlaneseq
        %v2934 = vshrl.u32 %v2933, 7
        %v2935 = vsub.s32 %v2932, %v2934
        %v2936 = vrot.slane %v2928, %v2935
        %v2938 = vunpack.c.l.s4 1983009808
        %v2939 = vunpack.c.0.s8 %v2938
        %v2940 = vlaneseq
        %v2941 = vshrl.u32 %v2940, 7
        %v2942 = vsub.s32 %v2939, %v2941
        %v2943 = vrot.slane %v2929, %v2942
        %v2944 = vcombine.low %v2888, %v2904
        %v2945 = vcombine.high %v2888, %v2904
        %v2947 = vunpack.c.l.s4 1934713408
        %v2948 = vunpack.c.0.s8 %v2947
        %v2949 = vlaneseq
        %v2950 = vshrl.u32 %v2949, 7
        %v2951 = vsub.s32 %v2948, %v2950
        %v2952 = vrot.slane %v2944, %v2951
        %v2954 = vunpack.c.l.s4 1934713408
        %v2955 = vunpack.c.0.s8 %v2954
        %v2956 = vlaneseq
        %v2957 = vshrl.u32 %v2956, 7
        %v2958 = vsub.s32 %v2955, %v2957
        %v2959 = vrot.slane %v2945, %v2958
        %v2960 = vcombine.low %v2895, %v2911
        %v2961 = vcombine.high %v2895, %v2911
        %v2963 = vunpack.c.l.s4 1934713408
        %v2964 = vunpack.c.0.s8 %v2963
        %v2965 = vlaneseq
        %v2966 = vshrl.u32 %v2965, 7
        %v2967 = vsub.s32 %v2964, %v2966
        %v2968 = vrot.slane %v2960, %v2967
        %v2970 = vunpack.c.l.s4 1934713408
        %v2971 = vunpack.c.0.s8 %v2970
        %v2972 = vlaneseq
        %v2973 = vshrl.u32 %v2972, 7
        %v2974 = vsub.s32 %v2971, %v2973
        %v2975 = vrot.slane %v2961, %v2974
        %v2976 = vcombine.low %v2920, %v2936
        %v2977 = vcombine.high %v2920, %v2936
        %v2979 = vunpack.c.l.s4 1934713408
        %v2980 = vunpack.c.0.s8 %v2979
        %v2981 = vlaneseq
        %v2982 = vshrl.u32 %v2981, 7
        %v2983 = vsub.s32 %v2980, %v2982
        %v2984 = vrot.slane %v2976, %v2983
        %v2986 = vunpack.c.l.s4 1934713408
        %v2987 = vunpack.c.0.s8 %v2986
        %v2988 = vlaneseq
        %v2989 = vshrl.u32 %v2988, 7
        %v2990 = vsub.s32 %v2987, %v2989
        %v2991 = vrot.slane %v2977, %v2990
        %v2992 = vcombine.low %v2927, %v2943
        %v2993 = vcombine.high %v2927, %v2943
        %v2995 = vunpack.c.l.s4 1934713408
        %v2996 = vunpack.c.0.s8 %v2995
        %v2997 = vlaneseq
        %v2998 = vshrl.u32 %v2997, 7
        %v2999 = vsub.s32 %v2996, %v2998
        %v3000 = vrot.slane %v2992, %v2999
        %v3002 = vunpack.c.l.s4 1934713408
        %v3003 = vunpack.c.0.s8 %v3002
        %v3004 = vlaneseq
        %v3005 = vshrl.u32 %v3004, 7
        %v3006 = vsub.s32 %v3003, %v3005
        %v3007 = vrot.slane %v2993, %v3006
        %v3008 = vcombine.low %v2952, %v2984
        %v3009 = vcombine.high %v2952, %v2984
        %v3010 = vcombine.low %v2959, %v2991
        %v3011 = vcombine.high %v2959, %v2991
        %v3012 = vcombine.low %v2968, %v3000
        %v3013 = vcombine.high %v2968, %v3000
        %v3014 = vcombine.low %v2975, %v3007
        %v3015 = vcombine.high %v2975, %v3007
        %3017 = vrot.lane.b32.xlu0 %v2873, 16
        %v3018 = vpop.permute.xlu0 %3017
        %3021 = vrot.lane.b32.xlu0 %v2874, 32
        %v3022 = vpop.permute.xlu0 %3021
        %3025 = vrot.lane.b32.xlu0 %v2875, 48
        %v3026 = vpop.permute.xlu0 %3025
        %3029 = vrot.lane.b32.xlu0 %v2876, 64
        %v3030 = vpop.permute.xlu0 %3029
        %3033 = vrot.lane.b32.xlu0 %v2877, 80
        %v3034 = vpop.permute.xlu0 %3033
        %3037 = vrot.lane.b32.xlu0 %v2878, 96
        %v3038 = vpop.permute.xlu0 %3037
        %3041 = vrot.lane.b32.xlu0 %v2879, 112
        %v3042 = vpop.permute.xlu0 %3041
        %3045 = vrot.lane.b32.xlu0 %v3009, 16
        %v3046 = vpop.permute.xlu0 %3045
        %3049 = vrot.lane.b32.xlu0 %v3010, 32
        %v3050 = vpop.permute.xlu0 %3049
        %3053 = vrot.lane.b32.xlu0 %v3011, 48
        %v3054 = vpop.permute.xlu0 %3053
        %3057 = vrot.lane.b32.xlu0 %v3012, 64
        %v3058 = vpop.permute.xlu0 %3057
        %3061 = vrot.lane.b32.xlu0 %v3013, 80
        %v3062 = vpop.permute.xlu0 %3061
        %3065 = vrot.lane.b32.xlu0 %v3014, 96
        %v3066 = vpop.permute.xlu0 %3065
        %3069 = vrot.lane.b32.xlu0 %v3015, 112
        %v3070 = vpop.permute.xlu0 %3069
        %v3072 = vsel %vm1116, %v2872, %v3018
        %v3073 = vsel %vm1118, %v3072, %v3022
        %v3074 = vsel %vm1120, %v3073, %v3026
        %v3075 = vsel %vm476, %v3074, %v3030
        %v3076 = vsel %vm1123, %v3075, %v3034
        %v3077 = vsel %vm1125, %v3076, %v3038
        %v3078 = vsel %vm1127, %v3077, %v3042
        %v3079 = vsel %vm1116, %v3008, %v3046
        %v3080 = vsel %vm1118, %v3079, %v3050
        %v3081 = vsel %vm1120, %v3080, %v3054
        %v3082 = vsel %vm476, %v3081, %v3058
        %v3083 = vsel %vm1123, %v3082, %v3062
        %v3084 = vsel %vm1125, %v3083, %v3066
        %v3085 = vsel %vm1127, %v3084, %v3070
        %v3086 = vld [vmem:[#allocation2 + $0x2] sm:$0xff]
        %v3087 = vld [vmem:[#allocation2 + $0xa] sm:$0xff]
        %v3088 = vld [vmem:[#allocation2 + $0x1a] sm:$0xff]
        %v3089 = vld [vmem:[#allocation2 + $0x22] sm:$0xff]
        %v3090 = vld [vmem:[#allocation2 + $0x32] sm:$0xff]
        %v3091 = vld [vmem:[#allocation2 + $0x3a] sm:$0xff]
        %v3092 = vld [vmem:[#allocation2 + $0x4a] sm:$0xff]
        %v3093 = vld [vmem:[#allocation2 + $0x52] sm:$0xff]
        %v3094 = vld [vmem:[#allocation2 + $0x62] sm:$0xff]
        %v3095 = vld [vmem:[#allocation2 + $0x6a] sm:$0xff]
        %v3096 = vld [vmem:[#allocation2 + $0x7a] sm:$0xff]
        %v3097 = vld [vmem:[#allocation2 + $0x82] sm:$0xff]
        %v3098 = vld [vmem:[#allocation2 + $0x92] sm:$0xff]
        %v3099 = vld [vmem:[#allocation2 + $0x9a] sm:$0xff]
        %v3100 = vld [vmem:[#allocation2 + $0xaa] sm:$0xff]
        %v3101 = vld [vmem:[#allocation2 + $0xb2] sm:$0xff]
        %v3102 = vcombine.low %v3086, %v3090
        %v3103 = vcombine.high %v3086, %v3090
        %v3105 = vunpack.c.l.s4 1983009808
        %v3106 = vunpack.c.0.s8 %v3105
        %v3107 = vlaneseq
        %v3108 = vshrl.u32 %v3107, 7
        %v3109 = vsub.s32 %v3106, %v3108
        %v3110 = vrot.slane %v3102, %v3109
        %v3112 = vunpack.c.l.s4 1983009808
        %v3113 = vunpack.c.0.s8 %v3112
        %v3114 = vlaneseq
        %v3115 = vshrl.u32 %v3114, 7
        %v3116 = vsub.s32 %v3113, %v3115
        %v3117 = vrot.slane %v3103, %v3116
        %v3118 = vcombine.low %v3088, %v3092
        %v3119 = vcombine.high %v3088, %v3092
        %v3121 = vunpack.c.l.s4 1983009808
        %v3122 = vunpack.c.0.s8 %v3121
        %v3123 = vlaneseq
        %v3124 = vshrl.u32 %v3123, 7
        %v3125 = vsub.s32 %v3122, %v3124
        %v3126 = vrot.slane %v3118, %v3125
        %v3128 = vunpack.c.l.s4 1983009808
        %v3129 = vunpack.c.0.s8 %v3128
        %v3130 = vlaneseq
        %v3131 = vshrl.u32 %v3130, 7
        %v3132 = vsub.s32 %v3129, %v3131
        %v3133 = vrot.slane %v3119, %v3132
        %v3134 = vcombine.low %v3094, %v3098
        %v3135 = vcombine.high %v3094, %v3098
        %v3137 = vunpack.c.l.s4 1983009808
        %v3138 = vunpack.c.0.s8 %v3137
        %v3139 = vlaneseq
        %v3140 = vshrl.u32 %v3139, 7
        %v3141 = vsub.s32 %v3138, %v3140
        %v3142 = vrot.slane %v3134, %v3141
        %v3144 = vunpack.c.l.s4 1983009808
        %v3145 = vunpack.c.0.s8 %v3144
        %v3146 = vlaneseq
        %v3147 = vshrl.u32 %v3146, 7
        %v3148 = vsub.s32 %v3145, %v3147
        %v3149 = vrot.slane %v3135, %v3148
        %v3150 = vcombine.low %v3096, %v3100
        %v3151 = vcombine.high %v3096, %v3100
        %v3153 = vunpack.c.l.s4 1983009808
        %v3154 = vunpack.c.0.s8 %v3153
        %v3155 = vlaneseq
        %v3156 = vshrl.u32 %v3155, 7
        %v3157 = vsub.s32 %v3154, %v3156
        %v3158 = vrot.slane %v3150, %v3157
        %v3160 = vunpack.c.l.s4 1983009808
        %v3161 = vunpack.c.0.s8 %v3160
        %v3162 = vlaneseq
        %v3163 = vshrl.u32 %v3162, 7
        %v3164 = vsub.s32 %v3161, %v3163
        %v3165 = vrot.slane %v3151, %v3164
        %v3166 = vcombine.low %v3110, %v3126
        %v3167 = vcombine.high %v3110, %v3126
        %v3169 = vunpack.c.l.s4 1934713408
        %v3170 = vunpack.c.0.s8 %v3169
        %v3171 = vlaneseq
        %v3172 = vshrl.u32 %v3171, 7
        %v3173 = vsub.s32 %v3170, %v3172
        %v3174 = vrot.slane %v3166, %v3173
        %v3176 = vunpack.c.l.s4 1934713408
        %v3177 = vunpack.c.0.s8 %v3176
        %v3178 = vlaneseq
        %v3179 = vshrl.u32 %v3178, 7
        %v3180 = vsub.s32 %v3177, %v3179
        %v3181 = vrot.slane %v3167, %v3180
        %v3182 = vcombine.low %v3117, %v3133
        %v3183 = vcombine.high %v3117, %v3133
        %v3185 = vunpack.c.l.s4 1934713408
        %v3186 = vunpack.c.0.s8 %v3185
        %v3187 = vlaneseq
        %v3188 = vshrl.u32 %v3187, 7
        %v3189 = vsub.s32 %v3186, %v3188
        %v3190 = vrot.slane %v3182, %v3189
        %v3192 = vunpack.c.l.s4 1934713408
        %v3193 = vunpack.c.0.s8 %v3192
        %v3194 = vlaneseq
        %v3195 = vshrl.u32 %v3194, 7
        %v3196 = vsub.s32 %v3193, %v3195
        %v3197 = vrot.slane %v3183, %v3196
        %v3198 = vcombine.low %v3142, %v3158
        %v3199 = vcombine.high %v3142, %v3158
        %v3201 = vunpack.c.l.s4 1934713408
        %v3202 = vunpack.c.0.s8 %v3201
        %v3203 = vlaneseq
        %v3204 = vshrl.u32 %v3203, 7
        %v3205 = vsub.s32 %v3202, %v3204
        %v3206 = vrot.slane %v3198, %v3205
        %v3208 = vunpack.c.l.s4 1934713408
        %v3209 = vunpack.c.0.s8 %v3208
        %v3210 = vlaneseq
        %v3211 = vshrl.u32 %v3210, 7
        %v3212 = vsub.s32 %v3209, %v3211
        %v3213 = vrot.slane %v3199, %v3212
        %v3214 = vcombine.low %v3149, %v3165
        %v3215 = vcombine.high %v3149, %v3165
        %v3217 = vunpack.c.l.s4 1934713408
        %v3218 = vunpack.c.0.s8 %v3217
        %v3219 = vlaneseq
        %v3220 = vshrl.u32 %v3219, 7
        %v3221 = vsub.s32 %v3218, %v3220
        %v3222 = vrot.slane %v3214, %v3221
        %v3224 = vunpack.c.l.s4 1934713408
        %v3225 = vunpack.c.0.s8 %v3224
        %v3226 = vlaneseq
        %v3227 = vshrl.u32 %v3226, 7
        %v3228 = vsub.s32 %v3225, %v3227
        %v3229 = vrot.slane %v3215, %v3228
        %v3230 = vcombine.low %v3174, %v3206
        %v3231 = vcombine.high %v3174, %v3206
        %v3232 = vcombine.low %v3181, %v3213
        %v3233 = vcombine.high %v3181, %v3213
        %v3234 = vcombine.low %v3190, %v3222
        %v3235 = vcombine.high %v3190, %v3222
        %v3236 = vcombine.low %v3197, %v3229
        %v3237 = vcombine.high %v3197, %v3229
        %v3238 = vcombine.low %v3087, %v3091
        %v3239 = vcombine.high %v3087, %v3091
        %v3241 = vunpack.c.l.s4 1983009808
        %v3242 = vunpack.c.0.s8 %v3241
        %v3243 = vlaneseq
        %v3244 = vshrl.u32 %v3243, 7
        %v3245 = vsub.s32 %v3242, %v3244
        %v3246 = vrot.slane %v3238, %v3245
        %v3248 = vunpack.c.l.s4 1983009808
        %v3249 = vunpack.c.0.s8 %v3248
        %v3250 = vlaneseq
        %v3251 = vshrl.u32 %v3250, 7
        %v3252 = vsub.s32 %v3249, %v3251
        %v3253 = vrot.slane %v3239, %v3252
        %v3254 = vcombine.low %v3089, %v3093
        %v3255 = vcombine.high %v3089, %v3093
        %v3257 = vunpack.c.l.s4 1983009808
        %v3258 = vunpack.c.0.s8 %v3257
        %v3259 = vlaneseq
        %v3260 = vshrl.u32 %v3259, 7
        %v3261 = vsub.s32 %v3258, %v3260
        %v3262 = vrot.slane %v3254, %v3261
        %v3264 = vunpack.c.l.s4 1983009808
        %v3265 = vunpack.c.0.s8 %v3264
        %v3266 = vlaneseq
        %v3267 = vshrl.u32 %v3266, 7
        %v3268 = vsub.s32 %v3265, %v3267
        %v3269 = vrot.slane %v3255, %v3268
        %v3270 = vcombine.low %v3095, %v3099
        %v3271 = vcombine.high %v3095, %v3099
        %v3273 = vunpack.c.l.s4 1983009808
        %v3274 = vunpack.c.0.s8 %v3273
        %v3275 = vlaneseq
        %v3276 = vshrl.u32 %v3275, 7
        %v3277 = vsub.s32 %v3274, %v3276
        %v3278 = vrot.slane %v3270, %v3277
        %v3280 = vunpack.c.l.s4 1983009808
        %v3281 = vunpack.c.0.s8 %v3280
        %v3282 = vlaneseq
        %v3283 = vshrl.u32 %v3282, 7
        %v3284 = vsub.s32 %v3281, %v3283
        %v3285 = vrot.slane %v3271, %v3284
        %v3286 = vcombine.low %v3097, %v3101
        %v3287 = vcombine.high %v3097, %v3101
        %v3289 = vunpack.c.l.s4 1983009808
        %v3290 = vunpack.c.0.s8 %v3289
        %v3291 = vlaneseq
        %v3292 = vshrl.u32 %v3291, 7
        %v3293 = vsub.s32 %v3290, %v3292
        %v3294 = vrot.slane %v3286, %v3293
        %v3296 = vunpack.c.l.s4 1983009808
        %v3297 = vunpack.c.0.s8 %v3296
        %v3298 = vlaneseq
        %v3299 = vshrl.u32 %v3298, 7
        %v3300 = vsub.s32 %v3297, %v3299
        %v3301 = vrot.slane %v3287, %v3300
        %v3302 = vcombine.low %v3246, %v3262
        %v3303 = vcombine.high %v3246, %v3262
        %v3305 = vunpack.c.l.s4 1934713408
        %v3306 = vunpack.c.0.s8 %v3305
        %v3307 = vlaneseq
        %v3308 = vshrl.u32 %v3307, 7
        %v3309 = vsub.s32 %v3306, %v3308
        %v3310 = vrot.slane %v3302, %v3309
        %v3312 = vunpack.c.l.s4 1934713408
        %v3313 = vunpack.c.0.s8 %v3312
        %v3314 = vlaneseq
        %v3315 = vshrl.u32 %v3314, 7
        %v3316 = vsub.s32 %v3313, %v3315
        %v3317 = vrot.slane %v3303, %v3316
        %v3318 = vcombine.low %v3253, %v3269
        %v3319 = vcombine.high %v3253, %v3269
        %v3321 = vunpack.c.l.s4 1934713408
        %v3322 = vunpack.c.0.s8 %v3321
        %v3323 = vlaneseq
        %v3324 = vshrl.u32 %v3323, 7
        %v3325 = vsub.s32 %v3322, %v3324
        %v3326 = vrot.slane %v3318, %v3325
        %v3328 = vunpack.c.l.s4 1934713408
        %v3329 = vunpack.c.0.s8 %v3328
        %v3330 = vlaneseq
        %v3331 = vshrl.u32 %v3330, 7
        %v3332 = vsub.s32 %v3329, %v3331
        %v3333 = vrot.slane %v3319, %v3332
        %v3334 = vcombine.low %v3278, %v3294
        %v3335 = vcombine.high %v3278, %v3294
        %v3337 = vunpack.c.l.s4 1934713408
        %v3338 = vunpack.c.0.s8 %v3337
        %v3339 = vlaneseq
        %v3340 = vshrl.u32 %v3339, 7
        %v3341 = vsub.s32 %v3338, %v3340
        %v3342 = vrot.slane %v3334, %v3341
        %v3344 = vunpack.c.l.s4 1934713408
        %v3345 = vunpack.c.0.s8 %v3344
        %v3346 = vlaneseq
        %v3347 = vshrl.u32 %v3346, 7
        %v3348 = vsub.s32 %v3345, %v3347
        %v3349 = vrot.slane %v3335, %v3348
        %v3350 = vcombine.low %v3285, %v3301
        %v3351 = vcombine.high %v3285, %v3301
        %v3353 = vunpack.c.l.s4 1934713408
        %v3354 = vunpack.c.0.s8 %v3353
        %v3355 = vlaneseq
        %v3356 = vshrl.u32 %v3355, 7
        %v3357 = vsub.s32 %v3354, %v3356
        %v3358 = vrot.slane %v3350, %v3357
        %v3360 = vunpack.c.l.s4 1934713408
        %v3361 = vunpack.c.0.s8 %v3360
        %v3362 = vlaneseq
        %v3363 = vshrl.u32 %v3362, 7
        %v3364 = vsub.s32 %v3361, %v3363
        %v3365 = vrot.slane %v3351, %v3364
        %v3366 = vcombine.low %v3310, %v3342
        %v3367 = vcombine.high %v3310, %v3342
        %v3368 = vcombine.low %v3317, %v3349
        %v3369 = vcombine.high %v3317, %v3349
        %v3370 = vcombine.low %v3326, %v3358
        %v3371 = vcombine.high %v3326, %v3358
        %v3372 = vcombine.low %v3333, %v3365
        %v3373 = vcombine.high %v3333, %v3365
        %3375 = vrot.lane.b32.xlu0 %v3231, 16
        %v3376 = vpop.permute.xlu0 %3375
        %3379 = vrot.lane.b32.xlu0 %v3232, 32
        %v3380 = vpop.permute.xlu0 %3379
        %3383 = vrot.lane.b32.xlu0 %v3233, 48
        %v3384 = vpop.permute.xlu0 %3383
        %3387 = vrot.lane.b32.xlu0 %v3234, 64
        %v3388 = vpop.permute.xlu0 %3387
        %3391 = vrot.lane.b32.xlu0 %v3235, 80
        %v3392 = vpop.permute.xlu0 %3391
        %3395 = vrot.lane.b32.xlu0 %v3236, 96
        %v3396 = vpop.permute.xlu0 %3395
        %3399 = vrot.lane.b32.xlu0 %v3237, 112
        %v3400 = vpop.permute.xlu0 %3399
        %3403 = vrot.lane.b32.xlu0 %v3367, 16
        %v3404 = vpop.permute.xlu0 %3403
        %3407 = vrot.lane.b32.xlu0 %v3368, 32
        %v3408 = vpop.permute.xlu0 %3407
        %3411 = vrot.lane.b32.xlu0 %v3369, 48
        %v3412 = vpop.permute.xlu0 %3411
        %3415 = vrot.lane.b32.xlu0 %v3370, 64
        %v3416 = vpop.permute.xlu0 %3415
        %3419 = vrot.lane.b32.xlu0 %v3371, 80
        %v3420 = vpop.permute.xlu0 %3419
        %3423 = vrot.lane.b32.xlu0 %v3372, 96
        %v3424 = vpop.permute.xlu0 %3423
        %3427 = vrot.lane.b32.xlu0 %v3373, 112
        %v3428 = vpop.permute.xlu0 %3427
        %v3430 = vsel %vm1116, %v3230, %v3376
        %v3431 = vsel %vm1118, %v3430, %v3380
        %v3432 = vsel %vm1120, %v3431, %v3384
        %v3433 = vsel %vm476, %v3432, %v3388
        %v3434 = vsel %vm1123, %v3433, %v3392
        %v3435 = vsel %vm1125, %v3434, %v3396
        %v3436 = vsel %vm1127, %v3435, %v3400
        %v3437 = vsel %vm1116, %v3366, %v3404
        %v3438 = vsel %vm1118, %v3437, %v3408
        %v3439 = vsel %vm1120, %v3438, %v3412
        %v3440 = vsel %vm476, %v3439, %v3416
        %v3441 = vsel %vm1123, %v3440, %v3420
        %v3442 = vsel %vm1125, %v3441, %v3424
        %v3443 = vsel %vm1127, %v3442, %v3428
        %3460 = vrot.lane.b32.xlu0 %v3086, 127
        %v3461 = vpop.permute.xlu0 %3460
        %3462 = vrot.lane.b32.xlu0 %v3087, 127
        %v3463 = vpop.permute.xlu0 %3462
        %3464 = vrot.lane.b32.xlu0 %v3088, 127
        %v3465 = vpop.permute.xlu0 %3464
        %3466 = vrot.lane.b32.xlu0 %v3089, 127
        %v3467 = vpop.permute.xlu0 %3466
        %3468 = vrot.lane.b32.xlu0 %v3090, 127
        %v3469 = vpop.permute.xlu0 %3468
        %3470 = vrot.lane.b32.xlu0 %v3091, 127
        %v3471 = vpop.permute.xlu0 %3470
        %3472 = vrot.lane.b32.xlu0 %v3092, 127
        %v3473 = vpop.permute.xlu0 %3472
        %3474 = vrot.lane.b32.xlu0 %v3093, 127
        %v3475 = vpop.permute.xlu0 %3474
        %3476 = vrot.lane.b32.xlu0 %v3094, 127
        %v3477 = vpop.permute.xlu0 %3476
        %3478 = vrot.lane.b32.xlu0 %v3095, 127
        %v3479 = vpop.permute.xlu0 %3478
        %3480 = vrot.lane.b32.xlu0 %v3096, 127
        %v3481 = vpop.permute.xlu0 %3480
        %3482 = vrot.lane.b32.xlu0 %v3097, 127
        %v3483 = vpop.permute.xlu0 %3482
        %3484 = vrot.lane.b32.xlu0 %v3098, 127
        %v3485 = vpop.permute.xlu0 %3484
        %3486 = vrot.lane.b32.xlu0 %v3099, 127
        %v3487 = vpop.permute.xlu0 %3486
        %3488 = vrot.lane.b32.xlu0 %v3100, 127
        %v3489 = vpop.permute.xlu0 %3488
        %3490 = vrot.lane.b32.xlu0 %v3101, 127
        %v3491 = vpop.permute.xlu0 %3490
        %v3508 = vcombine.low %v3461, %v3469
        %v3509 = vcombine.high %v3461, %v3469
        %v3511 = vunpack.c.l.s4 1983009808
        %v3512 = vunpack.c.0.s8 %v3511
        %v3513 = vlaneseq
        %v3514 = vshrl.u32 %v3513, 7
        %v3515 = vsub.s32 %v3512, %v3514
        %v3516 = vrot.slane %v3508, %v3515
        %v3518 = vunpack.c.l.s4 1983009808
        %v3519 = vunpack.c.0.s8 %v3518
        %v3520 = vlaneseq
        %v3521 = vshrl.u32 %v3520, 7
        %v3522 = vsub.s32 %v3519, %v3521
        %v3523 = vrot.slane %v3509, %v3522
        %v3524 = vcombine.low %v3465, %v3473
        %v3525 = vcombine.high %v3465, %v3473
        %v3527 = vunpack.c.l.s4 1983009808
        %v3528 = vunpack.c.0.s8 %v3527
        %v3529 = vlaneseq
        %v3530 = vshrl.u32 %v3529, 7
        %v3531 = vsub.s32 %v3528, %v3530
        %v3532 = vrot.slane %v3524, %v3531
        %v3534 = vunpack.c.l.s4 1983009808
        %v3535 = vunpack.c.0.s8 %v3534
        %v3536 = vlaneseq
        %v3537 = vshrl.u32 %v3536, 7
        %v3538 = vsub.s32 %v3535, %v3537
        %v3539 = vrot.slane %v3525, %v3538
        %v3540 = vcombine.low %v3477, %v3485
        %v3541 = vcombine.high %v3477, %v3485
        %v3543 = vunpack.c.l.s4 1983009808
        %v3544 = vunpack.c.0.s8 %v3543
        %v3545 = vlaneseq
        %v3546 = vshrl.u32 %v3545, 7
        %v3547 = vsub.s32 %v3544, %v3546
        %v3548 = vrot.slane %v3540, %v3547
        %v3550 = vunpack.c.l.s4 1983009808
        %v3551 = vunpack.c.0.s8 %v3550
        %v3552 = vlaneseq
        %v3553 = vshrl.u32 %v3552, 7
        %v3554 = vsub.s32 %v3551, %v3553
        %v3555 = vrot.slane %v3541, %v3554
        %v3556 = vcombine.low %v3481, %v3489
        %v3557 = vcombine.high %v3481, %v3489
        %v3559 = vunpack.c.l.s4 1983009808
        %v3560 = vunpack.c.0.s8 %v3559
        %v3561 = vlaneseq
        %v3562 = vshrl.u32 %v3561, 7
        %v3563 = vsub.s32 %v3560, %v3562
        %v3564 = vrot.slane %v3556, %v3563
        %v3566 = vunpack.c.l.s4 1983009808
        %v3567 = vunpack.c.0.s8 %v3566
        %v3568 = vlaneseq
        %v3569 = vshrl.u32 %v3568, 7
        %v3570 = vsub.s32 %v3567, %v3569
        %v3571 = vrot.slane %v3557, %v3570
        %v3572 = vcombine.low %v3516, %v3532
        %v3573 = vcombine.high %v3516, %v3532
        %v3575 = vunpack.c.l.s4 1934713408
        %v3576 = vunpack.c.0.s8 %v3575
        %v3577 = vlaneseq
        %v3578 = vshrl.u32 %v3577, 7
        %v3579 = vsub.s32 %v3576, %v3578
        %v3580 = vrot.slane %v3572, %v3579
        %v3582 = vunpack.c.l.s4 1934713408
        %v3583 = vunpack.c.0.s8 %v3582
        %v3584 = vlaneseq
        %v3585 = vshrl.u32 %v3584, 7
        %v3586 = vsub.s32 %v3583, %v3585
        %v3587 = vrot.slane %v3573, %v3586
        %v3588 = vcombine.low %v3523, %v3539
        %v3589 = vcombine.high %v3523, %v3539
        %v3591 = vunpack.c.l.s4 1934713408
        %v3592 = vunpack.c.0.s8 %v3591
        %v3593 = vlaneseq
        %v3594 = vshrl.u32 %v3593, 7
        %v3595 = vsub.s32 %v3592, %v3594
        %v3596 = vrot.slane %v3588, %v3595
        %v3598 = vunpack.c.l.s4 1934713408
        %v3599 = vunpack.c.0.s8 %v3598
        %v3600 = vlaneseq
        %v3601 = vshrl.u32 %v3600, 7
        %v3602 = vsub.s32 %v3599, %v3601
        %v3603 = vrot.slane %v3589, %v3602
        %v3604 = vcombine.low %v3548, %v3564
        %v3605 = vcombine.high %v3548, %v3564
        %v3607 = vunpack.c.l.s4 1934713408
        %v3608 = vunpack.c.0.s8 %v3607
        %v3609 = vlaneseq
        %v3610 = vshrl.u32 %v3609, 7
        %v3611 = vsub.s32 %v3608, %v3610
        %v3612 = vrot.slane %v3604, %v3611
        %v3614 = vunpack.c.l.s4 1934713408
        %v3615 = vunpack.c.0.s8 %v3614
        %v3616 = vlaneseq
        %v3617 = vshrl.u32 %v3616, 7
        %v3618 = vsub.s32 %v3615, %v3617
        %v3619 = vrot.slane %v3605, %v3618
        %v3620 = vcombine.low %v3555, %v3571
        %v3621 = vcombine.high %v3555, %v3571
        %v3623 = vunpack.c.l.s4 1934713408
        %v3624 = vunpack.c.0.s8 %v3623
        %v3625 = vlaneseq
        %v3626 = vshrl.u32 %v3625, 7
        %v3627 = vsub.s32 %v3624, %v3626
        %v3628 = vrot.slane %v3620, %v3627
        %v3630 = vunpack.c.l.s4 1934713408
        %v3631 = vunpack.c.0.s8 %v3630
        %v3632 = vlaneseq
        %v3633 = vshrl.u32 %v3632, 7
        %v3634 = vsub.s32 %v3631, %v3633
        %v3635 = vrot.slane %v3621, %v3634
        %v3636 = vcombine.low %v3580, %v3612
        %v3637 = vcombine.high %v3580, %v3612
        %v3638 = vcombine.low %v3587, %v3619
        %v3639 = vcombine.high %v3587, %v3619
        %v3640 = vcombine.low %v3596, %v3628
        %v3641 = vcombine.high %v3596, %v3628
        %v3642 = vcombine.low %v3603, %v3635
        %v3643 = vcombine.high %v3603, %v3635
        %v3644 = vcombine.low %v3463, %v3471
        %v3645 = vcombine.high %v3463, %v3471
        %v3647 = vunpack.c.l.s4 1983009808
        %v3648 = vunpack.c.0.s8 %v3647
        %v3649 = vlaneseq
        %v3650 = vshrl.u32 %v3649, 7
        %v3651 = vsub.s32 %v3648, %v3650
        %v3652 = vrot.slane %v3644, %v3651
        %v3654 = vunpack.c.l.s4 1983009808
        %v3655 = vunpack.c.0.s8 %v3654
        %v3656 = vlaneseq
        %v3657 = vshrl.u32 %v3656, 7
        %v3658 = vsub.s32 %v3655, %v3657
        %v3659 = vrot.slane %v3645, %v3658
        %v3660 = vcombine.low %v3467, %v3475
        %v3661 = vcombine.high %v3467, %v3475
        %v3663 = vunpack.c.l.s4 1983009808
        %v3664 = vunpack.c.0.s8 %v3663
        %v3665 = vlaneseq
        %v3666 = vshrl.u32 %v3665, 7
        %v3667 = vsub.s32 %v3664, %v3666
        %v3668 = vrot.slane %v3660, %v3667
        %v3670 = vunpack.c.l.s4 1983009808
        %v3671 = vunpack.c.0.s8 %v3670
        %v3672 = vlaneseq
        %v3673 = vshrl.u32 %v3672, 7
        %v3674 = vsub.s32 %v3671, %v3673
        %v3675 = vrot.slane %v3661, %v3674
        %v3676 = vcombine.low %v3479, %v3487
        %v3677 = vcombine.high %v3479, %v3487
        %v3679 = vunpack.c.l.s4 1983009808
        %v3680 = vunpack.c.0.s8 %v3679
        %v3681 = vlaneseq
        %v3682 = vshrl.u32 %v3681, 7
        %v3683 = vsub.s32 %v3680, %v3682
        %v3684 = vrot.slane %v3676, %v3683
        %v3686 = vunpack.c.l.s4 1983009808
        %v3687 = vunpack.c.0.s8 %v3686
        %v3688 = vlaneseq
        %v3689 = vshrl.u32 %v3688, 7
        %v3690 = vsub.s32 %v3687, %v3689
        %v3691 = vrot.slane %v3677, %v3690
        %v3692 = vcombine.low %v3483, %v3491
        %v3693 = vcombine.high %v3483, %v3491
        %v3695 = vunpack.c.l.s4 1983009808
        %v3696 = vunpack.c.0.s8 %v3695
        %v3697 = vlaneseq
        %v3698 = vshrl.u32 %v3697, 7
        %v3699 = vsub.s32 %v3696, %v3698
        %v3700 = vrot.slane %v3692, %v3699
        %v3702 = vunpack.c.l.s4 1983009808
        %v3703 = vunpack.c.0.s8 %v3702
        %v3704 = vlaneseq
        %v3705 = vshrl.u32 %v3704, 7
        %v3706 = vsub.s32 %v3703, %v3705
        %v3707 = vrot.slane %v3693, %v3706
        %v3708 = vcombine.low %v3652, %v3668
        %v3709 = vcombine.high %v3652, %v3668
        %v3711 = vunpack.c.l.s4 1934713408
        %v3712 = vunpack.c.0.s8 %v3711
        %v3713 = vlaneseq
        %v3714 = vshrl.u32 %v3713, 7
        %v3715 = vsub.s32 %v3712, %v3714
        %v3716 = vrot.slane %v3708, %v3715
        %v3718 = vunpack.c.l.s4 1934713408
        %v3719 = vunpack.c.0.s8 %v3718
        %v3720 = vlaneseq
        %v3721 = vshrl.u32 %v3720, 7
        %v3722 = vsub.s32 %v3719, %v3721
        %v3723 = vrot.slane %v3709, %v3722
        %v3724 = vcombine.low %v3659, %v3675
        %v3725 = vcombine.high %v3659, %v3675
        %v3727 = vunpack.c.l.s4 1934713408
        %v3728 = vunpack.c.0.s8 %v3727
        %v3729 = vlaneseq
        %v3730 = vshrl.u32 %v3729, 7
        %v3731 = vsub.s32 %v3728, %v3730
        %v3732 = vrot.slane %v3724, %v3731
        %v3734 = vunpack.c.l.s4 1934713408
        %v3735 = vunpack.c.0.s8 %v3734
        %v3736 = vlaneseq
        %v3737 = vshrl.u32 %v3736, 7
        %v3738 = vsub.s32 %v3735, %v3737
        %v3739 = vrot.slane %v3725, %v3738
        %v3740 = vcombine.low %v3684, %v3700
        %v3741 = vcombine.high %v3684, %v3700
        %v3743 = vunpack.c.l.s4 1934713408
        %v3744 = vunpack.c.0.s8 %v3743
        %v3745 = vlaneseq
        %v3746 = vshrl.u32 %v3745, 7
        %v3747 = vsub.s32 %v3744, %v3746
        %v3748 = vrot.slane %v3740, %v3747
        %v3750 = vunpack.c.l.s4 1934713408
        %v3751 = vunpack.c.0.s8 %v3750
        %v3752 = vlaneseq
        %v3753 = vshrl.u32 %v3752, 7
        %v3754 = vsub.s32 %v3751, %v3753
        %v3755 = vrot.slane %v3741, %v3754
        %v3756 = vcombine.low %v3691, %v3707
        %v3757 = vcombine.high %v3691, %v3707
        %v3759 = vunpack.c.l.s4 1934713408
        %v3760 = vunpack.c.0.s8 %v3759
        %v3761 = vlaneseq
        %v3762 = vshrl.u32 %v3761, 7
        %v3763 = vsub.s32 %v3760, %v3762
        %v3764 = vrot.slane %v3756, %v3763
        %v3766 = vunpack.c.l.s4 1934713408
        %v3767 = vunpack.c.0.s8 %v3766
        %v3768 = vlaneseq
        %v3769 = vshrl.u32 %v3768, 7
        %v3770 = vsub.s32 %v3767, %v3769
        %v3771 = vrot.slane %v3757, %v3770
        %v3772 = vcombine.low %v3716, %v3748
        %v3773 = vcombine.high %v3716, %v3748
        %v3774 = vcombine.low %v3723, %v3755
        %v3775 = vcombine.high %v3723, %v3755
        %v3776 = vcombine.low %v3732, %v3764
        %v3777 = vcombine.high %v3732, %v3764
        %v3778 = vcombine.low %v3739, %v3771
        %v3779 = vcombine.high %v3739, %v3771
        %3781 = vrot.lane.b32.xlu0 %v3637, 16
        %v3782 = vpop.permute.xlu0 %3781
        %3785 = vrot.lane.b32.xlu0 %v3638, 32
        %v3786 = vpop.permute.xlu0 %3785
        %3789 = vrot.lane.b32.xlu0 %v3639, 48
        %v3790 = vpop.permute.xlu0 %3789
        %3793 = vrot.lane.b32.xlu0 %v3640, 64
        %v3794 = vpop.permute.xlu0 %3793
        %3797 = vrot.lane.b32.xlu0 %v3641, 80
        %v3798 = vpop.permute.xlu0 %3797
        %3801 = vrot.lane.b32.xlu0 %v3642, 96
        %v3802 = vpop.permute.xlu0 %3801
        %3805 = vrot.lane.b32.xlu0 %v3643, 112
        %v3806 = vpop.permute.xlu0 %3805
        %3809 = vrot.lane.b32.xlu0 %v3773, 16
        %v3810 = vpop.permute.xlu0 %3809
        %3813 = vrot.lane.b32.xlu0 %v3774, 32
        %v3814 = vpop.permute.xlu0 %3813
        %3817 = vrot.lane.b32.xlu0 %v3775, 48
        %v3818 = vpop.permute.xlu0 %3817
        %3821 = vrot.lane.b32.xlu0 %v3776, 64
        %v3822 = vpop.permute.xlu0 %3821
        %3825 = vrot.lane.b32.xlu0 %v3777, 80
        %v3826 = vpop.permute.xlu0 %3825
        %3829 = vrot.lane.b32.xlu0 %v3778, 96
        %v3830 = vpop.permute.xlu0 %3829
        %3833 = vrot.lane.b32.xlu0 %v3779, 112
        %v3834 = vpop.permute.xlu0 %3833
        %v3836 = vsel %vm1116, %v3636, %v3782
        %v3837 = vsel %vm1118, %v3836, %v3786
        %v3838 = vsel %vm1120, %v3837, %v3790
        %v3839 = vsel %vm476, %v3838, %v3794
        %v3840 = vsel %vm1123, %v3839, %v3798
        %v3841 = vsel %vm1125, %v3840, %v3802
        %v3842 = vsel %vm1127, %v3841, %v3806
        %v3843 = vsel %vm1116, %v3772, %v3810
        %v3844 = vsel %vm1118, %v3843, %v3814
        %v3845 = vsel %vm1120, %v3844, %v3818
        %v3846 = vsel %vm476, %v3845, %v3822
        %v3847 = vsel %vm1123, %v3846, %v3826
        %v3848 = vsel %vm1125, %v3847, %v3830
        %v3849 = vsel %vm1127, %v3848, %v3834
        %3850 = vrot.lane.b32.xlu0 %v3086, 126
        %v3851 = vpop.permute.xlu0 %3850
        %3852 = vrot.lane.b32.xlu0 %v3087, 126
        %v3853 = vpop.permute.xlu0 %3852
        %3854 = vrot.lane.b32.xlu0 %v3088, 126
        %v3855 = vpop.permute.xlu0 %3854
        %3856 = vrot.lane.b32.xlu0 %v3089, 126
        %v3857 = vpop.permute.xlu0 %3856
        %3858 = vrot.lane.b32.xlu0 %v3090, 126
        %v3859 = vpop.permute.xlu0 %3858
        %3860 = vrot.lane.b32.xlu0 %v3091, 126
        %v3861 = vpop.permute.xlu0 %3860
        %3862 = vrot.lane.b32.xlu0 %v3092, 126
        %v3863 = vpop.permute.xlu0 %3862
        %3864 = vrot.lane.b32.xlu0 %v3093, 126
        %v3865 = vpop.permute.xlu0 %3864
        %3866 = vrot.lane.b32.xlu0 %v3094, 126
        %v3867 = vpop.permute.xlu0 %3866
        %3868 = vrot.lane.b32.xlu0 %v3095, 126
        %v3869 = vpop.permute.xlu0 %3868
        %3870 = vrot.lane.b32.xlu0 %v3096, 126
        %v3871 = vpop.permute.xlu0 %3870
        %3872 = vrot.lane.b32.xlu0 %v3097, 126
        %v3873 = vpop.permute.xlu0 %3872
        %3874 = vrot.lane.b32.xlu0 %v3098, 126
        %v3875 = vpop.permute.xlu0 %3874
        %3876 = vrot.lane.b32.xlu0 %v3099, 126
        %v3877 = vpop.permute.xlu0 %3876
        %3878 = vrot.lane.b32.xlu0 %v3100, 126
        %v3879 = vpop.permute.xlu0 %3878
        %3880 = vrot.lane.b32.xlu0 %v3101, 126
        %v3881 = vpop.permute.xlu0 %3880
        %v3898 = vcombine.low %v3851, %v3859
        %v3899 = vcombine.high %v3851, %v3859
        %v3901 = vunpack.c.l.s4 1983009808
        %v3902 = vunpack.c.0.s8 %v3901
        %v3903 = vlaneseq
        %v3904 = vshrl.u32 %v3903, 7
        %v3905 = vsub.s32 %v3902, %v3904
        %v3906 = vrot.slane %v3898, %v3905
        %v3908 = vunpack.c.l.s4 1983009808
        %v3909 = vunpack.c.0.s8 %v3908
        %v3910 = vlaneseq
        %v3911 = vshrl.u32 %v3910, 7
        %v3912 = vsub.s32 %v3909, %v3911
        %v3913 = vrot.slane %v3899, %v3912
        %v3914 = vcombine.low %v3855, %v3863
        %v3915 = vcombine.high %v3855, %v3863
        %v3917 = vunpack.c.l.s4 1983009808
        %v3918 = vunpack.c.0.s8 %v3917
        %v3919 = vlaneseq
        %v3920 = vshrl.u32 %v3919, 7
        %v3921 = vsub.s32 %v3918, %v3920
        %v3922 = vrot.slane %v3914, %v3921
        %v3924 = vunpack.c.l.s4 1983009808
        %v3925 = vunpack.c.0.s8 %v3924
        %v3926 = vlaneseq
        %v3927 = vshrl.u32 %v3926, 7
        %v3928 = vsub.s32 %v3925, %v3927
        %v3929 = vrot.slane %v3915, %v3928
        %v3930 = vcombine.low %v3867, %v3875
        %v3931 = vcombine.high %v3867, %v3875
        %v3933 = vunpack.c.l.s4 1983009808
        %v3934 = vunpack.c.0.s8 %v3933
        %v3935 = vlaneseq
        %v3936 = vshrl.u32 %v3935, 7
        %v3937 = vsub.s32 %v3934, %v3936
        %v3938 = vrot.slane %v3930, %v3937
        %v3940 = vunpack.c.l.s4 1983009808
        %v3941 = vunpack.c.0.s8 %v3940
        %v3942 = vlaneseq
        %v3943 = vshrl.u32 %v3942, 7
        %v3944 = vsub.s32 %v3941, %v3943
        %v3945 = vrot.slane %v3931, %v3944
        %v3946 = vcombine.low %v3871, %v3879
        %v3947 = vcombine.high %v3871, %v3879
        %v3949 = vunpack.c.l.s4 1983009808
        %v3950 = vunpack.c.0.s8 %v3949
        %v3951 = vlaneseq
        %v3952 = vshrl.u32 %v3951, 7
        %v3953 = vsub.s32 %v3950, %v3952
        %v3954 = vrot.slane %v3946, %v3953
        %v3956 = vunpack.c.l.s4 1983009808
        %v3957 = vunpack.c.0.s8 %v3956
        %v3958 = vlaneseq
        %v3959 = vshrl.u32 %v3958, 7
        %v3960 = vsub.s32 %v3957, %v3959
        %v3961 = vrot.slane %v3947, %v3960
        %v3962 = vcombine.low %v3906, %v3922
        %v3963 = vcombine.high %v3906, %v3922
        %v3965 = vunpack.c.l.s4 1934713408
        %v3966 = vunpack.c.0.s8 %v3965
        %v3967 = vlaneseq
        %v3968 = vshrl.u32 %v3967, 7
        %v3969 = vsub.s32 %v3966, %v3968
        %v3970 = vrot.slane %v3962, %v3969
        %v3972 = vunpack.c.l.s4 1934713408
        %v3973 = vunpack.c.0.s8 %v3972
        %v3974 = vlaneseq
        %v3975 = vshrl.u32 %v3974, 7
        %v3976 = vsub.s32 %v3973, %v3975
        %v3977 = vrot.slane %v3963, %v3976
        %v3978 = vcombine.low %v3913, %v3929
        %v3979 = vcombine.high %v3913, %v3929
        %v3981 = vunpack.c.l.s4 1934713408
        %v3982 = vunpack.c.0.s8 %v3981
        %v3983 = vlaneseq
        %v3984 = vshrl.u32 %v3983, 7
        %v3985 = vsub.s32 %v3982, %v3984
        %v3986 = vrot.slane %v3978, %v3985
        %v3988 = vunpack.c.l.s4 1934713408
        %v3989 = vunpack.c.0.s8 %v3988
        %v3990 = vlaneseq
        %v3991 = vshrl.u32 %v3990, 7
        %v3992 = vsub.s32 %v3989, %v3991
        %v3993 = vrot.slane %v3979, %v3992
        %v3994 = vcombine.low %v3938, %v3954
        %v3995 = vcombine.high %v3938, %v3954
        %v3997 = vunpack.c.l.s4 1934713408
        %v3998 = vunpack.c.0.s8 %v3997
        %v3999 = vlaneseq
        %v4000 = vshrl.u32 %v3999, 7
        %v4001 = vsub.s32 %v3998, %v4000
        %v4002 = vrot.slane %v3994, %v4001
        %v4004 = vunpack.c.l.s4 1934713408
        %v4005 = vunpack.c.0.s8 %v4004
        %v4006 = vlaneseq
        %v4007 = vshrl.u32 %v4006, 7
        %v4008 = vsub.s32 %v4005, %v4007
        %v4009 = vrot.slane %v3995, %v4008
        %v4010 = vcombine.low %v3945, %v3961
        %v4011 = vcombine.high %v3945, %v3961
        %v4013 = vunpack.c.l.s4 1934713408
        %v4014 = vunpack.c.0.s8 %v4013
        %v4015 = vlaneseq
        %v4016 = vshrl.u32 %v4015, 7
        %v4017 = vsub.s32 %v4014, %v4016
        %v4018 = vrot.slane %v4010, %v4017
        %v4020 = vunpack.c.l.s4 1934713408
        %v4021 = vunpack.c.0.s8 %v4020
        %v4022 = vlaneseq
        %v4023 = vshrl.u32 %v4022, 7
        %v4024 = vsub.s32 %v4021, %v4023
        %v4025 = vrot.slane %v4011, %v4024
        %v4026 = vcombine.low %v3970, %v4002
        %v4027 = vcombine.high %v3970, %v4002
        %v4028 = vcombine.low %v3977, %v4009
        %v4029 = vcombine.high %v3977, %v4009
        %v4030 = vcombine.low %v3986, %v4018
        %v4031 = vcombine.high %v3986, %v4018
        %v4032 = vcombine.low %v3993, %v4025
        %v4033 = vcombine.high %v3993, %v4025
        %v4034 = vcombine.low %v3853, %v3861
        %v4035 = vcombine.high %v3853, %v3861
        %v4037 = vunpack.c.l.s4 1983009808
        %v4038 = vunpack.c.0.s8 %v4037
        %v4039 = vlaneseq
        %v4040 = vshrl.u32 %v4039, 7
        %v4041 = vsub.s32 %v4038, %v4040
        %v4042 = vrot.slane %v4034, %v4041
        %v4044 = vunpack.c.l.s4 1983009808
        %v4045 = vunpack.c.0.s8 %v4044
        %v4046 = vlaneseq
        %v4047 = vshrl.u32 %v4046, 7
        %v4048 = vsub.s32 %v4045, %v4047
        %v4049 = vrot.slane %v4035, %v4048
        %v4050 = vcombine.low %v3857, %v3865
        %v4051 = vcombine.high %v3857, %v3865
        %v4053 = vunpack.c.l.s4 1983009808
        %v4054 = vunpack.c.0.s8 %v4053
        %v4055 = vlaneseq
        %v4056 = vshrl.u32 %v4055, 7
        %v4057 = vsub.s32 %v4054, %v4056
        %v4058 = vrot.slane %v4050, %v4057
        %v4060 = vunpack.c.l.s4 1983009808
        %v4061 = vunpack.c.0.s8 %v4060
        %v4062 = vlaneseq
        %v4063 = vshrl.u32 %v4062, 7
        %v4064 = vsub.s32 %v4061, %v4063
        %v4065 = vrot.slane %v4051, %v4064
        %v4066 = vcombine.low %v3869, %v3877
        %v4067 = vcombine.high %v3869, %v3877
        %v4069 = vunpack.c.l.s4 1983009808
        %v4070 = vunpack.c.0.s8 %v4069
        %v4071 = vlaneseq
        %v4072 = vshrl.u32 %v4071, 7
        %v4073 = vsub.s32 %v4070, %v4072
        %v4074 = vrot.slane %v4066, %v4073
        %v4076 = vunpack.c.l.s4 1983009808
        %v4077 = vunpack.c.0.s8 %v4076
        %v4078 = vlaneseq
        %v4079 = vshrl.u32 %v4078, 7
        %v4080 = vsub.s32 %v4077, %v4079
        %v4081 = vrot.slane %v4067, %v4080
        %v4082 = vcombine.low %v3873, %v3881
        %v4083 = vcombine.high %v3873, %v3881
        %v4085 = vunpack.c.l.s4 1983009808
        %v4086 = vunpack.c.0.s8 %v4085
        %v4087 = vlaneseq
        %v4088 = vshrl.u32 %v4087, 7
        %v4089 = vsub.s32 %v4086, %v4088
        %v4090 = vrot.slane %v4082, %v4089
        %v4092 = vunpack.c.l.s4 1983009808
        %v4093 = vunpack.c.0.s8 %v4092
        %v4094 = vlaneseq
        %v4095 = vshrl.u32 %v4094, 7
        %v4096 = vsub.s32 %v4093, %v4095
        %v4097 = vrot.slane %v4083, %v4096
        %v4098 = vcombine.low %v4042, %v4058
        %v4099 = vcombine.high %v4042, %v4058
        %v4101 = vunpack.c.l.s4 1934713408
        %v4102 = vunpack.c.0.s8 %v4101
        %v4103 = vlaneseq
        %v4104 = vshrl.u32 %v4103, 7
        %v4105 = vsub.s32 %v4102, %v4104
        %v4106 = vrot.slane %v4098, %v4105
        %v4108 = vunpack.c.l.s4 1934713408
        %v4109 = vunpack.c.0.s8 %v4108
        %v4110 = vlaneseq
        %v4111 = vshrl.u32 %v4110, 7
        %v4112 = vsub.s32 %v4109, %v4111
        %v4113 = vrot.slane %v4099, %v4112
        %v4114 = vcombine.low %v4049, %v4065
        %v4115 = vcombine.high %v4049, %v4065
        %v4117 = vunpack.c.l.s4 1934713408
        %v4118 = vunpack.c.0.s8 %v4117
        %v4119 = vlaneseq
        %v4120 = vshrl.u32 %v4119, 7
        %v4121 = vsub.s32 %v4118, %v4120
        %v4122 = vrot.slane %v4114, %v4121
        %v4124 = vunpack.c.l.s4 1934713408
        %v4125 = vunpack.c.0.s8 %v4124
        %v4126 = vlaneseq
        %v4127 = vshrl.u32 %v4126, 7
        %v4128 = vsub.s32 %v4125, %v4127
        %v4129 = vrot.slane %v4115, %v4128
        %v4130 = vcombine.low %v4074, %v4090
        %v4131 = vcombine.high %v4074, %v4090
        %v4133 = vunpack.c.l.s4 1934713408
        %v4134 = vunpack.c.0.s8 %v4133
        %v4135 = vlaneseq
        %v4136 = vshrl.u32 %v4135, 7
        %v4137 = vsub.s32 %v4134, %v4136
        %v4138 = vrot.slane %v4130, %v4137
        %v4140 = vunpack.c.l.s4 1934713408
        %v4141 = vunpack.c.0.s8 %v4140
        %v4142 = vlaneseq
        %v4143 = vshrl.u32 %v4142, 7
        %v4144 = vsub.s32 %v4141, %v4143
        %v4145 = vrot.slane %v4131, %v4144
        %v4146 = vcombine.low %v4081, %v4097
        %v4147 = vcombine.high %v4081, %v4097
        %v4149 = vunpack.c.l.s4 1934713408
        %v4150 = vunpack.c.0.s8 %v4149
        %v4151 = vlaneseq
        %v4152 = vshrl.u32 %v4151, 7
        %v4153 = vsub.s32 %v4150, %v4152
        %v4154 = vrot.slane %v4146, %v4153
        %v4156 = vunpack.c.l.s4 1934713408
        %v4157 = vunpack.c.0.s8 %v4156
        %v4158 = vlaneseq
        %v4159 = vshrl.u32 %v4158, 7
        %v4160 = vsub.s32 %v4157, %v4159
        %v4161 = vrot.slane %v4147, %v4160
        %v4162 = vcombine.low %v4106, %v4138
        %v4163 = vcombine.high %v4106, %v4138
        %v4164 = vcombine.low %v4113, %v4145
        %v4165 = vcombine.high %v4113, %v4145
        %v4166 = vcombine.low %v4122, %v4154
        %v4167 = vcombine.high %v4122, %v4154
        %v4168 = vcombine.low %v4129, %v4161
        %v4169 = vcombine.high %v4129, %v4161
        %4171 = vrot.lane.b32.xlu0 %v4027, 16
        %v4172 = vpop.permute.xlu0 %4171
        %4175 = vrot.lane.b32.xlu0 %v4028, 32
        %v4176 = vpop.permute.xlu0 %4175
        %4179 = vrot.lane.b32.xlu0 %v4029, 48
        %v4180 = vpop.permute.xlu0 %4179
        %4183 = vrot.lane.b32.xlu0 %v4030, 64
        %v4184 = vpop.permute.xlu0 %4183
        %4187 = vrot.lane.b32.xlu0 %v4031, 80
        %v4188 = vpop.permute.xlu0 %4187
        %4191 = vrot.lane.b32.xlu0 %v4032, 96
        %v4192 = vpop.permute.xlu0 %4191
        %4195 = vrot.lane.b32.xlu0 %v4033, 112
        %v4196 = vpop.permute.xlu0 %4195
        %4199 = vrot.lane.b32.xlu0 %v4163, 16
        %v4200 = vpop.permute.xlu0 %4199
        %4203 = vrot.lane.b32.xlu0 %v4164, 32
        %v4204 = vpop.permute.xlu0 %4203
        %4207 = vrot.lane.b32.xlu0 %v4165, 48
        %v4208 = vpop.permute.xlu0 %4207
        %4211 = vrot.lane.b32.xlu0 %v4166, 64
        %v4212 = vpop.permute.xlu0 %4211
        %4215 = vrot.lane.b32.xlu0 %v4167, 80
        %v4216 = vpop.permute.xlu0 %4215
        %4219 = vrot.lane.b32.xlu0 %v4168, 96
        %v4220 = vpop.permute.xlu0 %4219
        %4223 = vrot.lane.b32.xlu0 %v4169, 112
        %v4224 = vpop.permute.xlu0 %4223
        %v4226 = vsel %vm1116, %v4026, %v4172
        %v4227 = vsel %vm1118, %v4226, %v4176
        %v4228 = vsel %vm1120, %v4227, %v4180
        %v4229 = vsel %vm476, %v4228, %v4184
        %v4230 = vsel %vm1123, %v4229, %v4188
        %v4231 = vsel %vm1125, %v4230, %v4192
        %v4232 = vsel %vm1127, %v4231, %v4196
        %v4233 = vsel %vm1116, %v4162, %v4200
        %v4234 = vsel %vm1118, %v4233, %v4204
        %v4235 = vsel %vm1120, %v4234, %v4208
        %v4236 = vsel %vm476, %v4235, %v4212
        %v4237 = vsel %vm1123, %v4236, %v4216
        %v4238 = vsel %vm1125, %v4237, %v4220
        %v4239 = vsel %vm1127, %v4238, %v4224
        %v4240 = vpack.c.bf16 %v1534, %v1128
        %v4241 = vpack.c.bf16 %v1541, %v1135
        %v4242 = vpack.c.bf16 %v2282, %v1924
        %v4243 = vpack.c.bf16 %v2289, %v1931
        %v4244 = vpack.c.bf16 %v3078, %v2688
        %v4245 = vpack.c.bf16 %v3085, %v2695
        %v4246 = vpack.c.bf16 %v3842, %v3436
        %v4247 = vpack.c.bf16 %v3849, %v3443
        %v4248 = vpack.c.bf16 %v4232, %v4232
        %v4249 = vpack.c.bf16 %v4239, %v4239
        %v4250 = vld [vmem:[%s3] sm:$0x3]
        %vm4251 = vcmask 588800
        %v4253 = vsel %vm4251, %v4250, 0
        %vm4255 = vcmask 1043456
        %v4257 = vsel %vm4255, %v4248, 0
        %v4260 = vsel %vm4255, %v4249, 0
        %4262 = vmatprep.subr.bf16.mxu0 %v4241
        %4263 = vmatpush1.bf16.msra.mxu0 %v4240
        %4264 = vmatprep.subr.bf16.mxu0 %v4243
        %4265 = vmatpush1.bf16.msra.mxu0 %v4242
        %4266 = vmatprep.subr.bf16.mxu0 %v4245
        %4267 = vmatpush1.bf16.msra.mxu0 %v4244
        %4268 = vmatprep.subr.bf16.mxu0 %v4247
        %4269 = vmatpush1.bf16.msra.mxu0 %v4246
        %4270 = vmatprep.subr.bf16.mxu0 %v4260
        %4271 = vmatpush1.bf16.msra.mxu0 %v4257
        %4272 = vmatprep.subr.bf16.mxu0 0
        %4273 = vmatpush1.bf16.msra.mxu0 0
        %4274 = vmatprep.subr.bf16.mxu0 0
        %4275 = vmatpush1.bf16.msra.mxu0 0
        %4276 = vmatprep.subr.bf16.mxu0 0
        %4277 = vmatpush1.bf16.msra.mxu0 0
        %4278 = vmatprep.subr.bf16.mxu0 0
        %4279 = vmatpush1.bf16.msra.mxu0 0
        %4280 = vmatprep.subr.bf16.mxu0 0
        %4281 = vmatpush1.bf16.msra.mxu0 0
        %4282 = vmatprep.subr.bf16.mxu0 0
        %4283 = vmatpush1.bf16.msra.mxu0 0
        %4284 = vmatprep.subr.bf16.mxu0 0
        %4285 = vmatpush1.bf16.msra.mxu0 0
        %4286 = vmatprep.subr.bf16.mxu0 0
        %4287 = vmatpush1.bf16.msra.mxu0 0
        %4288 = vmatprep.subr.bf16.mxu0 0
        %4289 = vmatpush1.bf16.msra.mxu0 0
        %4290 = vmatprep.subr.bf16.mxu0 0
        %4291 = vmatpush1.bf16.msra.mxu0 0
        %4292 = vmatprep.subr.bf16.mxu0 0
        %4293 = vmatpush1.bf16.msra.mxu0 0
        %4294 = vmatprep.mubr.bf16.mxu0 0
        %4295 = vmatmul.mubr.bf16.gmra.mrb[0].mxu0 %v4253
        %v4296 = vpop.f32.mrb[0].mxu0
        %v4297 = vadd.f32 0.0, %v4296
        %v4298 = vpop.f32.mrb[0].mxu0
        %v4299 = vadd.f32 0.0, %v4298
        %v4300 = vpop.f32.mrb[0].mxu0
        %v4301 = vpop.f32.mrb[0].mxu0
        %4302 = vdwg.mxu0
        %v4303 = vld [vmem:[%s4] sm:$0xf]
        %4305 = vset.pattern.permute.xlu0 0
        %4306 = vperm.xlu0 %4305, %v4303
        %v4307 = vpop.permute.xlu0 %4306
        %v4309 = vmul.f32 %v4297, %v4307
        %v4310 = vmul.f32 %v4299, %v4307
        %v4311 = vld [vmem:[%s5] sm:$0xf]
        %4313 = vset.pattern.permute.xlu0 0
        %4314 = vperm.xlu0 %4313, %v4311
        %v4315 = vpop.permute.xlu0 %4314
        %v4317 = vadd.f32 %v4309, %v4315
        %v4318 = vadd.f32 %v4310, %v4315
        %v4319 = vmax.f32 %v4317, 0.0
        %v4320 = vmax.f32 %v4318, 0.0
        %4321 = vst.msk [vmem:[#allocation3] sm:$0xff] %vm384, 0.0
        %4322 = vst.msk [vmem:[#allocation3 + $0x8] sm:$0xff] %vm384, 0.0
        %4323 = vst.msk [vmem:[#allocation3 + $0x10] sm:$0x3] %vm387, 0.0
        %4324 = vst.msk [vmem:[#allocation3 + $0x18] sm:$0xff] %vm384, 0.0
        %4325 = vst.msk [vmem:[#allocation3 + $0x20] sm:$0xff] %vm384, 0.0
        %4326 = vst.msk [vmem:[#allocation3 + $0x28] sm:$0x3] %vm387, 0.0
        %4327 = vst.msk [vmem:[#allocation3 + $0x30] sm:$0xff] %vm384, 0.0
        %4328 = vst.msk [vmem:[#allocation3 + $0x38] sm:$0xff] %vm384, 0.0
        %4329 = vst.msk [vmem:[#allocation3 + $0x40] sm:$0x3] %vm387, 0.0
        %4330 = vst.msk [vmem:[#allocation3 + $0x48] sm:$0xff] %vm384, 0.0
        %4331 = vst.msk [vmem:[#allocation3 + $0x50] sm:$0xff] %vm384, 0.0
        %4332 = vst.msk [vmem:[#allocation3 + $0x58] sm:$0x3] %vm387, 0.0
        %4334 = vrot.lane.b32.xlu0 %v4319, 112
        %v4335 = vpop.permute.xlu0 %4334
        %4337 = vrot.lane.b32.xlu0 %v4319, 96
        %v4338 = vpop.permute.xlu0 %4337
        %4340 = vrot.lane.b32.xlu0 %v4319, 80
        %v4341 = vpop.permute.xlu0 %4340
        %4343 = vrot.lane.b32.xlu0 %v4319, 64
        %v4344 = vpop.permute.xlu0 %4343
        %4346 = vrot.lane.b32.xlu0 %v4319, 48
        %v4347 = vpop.permute.xlu0 %4346
        %4349 = vrot.lane.b32.xlu0 %v4319, 32
        %v4350 = vpop.permute.xlu0 %4349
        %4352 = vrot.lane.b32.xlu0 %v4319, 16
        %v4353 = vpop.permute.xlu0 %4352
        %4356 = vrot.lane.b32.xlu0 %v4320, 112
        %v4357 = vpop.permute.xlu0 %4356
        %4359 = vrot.lane.b32.xlu0 %v4320, 96
        %v4360 = vpop.permute.xlu0 %4359
        %4362 = vrot.lane.b32.xlu0 %v4320, 80
        %v4363 = vpop.permute.xlu0 %4362
        %4365 = vrot.lane.b32.xlu0 %v4320, 64
        %v4366 = vpop.permute.xlu0 %4365
        %4368 = vrot.lane.b32.xlu0 %v4320, 48
        %v4369 = vpop.permute.xlu0 %4368
        %4371 = vrot.lane.b32.xlu0 %v4320, 32
        %v4372 = vpop.permute.xlu0 %4371
        %4374 = vrot.lane.b32.xlu0 %v4320, 16
        %v4375 = vpop.permute.xlu0 %4374
        %v4377 = vcombine.low %v4319, %v4338
        %v4379 = vunpack.c.l.s4 1983009808
        %v4380 = vunpack.c.0.s8 %v4379
        %v4381 = vlaneseq
        %v4382 = vshrl.u32 %v4381, 7
        %v4383 = vsub.s32 %v4380, %v4382
        %v4384 = vrot.slane %v4377, %v4383
        %v4385 = vcombine.low %v4335, %v4341
        %v4387 = vunpack.c.l.s4 1983009808
        %v4388 = vunpack.c.0.s8 %v4387
        %v4389 = vlaneseq
        %v4390 = vshrl.u32 %v4389, 7
        %v4391 = vsub.s32 %v4388, %v4390
        %v4392 = vrot.slane %v4385, %v4391
        %v4393 = vcombine.low %v4344, %v4350
        %v4395 = vunpack.c.l.s4 1983009808
        %v4396 = vunpack.c.0.s8 %v4395
        %v4397 = vlaneseq
        %v4398 = vshrl.u32 %v4397, 7
        %v4399 = vsub.s32 %v4396, %v4398
        %v4400 = vrot.slane %v4393, %v4399
        %v4401 = vcombine.low %v4347, %v4353
        %v4403 = vunpack.c.l.s4 1983009808
        %v4404 = vunpack.c.0.s8 %v4403
        %v4405 = vlaneseq
        %v4406 = vshrl.u32 %v4405, 7
        %v4407 = vsub.s32 %v4404, %v4406
        %v4408 = vrot.slane %v4401, %v4407
        %v4409 = vcombine.low %v4384, %v4392
        %v4410 = vcombine.high %v4384, %v4392
        %v4412 = vunpack.c.l.s4 1934713408
        %v4413 = vunpack.c.0.s8 %v4412
        %v4414 = vlaneseq
        %v4415 = vshrl.u32 %v4414, 7
        %v4416 = vsub.s32 %v4413, %v4415
        %v4417 = vrot.slane %v4409, %v4416
        %v4419 = vunpack.c.l.s4 1934713408
        %v4420 = vunpack.c.0.s8 %v4419
        %v4421 = vlaneseq
        %v4422 = vshrl.u32 %v4421, 7
        %v4423 = vsub.s32 %v4420, %v4422
        %v4424 = vrot.slane %v4410, %v4423
        %v4425 = vcombine.low %v4400, %v4408
        %v4426 = vcombine.high %v4400, %v4408
        %v4428 = vunpack.c.l.s4 1934713408
        %v4429 = vunpack.c.0.s8 %v4428
        %v4430 = vlaneseq
        %v4431 = vshrl.u32 %v4430, 7
        %v4432 = vsub.s32 %v4429, %v4431
        %v4433 = vrot.slane %v4425, %v4432
        %v4435 = vunpack.c.l.s4 1934713408
        %v4436 = vunpack.c.0.s8 %v4435
        %v4437 = vlaneseq
        %v4438 = vshrl.u32 %v4437, 7
        %v4439 = vsub.s32 %v4436, %v4438
        %v4440 = vrot.slane %v4426, %v4439
        %v4441 = vcombine.low %v4417, %v4433
        %v4442 = vcombine.high %v4417, %v4433
        %v4443 = vcombine.low %v4424, %v4440
        %v4444 = vcombine.high %v4424, %v4440
        %v4445 = vcombine.low %v4320, %v4360
        %v4447 = vunpack.c.l.s4 1983009808
        %v4448 = vunpack.c.0.s8 %v4447
        %v4449 = vlaneseq
        %v4450 = vshrl.u32 %v4449, 7
        %v4451 = vsub.s32 %v4448, %v4450
        %v4452 = vrot.slane %v4445, %v4451
        %v4453 = vcombine.low %v4357, %v4363
        %v4455 = vunpack.c.l.s4 1983009808
        %v4456 = vunpack.c.0.s8 %v4455
        %v4457 = vlaneseq
        %v4458 = vshrl.u32 %v4457, 7
        %v4459 = vsub.s32 %v4456, %v4458
        %v4460 = vrot.slane %v4453, %v4459
        %v4461 = vcombine.low %v4366, %v4372
        %v4463 = vunpack.c.l.s4 1983009808
        %v4464 = vunpack.c.0.s8 %v4463
        %v4465 = vlaneseq
        %v4466 = vshrl.u32 %v4465, 7
        %v4467 = vsub.s32 %v4464, %v4466
        %v4468 = vrot.slane %v4461, %v4467
        %v4469 = vcombine.low %v4369, %v4375
        %v4471 = vunpack.c.l.s4 1983009808
        %v4472 = vunpack.c.0.s8 %v4471
        %v4473 = vlaneseq
        %v4474 = vshrl.u32 %v4473, 7
        %v4475 = vsub.s32 %v4472, %v4474
        %v4476 = vrot.slane %v4469, %v4475
        %v4477 = vcombine.low %v4452, %v4460
        %v4478 = vcombine.high %v4452, %v4460
        %v4480 = vunpack.c.l.s4 1934713408
        %v4481 = vunpack.c.0.s8 %v4480
        %v4482 = vlaneseq
        %v4483 = vshrl.u32 %v4482, 7
        %v4484 = vsub.s32 %v4481, %v4483
        %v4485 = vrot.slane %v4477, %v4484
        %v4487 = vunpack.c.l.s4 1934713408
        %v4488 = vunpack.c.0.s8 %v4487
        %v4489 = vlaneseq
        %v4490 = vshrl.u32 %v4489, 7
        %v4491 = vsub.s32 %v4488, %v4490
        %v4492 = vrot.slane %v4478, %v4491
        %v4493 = vcombine.low %v4468, %v4476
        %v4494 = vcombine.high %v4468, %v4476
        %v4496 = vunpack.c.l.s4 1934713408
        %v4497 = vunpack.c.0.s8 %v4496
        %v4498 = vlaneseq
        %v4499 = vshrl.u32 %v4498, 7
        %v4500 = vsub.s32 %v4497, %v4499
        %v4501 = vrot.slane %v4493, %v4500
        %v4503 = vunpack.c.l.s4 1934713408
        %v4504 = vunpack.c.0.s8 %v4503
        %v4505 = vlaneseq
        %v4506 = vshrl.u32 %v4505, 7
        %v4507 = vsub.s32 %v4504, %v4506
        %v4508 = vrot.slane %v4494, %v4507
        %v4509 = vcombine.low %v4485, %v4501
        %v4510 = vcombine.high %v4485, %v4501
        %v4511 = vcombine.low %v4492, %v4508
        %v4512 = vcombine.high %v4492, %v4508
        %4521 = vrot.lane.b32.xlu0 %v4441, 1
        %v4522 = vpop.permute.xlu0 %4521
        %4523 = vrot.lane.b32.xlu0 %v4509, 1
        %v4524 = vpop.permute.xlu0 %4523
        %4525 = vrot.lane.b32.xlu0 %v4442, 1
        %v4526 = vpop.permute.xlu0 %4525
        %4527 = vrot.lane.b32.xlu0 %v4510, 1
        %v4528 = vpop.permute.xlu0 %4527
        %4529 = vrot.lane.b32.xlu0 %v4443, 1
        %v4530 = vpop.permute.xlu0 %4529
        %4531 = vrot.lane.b32.xlu0 %v4511, 1
        %v4532 = vpop.permute.xlu0 %4531
        %4533 = vrot.lane.b32.xlu0 %v4444, 1
        %v4534 = vpop.permute.xlu0 %4533
        %4535 = vrot.lane.b32.xlu0 %v4512, 1
        %v4536 = vpop.permute.xlu0 %4535
        %4545 = vst.msk [vmem:[#allocation3 + $0x1] sm:$0xff] %vm450, %v4522
        %4546 = vst.msk [vmem:[#allocation3 + $0x9] sm:$0xff] %vm450, %v4524
        %4547 = vst.msk [vmem:[#allocation3 + $0x19] sm:$0xff] %vm450, %v4526
        %4548 = vst.msk [vmem:[#allocation3 + $0x21] sm:$0xff] %vm450, %v4528
        %4549 = vst.msk [vmem:[#allocation3 + $0x31] sm:$0xff] %vm450, %v4530
        %4550 = vst.msk [vmem:[#allocation3 + $0x39] sm:$0xff] %vm450, %v4532
        %4551 = vst.msk [vmem:[#allocation3 + $0x49] sm:$0xff] %vm450, %v4534
        %4552 = vst.msk [vmem:[#allocation3 + $0x51] sm:$0xff] %vm450, %v4536
        %v4553 = vld [vmem:[#allocation3] sm:$0xff]
        %v4554 = vld [vmem:[#allocation3 + $0x8] sm:$0xff]
        %v4555 = vld [vmem:[#allocation3 + $0x18] sm:$0xff]
        %v4556 = vld [vmem:[#allocation3 + $0x20] sm:$0xff]
        %v4557 = vld [vmem:[#allocation3 + $0x30] sm:$0xff]
        %v4558 = vld [vmem:[#allocation3 + $0x38] sm:$0xff]
        %v4559 = vld [vmem:[#allocation3 + $0x48] sm:$0xff]
        %v4560 = vld [vmem:[#allocation3 + $0x50] sm:$0xff]
        %v4561 = vcombine.low %v4553, %v4557
        %v4562 = vcombine.high %v4553, %v4557
        %v4564 = vunpack.c.l.s4 1983009808
        %v4565 = vunpack.c.0.s8 %v4564
        %v4566 = vlaneseq
        %v4567 = vshrl.u32 %v4566, 7
        %v4568 = vsub.s32 %v4565, %v4567
        %v4569 = vrot.slane %v4561, %v4568
        %v4571 = vunpack.c.l.s4 1983009808
        %v4572 = vunpack.c.0.s8 %v4571
        %v4573 = vlaneseq
        %v4574 = vshrl.u32 %v4573, 7
        %v4575 = vsub.s32 %v4572, %v4574
        %v4576 = vrot.slane %v4562, %v4575
        %v4577 = vcombine.low %v4555, %v4559
        %v4578 = vcombine.high %v4555, %v4559
        %v4580 = vunpack.c.l.s4 1983009808
        %v4581 = vunpack.c.0.s8 %v4580
        %v4582 = vlaneseq
        %v4583 = vshrl.u32 %v4582, 7
        %v4584 = vsub.s32 %v4581, %v4583
        %v4585 = vrot.slane %v4577, %v4584
        %v4587 = vunpack.c.l.s4 1983009808
        %v4588 = vunpack.c.0.s8 %v4587
        %v4589 = vlaneseq
        %v4590 = vshrl.u32 %v4589, 7
        %v4591 = vsub.s32 %v4588, %v4590
        %v4592 = vrot.slane %v4578, %v4591
        %v4593 = vcombine.low %v4569, %v4585
        %v4594 = vcombine.high %v4569, %v4585
        %v4596 = vunpack.c.l.s4 1934713408
        %v4597 = vunpack.c.0.s8 %v4596
        %v4598 = vlaneseq
        %v4599 = vshrl.u32 %v4598, 7
        %v4600 = vsub.s32 %v4597, %v4599
        %v4601 = vrot.slane %v4593, %v4600
        %v4603 = vunpack.c.l.s4 1934713408
        %v4604 = vunpack.c.0.s8 %v4603
        %v4605 = vlaneseq
        %v4606 = vshrl.u32 %v4605, 7
        %v4607 = vsub.s32 %v4604, %v4606
        %v4608 = vrot.slane %v4594, %v4607
        %v4609 = vcombine.low %v4576, %v4592
        %v4610 = vcombine.high %v4576, %v4592
        %v4612 = vunpack.c.l.s4 1934713408
        %v4613 = vunpack.c.0.s8 %v4612
        %v4614 = vlaneseq
        %v4615 = vshrl.u32 %v4614, 7
        %v4616 = vsub.s32 %v4613, %v4615
        %v4617 = vrot.slane %v4609, %v4616
        %v4619 = vunpack.c.l.s4 1934713408
        %v4620 = vunpack.c.0.s8 %v4619
        %v4621 = vlaneseq
        %v4622 = vshrl.u32 %v4621, 7
        %v4623 = vsub.s32 %v4620, %v4622
        %v4624 = vrot.slane %v4610, %v4623
        %v4625 = vcombine.high %v4601, 0.0
        %v4626 = vcombine.high %v4608, 0.0
        %v4627 = vcombine.high %v4617, 0.0
        %v4628 = vcombine.high %v4624, 0.0
        %v4629 = vcombine.low %v4554, %v4558
        %v4630 = vcombine.high %v4554, %v4558
        %v4632 = vunpack.c.l.s4 1983009808
        %v4633 = vunpack.c.0.s8 %v4632
        %v4634 = vlaneseq
        %v4635 = vshrl.u32 %v4634, 7
        %v4636 = vsub.s32 %v4633, %v4635
        %v4637 = vrot.slane %v4629, %v4636
        %v4639 = vunpack.c.l.s4 1983009808
        %v4640 = vunpack.c.0.s8 %v4639
        %v4641 = vlaneseq
        %v4642 = vshrl.u32 %v4641, 7
        %v4643 = vsub.s32 %v4640, %v4642
        %v4644 = vrot.slane %v4630, %v4643
        %v4645 = vcombine.low %v4556, %v4560
        %v4646 = vcombine.high %v4556, %v4560
        %v4648 = vunpack.c.l.s4 1983009808
        %v4649 = vunpack.c.0.s8 %v4648
        %v4650 = vlaneseq
        %v4651 = vshrl.u32 %v4650, 7
        %v4652 = vsub.s32 %v4649, %v4651
        %v4653 = vrot.slane %v4645, %v4652
        %v4655 = vunpack.c.l.s4 1983009808
        %v4656 = vunpack.c.0.s8 %v4655
        %v4657 = vlaneseq
        %v4658 = vshrl.u32 %v4657, 7
        %v4659 = vsub.s32 %v4656, %v4658
        %v4660 = vrot.slane %v4646, %v4659
        %v4661 = vcombine.low %v4637, %v4653
        %v4662 = vcombine.high %v4637, %v4653
        %v4664 = vunpack.c.l.s4 1934713408
        %v4665 = vunpack.c.0.s8 %v4664
        %v4666 = vlaneseq
        %v4667 = vshrl.u32 %v4666, 7
        %v4668 = vsub.s32 %v4665, %v4667
        %v4669 = vrot.slane %v4661, %v4668
        %v4671 = vunpack.c.l.s4 1934713408
        %v4672 = vunpack.c.0.s8 %v4671
        %v4673 = vlaneseq
        %v4674 = vshrl.u32 %v4673, 7
        %v4675 = vsub.s32 %v4672, %v4674
        %v4676 = vrot.slane %v4662, %v4675
        %v4677 = vcombine.low %v4644, %v4660
        %v4678 = vcombine.high %v4644, %v4660
        %v4680 = vunpack.c.l.s4 1934713408
        %v4681 = vunpack.c.0.s8 %v4680
        %v4682 = vlaneseq
        %v4683 = vshrl.u32 %v4682, 7
        %v4684 = vsub.s32 %v4681, %v4683
        %v4685 = vrot.slane %v4677, %v4684
        %v4687 = vunpack.c.l.s4 1934713408
        %v4688 = vunpack.c.0.s8 %v4687
        %v4689 = vlaneseq
        %v4690 = vshrl.u32 %v4689, 7
        %v4691 = vsub.s32 %v4688, %v4690
        %v4692 = vrot.slane %v4678, %v4691
        %v4693 = vcombine.high %v4669, 0.0
        %v4694 = vcombine.high %v4676, 0.0
        %v4695 = vcombine.high %v4685, 0.0
        %v4696 = vcombine.high %v4692, 0.0
        %4698 = vrot.lane.b32.xlu0 %v4625, 16
        %v4699 = vpop.permute.xlu0 %4698
        %4702 = vrot.lane.b32.xlu0 %v4608, 32
        %v4703 = vpop.permute.xlu0 %4702
        %4706 = vrot.lane.b32.xlu0 %v4626, 48
        %v4707 = vpop.permute.xlu0 %4706
        %4710 = vrot.lane.b32.xlu0 %v4617, 64
        %v4711 = vpop.permute.xlu0 %4710
        %4714 = vrot.lane.b32.xlu0 %v4627, 80
        %v4715 = vpop.permute.xlu0 %4714
        %4718 = vrot.lane.b32.xlu0 %v4624, 96
        %v4719 = vpop.permute.xlu0 %4718
        %4722 = vrot.lane.b32.xlu0 %v4628, 112
        %v4723 = vpop.permute.xlu0 %4722
        %4726 = vrot.lane.b32.xlu0 %v4693, 16
        %v4727 = vpop.permute.xlu0 %4726
        %4730 = vrot.lane.b32.xlu0 %v4676, 32
        %v4731 = vpop.permute.xlu0 %4730
        %4734 = vrot.lane.b32.xlu0 %v4694, 48
        %v4735 = vpop.permute.xlu0 %4734
        %4738 = vrot.lane.b32.xlu0 %v4685, 64
        %v4739 = vpop.permute.xlu0 %4738
        %4742 = vrot.lane.b32.xlu0 %v4695, 80
        %v4743 = vpop.permute.xlu0 %4742
        %4746 = vrot.lane.b32.xlu0 %v4692, 96
        %v4747 = vpop.permute.xlu0 %4746
        %4750 = vrot.lane.b32.xlu0 %v4696, 112
        %v4751 = vpop.permute.xlu0 %4750
        %v4753 = vsel %vm1116, %v4601, %v4699
        %v4754 = vsel %vm1118, %v4753, %v4703
        %v4755 = vsel %vm1120, %v4754, %v4707
        %v4756 = vsel %vm476, %v4755, %v4711
        %v4757 = vsel %vm1123, %v4756, %v4715
        %v4758 = vsel %vm1125, %v4757, %v4719
        %v4759 = vsel %vm1127, %v4758, %v4723
        %v4760 = vsel %vm1116, %v4669, %v4727
        %v4761 = vsel %vm1118, %v4760, %v4731
        %v4762 = vsel %vm1120, %v4761, %v4735
        %v4763 = vsel %vm476, %v4762, %v4739
        %v4764 = vsel %vm1123, %v4763, %v4743
        %v4765 = vsel %vm1125, %v4764, %v4747
        %v4766 = vsel %vm1127, %v4765, %v4751
        %4775 = vrot.lane.b32.xlu0 %v4553, 127
        %v4776 = vpop.permute.xlu0 %4775
        %4777 = vrot.lane.b32.xlu0 %v4554, 127
        %v4778 = vpop.permute.xlu0 %4777
        %4779 = vrot.lane.b32.xlu0 %v4555, 127
        %v4780 = vpop.permute.xlu0 %4779
        %4781 = vrot.lane.b32.xlu0 %v4556, 127
        %v4782 = vpop.permute.xlu0 %4781
        %4783 = vrot.lane.b32.xlu0 %v4557, 127
        %v4784 = vpop.permute.xlu0 %4783
        %4785 = vrot.lane.b32.xlu0 %v4558, 127
        %v4786 = vpop.permute.xlu0 %4785
        %4787 = vrot.lane.b32.xlu0 %v4559, 127
        %v4788 = vpop.permute.xlu0 %4787
        %4789 = vrot.lane.b32.xlu0 %v4560, 127
        %v4790 = vpop.permute.xlu0 %4789
        %v4799 = vcombine.low %v4776, %v4784
        %v4800 = vcombine.high %v4776, %v4784
        %v4802 = vunpack.c.l.s4 1983009808
        %v4803 = vunpack.c.0.s8 %v4802
        %v4804 = vlaneseq
        %v4805 = vshrl.u32 %v4804, 7
        %v4806 = vsub.s32 %v4803, %v4805
        %v4807 = vrot.slane %v4799, %v4806
        %v4809 = vunpack.c.l.s4 1983009808
        %v4810 = vunpack.c.0.s8 %v4809
        %v4811 = vlaneseq
        %v4812 = vshrl.u32 %v4811, 7
        %v4813 = vsub.s32 %v4810, %v4812
        %v4814 = vrot.slane %v4800, %v4813
        %v4815 = vcombine.low %v4780, %v4788
        %v4816 = vcombine.high %v4780, %v4788
        %v4818 = vunpack.c.l.s4 1983009808
        %v4819 = vunpack.c.0.s8 %v4818
        %v4820 = vlaneseq
        %v4821 = vshrl.u32 %v4820, 7
        %v4822 = vsub.s32 %v4819, %v4821
        %v4823 = vrot.slane %v4815, %v4822
        %v4825 = vunpack.c.l.s4 1983009808
        %v4826 = vunpack.c.0.s8 %v4825
        %v4827 = vlaneseq
        %v4828 = vshrl.u32 %v4827, 7
        %v4829 = vsub.s32 %v4826, %v4828
        %v4830 = vrot.slane %v4816, %v4829
        %v4831 = vcombine.low %v4807, %v4823
        %v4832 = vcombine.high %v4807, %v4823
        %v4834 = vunpack.c.l.s4 1934713408
        %v4835 = vunpack.c.0.s8 %v4834
        %v4836 = vlaneseq
        %v4837 = vshrl.u32 %v4836, 7
        %v4838 = vsub.s32 %v4835, %v4837
        %v4839 = vrot.slane %v4831, %v4838
        %v4841 = vunpack.c.l.s4 1934713408
        %v4842 = vunpack.c.0.s8 %v4841
        %v4843 = vlaneseq
        %v4844 = vshrl.u32 %v4843, 7
        %v4845 = vsub.s32 %v4842, %v4844
        %v4846 = vrot.slane %v4832, %v4845
        %v4847 = vcombine.low %v4814, %v4830
        %v4848 = vcombine.high %v4814, %v4830
        %v4850 = vunpack.c.l.s4 1934713408
        %v4851 = vunpack.c.0.s8 %v4850
        %v4852 = vlaneseq
        %v4853 = vshrl.u32 %v4852, 7
        %v4854 = vsub.s32 %v4851, %v4853
        %v4855 = vrot.slane %v4847, %v4854
        %v4857 = vunpack.c.l.s4 1934713408
        %v4858 = vunpack.c.0.s8 %v4857
        %v4859 = vlaneseq
        %v4860 = vshrl.u32 %v4859, 7
        %v4861 = vsub.s32 %v4858, %v4860
        %v4862 = vrot.slane %v4848, %v4861
        %v4863 = vcombine.high %v4839, 0.0
        %v4864 = vcombine.high %v4846, 0.0
        %v4865 = vcombine.high %v4855, 0.0
        %v4866 = vcombine.high %v4862, 0.0
        %v4867 = vcombine.low %v4778, %v4786
        %v4868 = vcombine.high %v4778, %v4786
        %v4870 = vunpack.c.l.s4 1983009808
        %v4871 = vunpack.c.0.s8 %v4870
        %v4872 = vlaneseq
        %v4873 = vshrl.u32 %v4872, 7
        %v4874 = vsub.s32 %v4871, %v4873
        %v4875 = vrot.slane %v4867, %v4874
        %v4877 = vunpack.c.l.s4 1983009808
        %v4878 = vunpack.c.0.s8 %v4877
        %v4879 = vlaneseq
        %v4880 = vshrl.u32 %v4879, 7
        %v4881 = vsub.s32 %v4878, %v4880
        %v4882 = vrot.slane %v4868, %v4881
        %v4883 = vcombine.low %v4782, %v4790
        %v4884 = vcombine.high %v4782, %v4790
        %v4886 = vunpack.c.l.s4 1983009808
        %v4887 = vunpack.c.0.s8 %v4886
        %v4888 = vlaneseq
        %v4889 = vshrl.u32 %v4888, 7
        %v4890 = vsub.s32 %v4887, %v4889
        %v4891 = vrot.slane %v4883, %v4890
        %v4893 = vunpack.c.l.s4 1983009808
        %v4894 = vunpack.c.0.s8 %v4893
        %v4895 = vlaneseq
        %v4896 = vshrl.u32 %v4895, 7
        %v4897 = vsub.s32 %v4894, %v4896
        %v4898 = vrot.slane %v4884, %v4897
        %v4899 = vcombine.low %v4875, %v4891
        %v4900 = vcombine.high %v4875, %v4891
        %v4902 = vunpack.c.l.s4 1934713408
        %v4903 = vunpack.c.0.s8 %v4902
        %v4904 = vlaneseq
        %v4905 = vshrl.u32 %v4904, 7
        %v4906 = vsub.s32 %v4903, %v4905
        %v4907 = vrot.slane %v4899, %v4906
        %v4909 = vunpack.c.l.s4 1934713408
        %v4910 = vunpack.c.0.s8 %v4909
        %v4911 = vlaneseq
        %v4912 = vshrl.u32 %v4911, 7
        %v4913 = vsub.s32 %v4910, %v4912
        %v4914 = vrot.slane %v4900, %v4913
        %v4915 = vcombine.low %v4882, %v4898
        %v4916 = vcombine.high %v4882, %v4898
        %v4918 = vunpack.c.l.s4 1934713408
        %v4919 = vunpack.c.0.s8 %v4918
        %v4920 = vlaneseq
        %v4921 = vshrl.u32 %v4920, 7
        %v4922 = vsub.s32 %v4919, %v4921
        %v4923 = vrot.slane %v4915, %v4922
        %v4925 = vunpack.c.l.s4 1934713408
        %v4926 = vunpack.c.0.s8 %v4925
        %v4927 = vlaneseq
        %v4928 = vshrl.u32 %v4927, 7
        %v4929 = vsub.s32 %v4926, %v4928
        %v4930 = vrot.slane %v4916, %v4929
        %v4931 = vcombine.high %v4907, 0.0
        %v4932 = vcombine.high %v4914, 0.0
        %v4933 = vcombine.high %v4923, 0.0
        %v4934 = vcombine.high %v4930, 0.0
        %4936 = vrot.lane.b32.xlu0 %v4863, 16
        %v4937 = vpop.permute.xlu0 %4936
        %4940 = vrot.lane.b32.xlu0 %v4846, 32
        %v4941 = vpop.permute.xlu0 %4940
        %4944 = vrot.lane.b32.xlu0 %v4864, 48
        %v4945 = vpop.permute.xlu0 %4944
        %4948 = vrot.lane.b32.xlu0 %v4855, 64
        %v4949 = vpop.permute.xlu0 %4948
        %4952 = vrot.lane.b32.xlu0 %v4865, 80
        %v4953 = vpop.permute.xlu0 %4952
        %4956 = vrot.lane.b32.xlu0 %v4862, 96
        %v4957 = vpop.permute.xlu0 %4956
        %4960 = vrot.lane.b32.xlu0 %v4866, 112
        %v4961 = vpop.permute.xlu0 %4960
        %4964 = vrot.lane.b32.xlu0 %v4931, 16
        %v4965 = vpop.permute.xlu0 %4964
        %4968 = vrot.lane.b32.xlu0 %v4914, 32
        %v4969 = vpop.permute.xlu0 %4968
        %4972 = vrot.lane.b32.xlu0 %v4932, 48
        %v4973 = vpop.permute.xlu0 %4972
        %4976 = vrot.lane.b32.xlu0 %v4923, 64
        %v4977 = vpop.permute.xlu0 %4976
        %4980 = vrot.lane.b32.xlu0 %v4933, 80
        %v4981 = vpop.permute.xlu0 %4980
        %4984 = vrot.lane.b32.xlu0 %v4930, 96
        %v4985 = vpop.permute.xlu0 %4984
        %4988 = vrot.lane.b32.xlu0 %v4934, 112
        %v4989 = vpop.permute.xlu0 %4988
        %v4991 = vsel %vm1116, %v4839, %v4937
        %v4992 = vsel %vm1118, %v4991, %v4941
        %v4993 = vsel %vm1120, %v4992, %v4945
        %v4994 = vsel %vm476, %v4993, %v4949
        %v4995 = vsel %vm1123, %v4994, %v4953
        %v4996 = vsel %vm1125, %v4995, %v4957
        %v4997 = vsel %vm1127, %v4996, %v4961
        %v4998 = vsel %vm1116, %v4907, %v4965
        %v4999 = vsel %vm1118, %v4998, %v4969
        %v5000 = vsel %vm1120, %v4999, %v4973
        %v5001 = vsel %vm476, %v5000, %v4977
        %v5002 = vsel %vm1123, %v5001, %v4981
        %v5003 = vsel %vm1125, %v5002, %v4985
        %v5004 = vsel %vm1127, %v5003, %v4989
        %5005 = vrot.lane.b32.xlu0 %v4553, 126
        %v5006 = vpop.permute.xlu0 %5005
        %5007 = vrot.lane.b32.xlu0 %v4554, 126
        %v5008 = vpop.permute.xlu0 %5007
        %5009 = vrot.lane.b32.xlu0 %v4555, 126
        %v5010 = vpop.permute.xlu0 %5009
        %5011 = vrot.lane.b32.xlu0 %v4556, 126
        %v5012 = vpop.permute.xlu0 %5011
        %5013 = vrot.lane.b32.xlu0 %v4557, 126
        %v5014 = vpop.permute.xlu0 %5013
        %5015 = vrot.lane.b32.xlu0 %v4558, 126
        %v5016 = vpop.permute.xlu0 %5015
        %5017 = vrot.lane.b32.xlu0 %v4559, 126
        %v5018 = vpop.permute.xlu0 %5017
        %5019 = vrot.lane.b32.xlu0 %v4560, 126
        %v5020 = vpop.permute.xlu0 %5019
        %v5029 = vcombine.low %v5006, %v5014
        %v5030 = vcombine.high %v5006, %v5014
        %v5032 = vunpack.c.l.s4 1983009808
        %v5033 = vunpack.c.0.s8 %v5032
        %v5034 = vlaneseq
        %v5035 = vshrl.u32 %v5034, 7
        %v5036 = vsub.s32 %v5033, %v5035
        %v5037 = vrot.slane %v5029, %v5036
        %v5039 = vunpack.c.l.s4 1983009808
        %v5040 = vunpack.c.0.s8 %v5039
        %v5041 = vlaneseq
        %v5042 = vshrl.u32 %v5041, 7
        %v5043 = vsub.s32 %v5040, %v5042
        %v5044 = vrot.slane %v5030, %v5043
        %v5045 = vcombine.low %v5010, %v5018
        %v5046 = vcombine.high %v5010, %v5018
        %v5048 = vunpack.c.l.s4 1983009808
        %v5049 = vunpack.c.0.s8 %v5048
        %v5050 = vlaneseq
        %v5051 = vshrl.u32 %v5050, 7
        %v5052 = vsub.s32 %v5049, %v5051
        %v5053 = vrot.slane %v5045, %v5052
        %v5055 = vunpack.c.l.s4 1983009808
        %v5056 = vunpack.c.0.s8 %v5055
        %v5057 = vlaneseq
        %v5058 = vshrl.u32 %v5057, 7
        %v5059 = vsub.s32 %v5056, %v5058
        %v5060 = vrot.slane %v5046, %v5059
        %v5061 = vcombine.low %v5037, %v5053
        %v5062 = vcombine.high %v5037, %v5053
        %v5064 = vunpack.c.l.s4 1934713408
        %v5065 = vunpack.c.0.s8 %v5064
        %v5066 = vlaneseq
        %v5067 = vshrl.u32 %v5066, 7
        %v5068 = vsub.s32 %v5065, %v5067
        %v5069 = vrot.slane %v5061, %v5068
        %v5071 = vunpack.c.l.s4 1934713408
        %v5072 = vunpack.c.0.s8 %v5071
        %v5073 = vlaneseq
        %v5074 = vshrl.u32 %v5073, 7
        %v5075 = vsub.s32 %v5072, %v5074
        %v5076 = vrot.slane %v5062, %v5075
        %v5077 = vcombine.low %v5044, %v5060
        %v5078 = vcombine.high %v5044, %v5060
        %v5080 = vunpack.c.l.s4 1934713408
        %v5081 = vunpack.c.0.s8 %v5080
        %v5082 = vlaneseq
        %v5083 = vshrl.u32 %v5082, 7
        %v5084 = vsub.s32 %v5081, %v5083
        %v5085 = vrot.slane %v5077, %v5084
        %v5087 = vunpack.c.l.s4 1934713408
        %v5088 = vunpack.c.0.s8 %v5087
        %v5089 = vlaneseq
        %v5090 = vshrl.u32 %v5089, 7
        %v5091 = vsub.s32 %v5088, %v5090
        %v5092 = vrot.slane %v5078, %v5091
        %v5093 = vcombine.high %v5069, 0.0
        %v5094 = vcombine.high %v5076, 0.0
        %v5095 = vcombine.high %v5085, 0.0
        %v5096 = vcombine.high %v5092, 0.0
        %v5097 = vcombine.low %v5008, %v5016
        %v5098 = vcombine.high %v5008, %v5016
        %v5100 = vunpack.c.l.s4 1983009808
        %v5101 = vunpack.c.0.s8 %v5100
        %v5102 = vlaneseq
        %v5103 = vshrl.u32 %v5102, 7
        %v5104 = vsub.s32 %v5101, %v5103
        %v5105 = vrot.slane %v5097, %v5104
        %v5107 = vunpack.c.l.s4 1983009808
        %v5108 = vunpack.c.0.s8 %v5107
        %v5109 = vlaneseq
        %v5110 = vshrl.u32 %v5109, 7
        %v5111 = vsub.s32 %v5108, %v5110
        %v5112 = vrot.slane %v5098, %v5111
        %v5113 = vcombine.low %v5012, %v5020
        %v5114 = vcombine.high %v5012, %v5020
        %v5116 = vunpack.c.l.s4 1983009808
        %v5117 = vunpack.c.0.s8 %v5116
        %v5118 = vlaneseq
        %v5119 = vshrl.u32 %v5118, 7
        %v5120 = vsub.s32 %v5117, %v5119
        %v5121 = vrot.slane %v5113, %v5120
        %v5123 = vunpack.c.l.s4 1983009808
        %v5124 = vunpack.c.0.s8 %v5123
        %v5125 = vlaneseq
        %v5126 = vshrl.u32 %v5125, 7
        %v5127 = vsub.s32 %v5124, %v5126
        %v5128 = vrot.slane %v5114, %v5127
        %v5129 = vcombine.low %v5105, %v5121
        %v5130 = vcombine.high %v5105, %v5121
        %v5132 = vunpack.c.l.s4 1934713408
        %v5133 = vunpack.c.0.s8 %v5132
        %v5134 = vlaneseq
        %v5135 = vshrl.u32 %v5134, 7
        %v5136 = vsub.s32 %v5133, %v5135
        %v5137 = vrot.slane %v5129, %v5136
        %v5139 = vunpack.c.l.s4 1934713408
        %v5140 = vunpack.c.0.s8 %v5139
        %v5141 = vlaneseq
        %v5142 = vshrl.u32 %v5141, 7
        %v5143 = vsub.s32 %v5140, %v5142
        %v5144 = vrot.slane %v5130, %v5143
        %v5145 = vcombine.low %v5112, %v5128
        %v5146 = vcombine.high %v5112, %v5128
        %v5148 = vunpack.c.l.s4 1934713408
        %v5149 = vunpack.c.0.s8 %v5148
        %v5150 = vlaneseq
        %v5151 = vshrl.u32 %v5150, 7
        %v5152 = vsub.s32 %v5149, %v5151
        %v5153 = vrot.slane %v5145, %v5152
        %v5155 = vunpack.c.l.s4 1934713408
        %v5156 = vunpack.c.0.s8 %v5155
        %v5157 = vlaneseq
        %v5158 = vshrl.u32 %v5157, 7
        %v5159 = vsub.s32 %v5156, %v5158
        %v5160 = vrot.slane %v5146, %v5159
        %v5161 = vcombine.high %v5137, 0.0
        %v5162 = vcombine.high %v5144, 0.0
        %v5163 = vcombine.high %v5153, 0.0
        %v5164 = vcombine.high %v5160, 0.0
        %5166 = vrot.lane.b32.xlu0 %v5093, 16
        %v5167 = vpop.permute.xlu0 %5166
        %5170 = vrot.lane.b32.xlu0 %v5076, 32
        %v5171 = vpop.permute.xlu0 %5170
        %5174 = vrot.lane.b32.xlu0 %v5094, 48
        %v5175 = vpop.permute.xlu0 %5174
        %5178 = vrot.lane.b32.xlu0 %v5085, 64
        %v5179 = vpop.permute.xlu0 %5178
        %5182 = vrot.lane.b32.xlu0 %v5095, 80
        %v5183 = vpop.permute.xlu0 %5182
        %5186 = vrot.lane.b32.xlu0 %v5092, 96
        %v5187 = vpop.permute.xlu0 %5186
        %5190 = vrot.lane.b32.xlu0 %v5096, 112
        %v5191 = vpop.permute.xlu0 %5190
        %5194 = vrot.lane.b32.xlu0 %v5161, 16
        %v5195 = vpop.permute.xlu0 %5194
        %5198 = vrot.lane.b32.xlu0 %v5144, 32
        %v5199 = vpop.permute.xlu0 %5198
        %5202 = vrot.lane.b32.xlu0 %v5162, 48
        %v5203 = vpop.permute.xlu0 %5202
        %5206 = vrot.lane.b32.xlu0 %v5153, 64
        %v5207 = vpop.permute.xlu0 %5206
        %5210 = vrot.lane.b32.xlu0 %v5163, 80
        %v5211 = vpop.permute.xlu0 %5210
        %5214 = vrot.lane.b32.xlu0 %v5160, 96
        %v5215 = vpop.permute.xlu0 %5214
        %5218 = vrot.lane.b32.xlu0 %v5164, 112
        %v5219 = vpop.permute.xlu0 %5218
        %v5221 = vsel %vm1116, %v5069, %v5167
        %v5222 = vsel %vm1118, %v5221, %v5171
        %v5223 = vsel %vm1120, %v5222, %v5175
        %v5224 = vsel %vm476, %v5223, %v5179
        %v5225 = vsel %vm1123, %v5224, %v5183
        %v5226 = vsel %vm1125, %v5225, %v5187
        %v5227 = vsel %vm1127, %v5226, %v5191
        %v5228 = vsel %vm1116, %v5137, %v5195
        %v5229 = vsel %vm1118, %v5228, %v5199
        %v5230 = vsel %vm1120, %v5229, %v5203
        %v5231 = vsel %vm476, %v5230, %v5207
        %v5232 = vsel %vm1123, %v5231, %v5211
        %v5233 = vsel %vm1125, %v5232, %v5215
        %v5234 = vsel %vm1127, %v5233, %v5219
        %v5235 = vld [vmem:[#allocation3 + $0x1] sm:$0xff]
        %v5236 = vld [vmem:[#allocation3 + $0x9] sm:$0xff]
        %v5237 = vld [vmem:[#allocation3 + $0x19] sm:$0xff]
        %v5238 = vld [vmem:[#allocation3 + $0x21] sm:$0xff]
        %v5239 = vld [vmem:[#allocation3 + $0x31] sm:$0xff]
        %v5240 = vld [vmem:[#allocation3 + $0x39] sm:$0xff]
        %v5241 = vld [vmem:[#allocation3 + $0x49] sm:$0xff]
        %v5242 = vld [vmem:[#allocation3 + $0x51] sm:$0xff]
        %v5243 = vcombine.low %v5235, %v5239
        %v5244 = vcombine.high %v5235, %v5239
        %v5246 = vunpack.c.l.s4 1983009808
        %v5247 = vunpack.c.0.s8 %v5246
        %v5248 = vlaneseq
        %v5249 = vshrl.u32 %v5248, 7
        %v5250 = vsub.s32 %v5247, %v5249
        %v5251 = vrot.slane %v5243, %v5250
        %v5253 = vunpack.c.l.s4 1983009808
        %v5254 = vunpack.c.0.s8 %v5253
        %v5255 = vlaneseq
        %v5256 = vshrl.u32 %v5255, 7
        %v5257 = vsub.s32 %v5254, %v5256
        %v5258 = vrot.slane %v5244, %v5257
        %v5259 = vcombine.low %v5237, %v5241
        %v5260 = vcombine.high %v5237, %v5241
        %v5262 = vunpack.c.l.s4 1983009808
        %v5263 = vunpack.c.0.s8 %v5262
        %v5264 = vlaneseq
        %v5265 = vshrl.u32 %v5264, 7
        %v5266 = vsub.s32 %v5263, %v5265
        %v5267 = vrot.slane %v5259, %v5266
        %v5269 = vunpack.c.l.s4 1983009808
        %v5270 = vunpack.c.0.s8 %v5269
        %v5271 = vlaneseq
        %v5272 = vshrl.u32 %v5271, 7
        %v5273 = vsub.s32 %v5270, %v5272
        %v5274 = vrot.slane %v5260, %v5273
        %v5275 = vcombine.low %v5251, %v5267
        %v5276 = vcombine.high %v5251, %v5267
        %v5278 = vunpack.c.l.s4 1934713408
        %v5279 = vunpack.c.0.s8 %v5278
        %v5280 = vlaneseq
        %v5281 = vshrl.u32 %v5280, 7
        %v5282 = vsub.s32 %v5279, %v5281
        %v5283 = vrot.slane %v5275, %v5282
        %v5285 = vunpack.c.l.s4 1934713408
        %v5286 = vunpack.c.0.s8 %v5285
        %v5287 = vlaneseq
        %v5288 = vshrl.u32 %v5287, 7
        %v5289 = vsub.s32 %v5286, %v5288
        %v5290 = vrot.slane %v5276, %v5289
        %v5291 = vcombine.low %v5258, %v5274
        %v5292 = vcombine.high %v5258, %v5274
        %v5294 = vunpack.c.l.s4 1934713408
        %v5295 = vunpack.c.0.s8 %v5294
        %v5296 = vlaneseq
        %v5297 = vshrl.u32 %v5296, 7
        %v5298 = vsub.s32 %v5295, %v5297
        %v5299 = vrot.slane %v5291, %v5298
        %v5301 = vunpack.c.l.s4 1934713408
        %v5302 = vunpack.c.0.s8 %v5301
        %v5303 = vlaneseq
        %v5304 = vshrl.u32 %v5303, 7
        %v5305 = vsub.s32 %v5302, %v5304
        %v5306 = vrot.slane %v5292, %v5305
        %v5307 = vcombine.high %v5283, 0.0
        %v5308 = vcombine.high %v5290, 0.0
        %v5309 = vcombine.high %v5299, 0.0
        %v5310 = vcombine.high %v5306, 0.0
        %v5311 = vcombine.low %v5236, %v5240
        %v5312 = vcombine.high %v5236, %v5240
        %v5314 = vunpack.c.l.s4 1983009808
        %v5315 = vunpack.c.0.s8 %v5314
        %v5316 = vlaneseq
        %v5317 = vshrl.u32 %v5316, 7
        %v5318 = vsub.s32 %v5315, %v5317
        %v5319 = vrot.slane %v5311, %v5318
        %v5321 = vunpack.c.l.s4 1983009808
        %v5322 = vunpack.c.0.s8 %v5321
        %v5323 = vlaneseq
        %v5324 = vshrl.u32 %v5323, 7
        %v5325 = vsub.s32 %v5322, %v5324
        %v5326 = vrot.slane %v5312, %v5325
        %v5327 = vcombine.low %v5238, %v5242
        %v5328 = vcombine.high %v5238, %v5242
        %v5330 = vunpack.c.l.s4 1983009808
        %v5331 = vunpack.c.0.s8 %v5330
        %v5332 = vlaneseq
        %v5333 = vshrl.u32 %v5332, 7
        %v5334 = vsub.s32 %v5331, %v5333
        %v5335 = vrot.slane %v5327, %v5334
        %v5337 = vunpack.c.l.s4 1983009808
        %v5338 = vunpack.c.0.s8 %v5337
        %v5339 = vlaneseq
        %v5340 = vshrl.u32 %v5339, 7
        %v5341 = vsub.s32 %v5338, %v5340
        %v5342 = vrot.slane %v5328, %v5341
        %v5343 = vcombine.low %v5319, %v5335
        %v5344 = vcombine.high %v5319, %v5335
        %v5346 = vunpack.c.l.s4 1934713408
        %v5347 = vunpack.c.0.s8 %v5346
        %v5348 = vlaneseq
        %v5349 = vshrl.u32 %v5348, 7
        %v5350 = vsub.s32 %v5347, %v5349
        %v5351 = vrot.slane %v5343, %v5350
        %v5353 = vunpack.c.l.s4 1934713408
        %v5354 = vunpack.c.0.s8 %v5353
        %v5355 = vlaneseq
        %v5356 = vshrl.u32 %v5355, 7
        %v5357 = vsub.s32 %v5354, %v5356
        %v5358 = vrot.slane %v5344, %v5357
        %v5359 = vcombine.low %v5326, %v5342
        %v5360 = vcombine.high %v5326, %v5342
        %v5362 = vunpack.c.l.s4 1934713408
        %v5363 = vunpack.c.0.s8 %v5362
        %v5364 = vlaneseq
        %v5365 = vshrl.u32 %v5364, 7
        %v5366 = vsub.s32 %v5363, %v5365
        %v5367 = vrot.slane %v5359, %v5366
        %v5369 = vunpack.c.l.s4 1934713408
        %v5370 = vunpack.c.0.s8 %v5369
        %v5371 = vlaneseq
        %v5372 = vshrl.u32 %v5371, 7
        %v5373 = vsub.s32 %v5370, %v5372
        %v5374 = vrot.slane %v5360, %v5373
        %v5375 = vcombine.high %v5351, 0.0
        %v5376 = vcombine.high %v5358, 0.0
        %v5377 = vcombine.high %v5367, 0.0
        %v5378 = vcombine.high %v5374, 0.0
        %5380 = vrot.lane.b32.xlu0 %v5307, 16
        %v5381 = vpop.permute.xlu0 %5380
        %5384 = vrot.lane.b32.xlu0 %v5290, 32
        %v5385 = vpop.permute.xlu0 %5384
        %5388 = vrot.lane.b32.xlu0 %v5308, 48
        %v5389 = vpop.permute.xlu0 %5388
        %5392 = vrot.lane.b32.xlu0 %v5299, 64
        %v5393 = vpop.permute.xlu0 %5392
        %5396 = vrot.lane.b32.xlu0 %v5309, 80
        %v5397 = vpop.permute.xlu0 %5396
        %5400 = vrot.lane.b32.xlu0 %v5306, 96
        %v5401 = vpop.permute.xlu0 %5400
        %5404 = vrot.lane.b32.xlu0 %v5310, 112
        %v5405 = vpop.permute.xlu0 %5404
        %5408 = vrot.lane.b32.xlu0 %v5375, 16
        %v5409 = vpop.permute.xlu0 %5408
        %5412 = vrot.lane.b32.xlu0 %v5358, 32
        %v5413 = vpop.permute.xlu0 %5412
        %5416 = vrot.lane.b32.xlu0 %v5376, 48
        %v5417 = vpop.permute.xlu0 %5416
        %5420 = vrot.lane.b32.xlu0 %v5367, 64
        %v5421 = vpop.permute.xlu0 %5420
        %5424 = vrot.lane.b32.xlu0 %v5377, 80
        %v5425 = vpop.permute.xlu0 %5424
        %5428 = vrot.lane.b32.xlu0 %v5374, 96
        %v5429 = vpop.permute.xlu0 %5428
        %5432 = vrot.lane.b32.xlu0 %v5378, 112
        %v5433 = vpop.permute.xlu0 %5432
        %v5435 = vsel %vm1116, %v5283, %v5381
        %v5436 = vsel %vm1118, %v5435, %v5385
        %v5437 = vsel %vm1120, %v5436, %v5389
        %v5438 = vsel %vm476, %v5437, %v5393
        %v5439 = vsel %vm1123, %v5438, %v5397
        %v5440 = vsel %vm1125, %v5439, %v5401
        %v5441 = vsel %vm1127, %v5440, %v5405
        %v5442 = vsel %vm1116, %v5351, %v5409
        %v5443 = vsel %vm1118, %v5442, %v5413
        %v5444 = vsel %vm1120, %v5443, %v5417
        %v5445 = vsel %vm476, %v5444, %v5421
        %v5446 = vsel %vm1123, %v5445, %v5425
        %v5447 = vsel %vm1125, %v5446, %v5429
        %v5448 = vsel %vm1127, %v5447, %v5433
        %5457 = vrot.lane.b32.xlu0 %v5235, 127
        %v5458 = vpop.permute.xlu0 %5457
        %5459 = vrot.lane.b32.xlu0 %v5236, 127
        %v5460 = vpop.permute.xlu0 %5459
        %5461 = vrot.lane.b32.xlu0 %v5237, 127
        %v5462 = vpop.permute.xlu0 %5461
        %5463 = vrot.lane.b32.xlu0 %v5238, 127
        %v5464 = vpop.permute.xlu0 %5463
        %5465 = vrot.lane.b32.xlu0 %v5239, 127
        %v5466 = vpop.permute.xlu0 %5465
        %5467 = vrot.lane.b32.xlu0 %v5240, 127
        %v5468 = vpop.permute.xlu0 %5467
        %5469 = vrot.lane.b32.xlu0 %v5241, 127
        %v5470 = vpop.permute.xlu0 %5469
        %5471 = vrot.lane.b32.xlu0 %v5242, 127
        %v5472 = vpop.permute.xlu0 %5471
        %v5481 = vcombine.low %v5458, %v5466
        %v5482 = vcombine.high %v5458, %v5466
        %v5484 = vunpack.c.l.s4 1983009808
        %v5485 = vunpack.c.0.s8 %v5484
        %v5486 = vlaneseq
        %v5487 = vshrl.u32 %v5486, 7
        %v5488 = vsub.s32 %v5485, %v5487
        %v5489 = vrot.slane %v5481, %v5488
        %v5491 = vunpack.c.l.s4 1983009808
        %v5492 = vunpack.c.0.s8 %v5491
        %v5493 = vlaneseq
        %v5494 = vshrl.u32 %v5493, 7
        %v5495 = vsub.s32 %v5492, %v5494
        %v5496 = vrot.slane %v5482, %v5495
        %v5497 = vcombine.low %v5462, %v5470
        %v5498 = vcombine.high %v5462, %v5470
        %v5500 = vunpack.c.l.s4 1983009808
        %v5501 = vunpack.c.0.s8 %v5500
        %v5502 = vlaneseq
        %v5503 = vshrl.u32 %v5502, 7
        %v5504 = vsub.s32 %v5501, %v5503
        %v5505 = vrot.slane %v5497, %v5504
        %v5507 = vunpack.c.l.s4 1983009808
        %v5508 = vunpack.c.0.s8 %v5507
        %v5509 = vlaneseq
        %v5510 = vshrl.u32 %v5509, 7
        %v5511 = vsub.s32 %v5508, %v5510
        %v5512 = vrot.slane %v5498, %v5511
        %v5513 = vcombine.low %v5489, %v5505
        %v5514 = vcombine.high %v5489, %v5505
        %v5516 = vunpack.c.l.s4 1934713408
        %v5517 = vunpack.c.0.s8 %v5516
        %v5518 = vlaneseq
        %v5519 = vshrl.u32 %v5518, 7
        %v5520 = vsub.s32 %v5517, %v5519
        %v5521 = vrot.slane %v5513, %v5520
        %v5523 = vunpack.c.l.s4 1934713408
        %v5524 = vunpack.c.0.s8 %v5523
        %v5525 = vlaneseq
        %v5526 = vshrl.u32 %v5525, 7
        %v5527 = vsub.s32 %v5524, %v5526
        %v5528 = vrot.slane %v5514, %v5527
        %v5529 = vcombine.low %v5496, %v5512
        %v5530 = vcombine.high %v5496, %v5512
        %v5532 = vunpack.c.l.s4 1934713408
        %v5533 = vunpack.c.0.s8 %v5532
        %v5534 = vlaneseq
        %v5535 = vshrl.u32 %v5534, 7
        %v5536 = vsub.s32 %v5533, %v5535
        %v5537 = vrot.slane %v5529, %v5536
        %v5539 = vunpack.c.l.s4 1934713408
        %v5540 = vunpack.c.0.s8 %v5539
        %v5541 = vlaneseq
        %v5542 = vshrl.u32 %v5541, 7
        %v5543 = vsub.s32 %v5540, %v5542
        %v5544 = vrot.slane %v5530, %v5543
        %v5545 = vcombine.high %v5521, 0.0
        %v5546 = vcombine.high %v5528, 0.0
        %v5547 = vcombine.high %v5537, 0.0
        %v5548 = vcombine.high %v5544, 0.0
        %v5549 = vcombine.low %v5460, %v5468
        %v5550 = vcombine.high %v5460, %v5468
        %v5552 = vunpack.c.l.s4 1983009808
        %v5553 = vunpack.c.0.s8 %v5552
        %v5554 = vlaneseq
        %v5555 = vshrl.u32 %v5554, 7
        %v5556 = vsub.s32 %v5553, %v5555
        %v5557 = vrot.slane %v5549, %v5556
        %v5559 = vunpack.c.l.s4 1983009808
        %v5560 = vunpack.c.0.s8 %v5559
        %v5561 = vlaneseq
        %v5562 = vshrl.u32 %v5561, 7
        %v5563 = vsub.s32 %v5560, %v5562
        %v5564 = vrot.slane %v5550, %v5563
        %v5565 = vcombine.low %v5464, %v5472
        %v5566 = vcombine.high %v5464, %v5472
        %v5568 = vunpack.c.l.s4 1983009808
        %v5569 = vunpack.c.0.s8 %v5568
        %v5570 = vlaneseq
        %v5571 = vshrl.u32 %v5570, 7
        %v5572 = vsub.s32 %v5569, %v5571
        %v5573 = vrot.slane %v5565, %v5572
        %v5575 = vunpack.c.l.s4 1983009808
        %v5576 = vunpack.c.0.s8 %v5575
        %v5577 = vlaneseq
        %v5578 = vshrl.u32 %v5577, 7
        %v5579 = vsub.s32 %v5576, %v5578
        %v5580 = vrot.slane %v5566, %v5579
        %v5581 = vcombine.low %v5557, %v5573
        %v5582 = vcombine.high %v5557, %v5573
        %v5584 = vunpack.c.l.s4 1934713408
        %v5585 = vunpack.c.0.s8 %v5584
        %v5586 = vlaneseq
        %v5587 = vshrl.u32 %v5586, 7
        %v5588 = vsub.s32 %v5585, %v5587
        %v5589 = vrot.slane %v5581, %v5588
        %v5591 = vunpack.c.l.s4 1934713408
        %v5592 = vunpack.c.0.s8 %v5591
        %v5593 = vlaneseq
        %v5594 = vshrl.u32 %v5593, 7
        %v5595 = vsub.s32 %v5592, %v5594
        %v5596 = vrot.slane %v5582, %v5595
        %v5597 = vcombine.low %v5564, %v5580
        %v5598 = vcombine.high %v5564, %v5580
        %v5600 = vunpack.c.l.s4 1934713408
        %v5601 = vunpack.c.0.s8 %v5600
        %v5602 = vlaneseq
        %v5603 = vshrl.u32 %v5602, 7
        %v5604 = vsub.s32 %v5601, %v5603
        %v5605 = vrot.slane %v5597, %v5604
        %v5607 = vunpack.c.l.s4 1934713408
        %v5608 = vunpack.c.0.s8 %v5607
        %v5609 = vlaneseq
        %v5610 = vshrl.u32 %v5609, 7
        %v5611 = vsub.s32 %v5608, %v5610
        %v5612 = vrot.slane %v5598, %v5611
        %v5613 = vcombine.high %v5589, 0.0
        %v5614 = vcombine.high %v5596, 0.0
        %v5615 = vcombine.high %v5605, 0.0
        %v5616 = vcombine.high %v5612, 0.0
        %5618 = vrot.lane.b32.xlu0 %v5545, 16
        %v5619 = vpop.permute.xlu0 %5618
        %5622 = vrot.lane.b32.xlu0 %v5528, 32
        %v5623 = vpop.permute.xlu0 %5622
        %5626 = vrot.lane.b32.xlu0 %v5546, 48
        %v5627 = vpop.permute.xlu0 %5626
        %5630 = vrot.lane.b32.xlu0 %v5537, 64
        %v5631 = vpop.permute.xlu0 %5630
        %5634 = vrot.lane.b32.xlu0 %v5547, 80
        %v5635 = vpop.permute.xlu0 %5634
        %5638 = vrot.lane.b32.xlu0 %v5544, 96
        %v5639 = vpop.permute.xlu0 %5638
        %5642 = vrot.lane.b32.xlu0 %v5548, 112
        %v5643 = vpop.permute.xlu0 %5642
        %5646 = vrot.lane.b32.xlu0 %v5613, 16
        %v5647 = vpop.permute.xlu0 %5646
        %5650 = vrot.lane.b32.xlu0 %v5596, 32
        %v5651 = vpop.permute.xlu0 %5650
        %5654 = vrot.lane.b32.xlu0 %v5614, 48
        %v5655 = vpop.permute.xlu0 %5654
        %5658 = vrot.lane.b32.xlu0 %v5605, 64
        %v5659 = vpop.permute.xlu0 %5658
        %5662 = vrot.lane.b32.xlu0 %v5615, 80
        %v5663 = vpop.permute.xlu0 %5662
        %5666 = vrot.lane.b32.xlu0 %v5612, 96
        %v5667 = vpop.permute.xlu0 %5666
        %5670 = vrot.lane.b32.xlu0 %v5616, 112
        %v5671 = vpop.permute.xlu0 %5670
        %v5673 = vsel %vm1116, %v5521, %v5619
        %v5674 = vsel %vm1118, %v5673, %v5623
        %v5675 = vsel %vm1120, %v5674, %v5627
        %v5676 = vsel %vm476, %v5675, %v5631
        %v5677 = vsel %vm1123, %v5676, %v5635
        %v5678 = vsel %vm1125, %v5677, %v5639
        %v5679 = vsel %vm1127, %v5678, %v5643
        %v5680 = vsel %vm1116, %v5589, %v5647
        %v5681 = vsel %vm1118, %v5680, %v5651
        %v5682 = vsel %vm1120, %v5681, %v5655
        %v5683 = vsel %vm476, %v5682, %v5659
        %v5684 = vsel %vm1123, %v5683, %v5663
        %v5685 = vsel %vm1125, %v5684, %v5667
        %v5686 = vsel %vm1127, %v5685, %v5671
        %5687 = vrot.lane.b32.xlu0 %v5235, 126
        %v5688 = vpop.permute.xlu0 %5687
        %5689 = vrot.lane.b32.xlu0 %v5236, 126
        %v5690 = vpop.permute.xlu0 %5689
        %5691 = vrot.lane.b32.xlu0 %v5237, 126
        %v5692 = vpop.permute.xlu0 %5691
        %5693 = vrot.lane.b32.xlu0 %v5238, 126
        %v5694 = vpop.permute.xlu0 %5693
        %5695 = vrot.lane.b32.xlu0 %v5239, 126
        %v5696 = vpop.permute.xlu0 %5695
        %5697 = vrot.lane.b32.xlu0 %v5240, 126
        %v5698 = vpop.permute.xlu0 %5697
        %5699 = vrot.lane.b32.xlu0 %v5241, 126
        %v5700 = vpop.permute.xlu0 %5699
        %5701 = vrot.lane.b32.xlu0 %v5242, 126
        %v5702 = vpop.permute.xlu0 %5701
        %v5711 = vcombine.low %v5688, %v5696
        %v5712 = vcombine.high %v5688, %v5696
        %v5714 = vunpack.c.l.s4 1983009808
        %v5715 = vunpack.c.0.s8 %v5714
        %v5716 = vlaneseq
        %v5717 = vshrl.u32 %v5716, 7
        %v5718 = vsub.s32 %v5715, %v5717
        %v5719 = vrot.slane %v5711, %v5718
        %v5721 = vunpack.c.l.s4 1983009808
        %v5722 = vunpack.c.0.s8 %v5721
        %v5723 = vlaneseq
        %v5724 = vshrl.u32 %v5723, 7
        %v5725 = vsub.s32 %v5722, %v5724
        %v5726 = vrot.slane %v5712, %v5725
        %v5727 = vcombine.low %v5692, %v5700
        %v5728 = vcombine.high %v5692, %v5700
        %v5730 = vunpack.c.l.s4 1983009808
        %v5731 = vunpack.c.0.s8 %v5730
        %v5732 = vlaneseq
        %v5733 = vshrl.u32 %v5732, 7
        %v5734 = vsub.s32 %v5731, %v5733
        %v5735 = vrot.slane %v5727, %v5734
        %v5737 = vunpack.c.l.s4 1983009808
        %v5738 = vunpack.c.0.s8 %v5737
        %v5739 = vlaneseq
        %v5740 = vshrl.u32 %v5739, 7
        %v5741 = vsub.s32 %v5738, %v5740
        %v5742 = vrot.slane %v5728, %v5741
        %v5743 = vcombine.low %v5719, %v5735
        %v5744 = vcombine.high %v5719, %v5735
        %v5746 = vunpack.c.l.s4 1934713408
        %v5747 = vunpack.c.0.s8 %v5746
        %v5748 = vlaneseq
        %v5749 = vshrl.u32 %v5748, 7
        %v5750 = vsub.s32 %v5747, %v5749
        %v5751 = vrot.slane %v5743, %v5750
        %v5753 = vunpack.c.l.s4 1934713408
        %v5754 = vunpack.c.0.s8 %v5753
        %v5755 = vlaneseq
        %v5756 = vshrl.u32 %v5755, 7
        %v5757 = vsub.s32 %v5754, %v5756
        %v5758 = vrot.slane %v5744, %v5757
        %v5759 = vcombine.low %v5726, %v5742
        %v5760 = vcombine.high %v5726, %v5742
        %v5762 = vunpack.c.l.s4 1934713408
        %v5763 = vunpack.c.0.s8 %v5762
        %v5764 = vlaneseq
        %v5765 = vshrl.u32 %v5764, 7
        %v5766 = vsub.s32 %v5763, %v5765
        %v5767 = vrot.slane %v5759, %v5766
        %v5769 = vunpack.c.l.s4 1934713408
        %v5770 = vunpack.c.0.s8 %v5769
        %v5771 = vlaneseq
        %v5772 = vshrl.u32 %v5771, 7
        %v5773 = vsub.s32 %v5770, %v5772
        %v5774 = vrot.slane %v5760, %v5773
        %v5775 = vcombine.high %v5751, 0.0
        %v5776 = vcombine.high %v5758, 0.0
        %v5777 = vcombine.high %v5767, 0.0
        %v5778 = vcombine.high %v5774, 0.0
        %v5779 = vcombine.low %v5690, %v5698
        %v5780 = vcombine.high %v5690, %v5698
        %v5782 = vunpack.c.l.s4 1983009808
        %v5783 = vunpack.c.0.s8 %v5782
        %v5784 = vlaneseq
        %v5785 = vshrl.u32 %v5784, 7
        %v5786 = vsub.s32 %v5783, %v5785
        %v5787 = vrot.slane %v5779, %v5786
        %v5789 = vunpack.c.l.s4 1983009808
        %v5790 = vunpack.c.0.s8 %v5789
        %v5791 = vlaneseq
        %v5792 = vshrl.u32 %v5791, 7
        %v5793 = vsub.s32 %v5790, %v5792
        %v5794 = vrot.slane %v5780, %v5793
        %v5795 = vcombine.low %v5694, %v5702
        %v5796 = vcombine.high %v5694, %v5702
        %v5798 = vunpack.c.l.s4 1983009808
        %v5799 = vunpack.c.0.s8 %v5798
        %v5800 = vlaneseq
        %v5801 = vshrl.u32 %v5800, 7
        %v5802 = vsub.s32 %v5799, %v5801
        %v5803 = vrot.slane %v5795, %v5802
        %v5805 = vunpack.c.l.s4 1983009808
        %v5806 = vunpack.c.0.s8 %v5805
        %v5807 = vlaneseq
        %v5808 = vshrl.u32 %v5807, 7
        %v5809 = vsub.s32 %v5806, %v5808
        %v5810 = vrot.slane %v5796, %v5809
        %v5811 = vcombine.low %v5787, %v5803
        %v5812 = vcombine.high %v5787, %v5803
        %v5814 = vunpack.c.l.s4 1934713408
        %v5815 = vunpack.c.0.s8 %v5814
        %v5816 = vlaneseq
        %v5817 = vshrl.u32 %v5816, 7
        %v5818 = vsub.s32 %v5815, %v5817
        %v5819 = vrot.slane %v5811, %v5818
        %v5821 = vunpack.c.l.s4 1934713408
        %v5822 = vunpack.c.0.s8 %v5821
        %v5823 = vlaneseq
        %v5824 = vshrl.u32 %v5823, 7
        %v5825 = vsub.s32 %v5822, %v5824
        %v5826 = vrot.slane %v5812, %v5825
        %v5827 = vcombine.low %v5794, %v5810
        %v5828 = vcombine.high %v5794, %v5810
        %v5830 = vunpack.c.l.s4 1934713408
        %v5831 = vunpack.c.0.s8 %v5830
        %v5832 = vlaneseq
        %v5833 = vshrl.u32 %v5832, 7
        %v5834 = vsub.s32 %v5831, %v5833
        %v5835 = vrot.slane %v5827, %v5834
        %v5837 = vunpack.c.l.s4 1934713408
        %v5838 = vunpack.c.0.s8 %v5837
        %v5839 = vlaneseq
        %v5840 = vshrl.u32 %v5839, 7
        %v5841 = vsub.s32 %v5838, %v5840
        %v5842 = vrot.slane %v5828, %v5841
        %v5843 = vcombine.high %v5819, 0.0
        %v5844 = vcombine.high %v5826, 0.0
        %v5845 = vcombine.high %v5835, 0.0
        %v5846 = vcombine.high %v5842, 0.0
        %5848 = vrot.lane.b32.xlu0 %v5775, 16
        %v5849 = vpop.permute.xlu0 %5848
        %5852 = vrot.lane.b32.xlu0 %v5758, 32
        %v5853 = vpop.permute.xlu0 %5852
        %5856 = vrot.lane.b32.xlu0 %v5776, 48
        %v5857 = vpop.permute.xlu0 %5856
        %5860 = vrot.lane.b32.xlu0 %v5767, 64
        %v5861 = vpop.permute.xlu0 %5860
        %5864 = vrot.lane.b32.xlu0 %v5777, 80
        %v5865 = vpop.permute.xlu0 %5864
        %5868 = vrot.lane.b32.xlu0 %v5774, 96
        %v5869 = vpop.permute.xlu0 %5868
        %5872 = vrot.lane.b32.xlu0 %v5778, 112
        %v5873 = vpop.permute.xlu0 %5872
        %5876 = vrot.lane.b32.xlu0 %v5843, 16
        %v5877 = vpop.permute.xlu0 %5876
        %5880 = vrot.lane.b32.xlu0 %v5826, 32
        %v5881 = vpop.permute.xlu0 %5880
        %5884 = vrot.lane.b32.xlu0 %v5844, 48
        %v5885 = vpop.permute.xlu0 %5884
        %5888 = vrot.lane.b32.xlu0 %v5835, 64
        %v5889 = vpop.permute.xlu0 %5888
        %5892 = vrot.lane.b32.xlu0 %v5845, 80
        %v5893 = vpop.permute.xlu0 %5892
        %5896 = vrot.lane.b32.xlu0 %v5842, 96
        %v5897 = vpop.permute.xlu0 %5896
        %5900 = vrot.lane.b32.xlu0 %v5846, 112
        %v5901 = vpop.permute.xlu0 %5900
        %v5903 = vsel %vm1116, %v5751, %v5849
        %v5904 = vsel %vm1118, %v5903, %v5853
        %v5905 = vsel %vm1120, %v5904, %v5857
        %v5906 = vsel %vm476, %v5905, %v5861
        %v5907 = vsel %vm1123, %v5906, %v5865
        %v5908 = vsel %vm1125, %v5907, %v5869
        %v5909 = vsel %vm1127, %v5908, %v5873
        %v5910 = vsel %vm1116, %v5819, %v5877
        %v5911 = vsel %vm1118, %v5910, %v5881
        %v5912 = vsel %vm1120, %v5911, %v5885
        %v5913 = vsel %vm476, %v5912, %v5889
        %v5914 = vsel %vm1123, %v5913, %v5893
        %v5915 = vsel %vm1125, %v5914, %v5897
        %v5916 = vsel %vm1127, %v5915, %v5901
        %v5917 = vld [vmem:[#allocation3 + $0x2] sm:$0xff]
        %v5918 = vld [vmem:[#allocation3 + $0xa] sm:$0xff]
        %v5919 = vld [vmem:[#allocation3 + $0x1a] sm:$0xff]
        %v5920 = vld [vmem:[#allocation3 + $0x22] sm:$0xff]
        %v5921 = vld [vmem:[#allocation3 + $0x32] sm:$0xff]
        %v5922 = vld [vmem:[#allocation3 + $0x3a] sm:$0xff]
        %v5923 = vld [vmem:[#allocation3 + $0x4a] sm:$0xff]
        %v5924 = vld [vmem:[#allocation3 + $0x52] sm:$0xff]
        %v5925 = vcombine.low %v5917, %v5921
        %v5926 = vcombine.high %v5917, %v5921
        %v5928 = vunpack.c.l.s4 1983009808
        %v5929 = vunpack.c.0.s8 %v5928
        %v5930 = vlaneseq
        %v5931 = vshrl.u32 %v5930, 7
        %v5932 = vsub.s32 %v5929, %v5931
        %v5933 = vrot.slane %v5925, %v5932
        %v5935 = vunpack.c.l.s4 1983009808
        %v5936 = vunpack.c.0.s8 %v5935
        %v5937 = vlaneseq
        %v5938 = vshrl.u32 %v5937, 7
        %v5939 = vsub.s32 %v5936, %v5938
        %v5940 = vrot.slane %v5926, %v5939
        %v5941 = vcombine.low %v5919, %v5923
        %v5942 = vcombine.high %v5919, %v5923
        %v5944 = vunpack.c.l.s4 1983009808
        %v5945 = vunpack.c.0.s8 %v5944
        %v5946 = vlaneseq
        %v5947 = vshrl.u32 %v5946, 7
        %v5948 = vsub.s32 %v5945, %v5947
        %v5949 = vrot.slane %v5941, %v5948
        %v5951 = vunpack.c.l.s4 1983009808
        %v5952 = vunpack.c.0.s8 %v5951
        %v5953 = vlaneseq
        %v5954 = vshrl.u32 %v5953, 7
        %v5955 = vsub.s32 %v5952, %v5954
        %v5956 = vrot.slane %v5942, %v5955
        %v5957 = vcombine.low %v5933, %v5949
        %v5958 = vcombine.high %v5933, %v5949
        %v5960 = vunpack.c.l.s4 1934713408
        %v5961 = vunpack.c.0.s8 %v5960
        %v5962 = vlaneseq
        %v5963 = vshrl.u32 %v5962, 7
        %v5964 = vsub.s32 %v5961, %v5963
        %v5965 = vrot.slane %v5957, %v5964
        %v5967 = vunpack.c.l.s4 1934713408
        %v5968 = vunpack.c.0.s8 %v5967
        %v5969 = vlaneseq
        %v5970 = vshrl.u32 %v5969, 7
        %v5971 = vsub.s32 %v5968, %v5970
        %v5972 = vrot.slane %v5958, %v5971
        %v5973 = vcombine.low %v5940, %v5956
        %v5974 = vcombine.high %v5940, %v5956
        %v5976 = vunpack.c.l.s4 1934713408
        %v5977 = vunpack.c.0.s8 %v5976
        %v5978 = vlaneseq
        %v5979 = vshrl.u32 %v5978, 7
        %v5980 = vsub.s32 %v5977, %v5979
        %v5981 = vrot.slane %v5973, %v5980
        %v5983 = vunpack.c.l.s4 1934713408
        %v5984 = vunpack.c.0.s8 %v5983
        %v5985 = vlaneseq
        %v5986 = vshrl.u32 %v5985, 7
        %v5987 = vsub.s32 %v5984, %v5986
        %v5988 = vrot.slane %v5974, %v5987
        %v5989 = vcombine.high %v5965, 0.0
        %v5990 = vcombine.high %v5972, 0.0
        %v5991 = vcombine.high %v5981, 0.0
        %v5992 = vcombine.high %v5988, 0.0
        %v5993 = vcombine.low %v5918, %v5922
        %v5994 = vcombine.high %v5918, %v5922
        %v5996 = vunpack.c.l.s4 1983009808
        %v5997 = vunpack.c.0.s8 %v5996
        %v5998 = vlaneseq
        %v5999 = vshrl.u32 %v5998, 7
        %v6000 = vsub.s32 %v5997, %v5999
        %v6001 = vrot.slane %v5993, %v6000
        %v6003 = vunpack.c.l.s4 1983009808
        %v6004 = vunpack.c.0.s8 %v6003
        %v6005 = vlaneseq
        %v6006 = vshrl.u32 %v6005, 7
        %v6007 = vsub.s32 %v6004, %v6006
        %v6008 = vrot.slane %v5994, %v6007
        %v6009 = vcombine.low %v5920, %v5924
        %v6010 = vcombine.high %v5920, %v5924
        %v6012 = vunpack.c.l.s4 1983009808
        %v6013 = vunpack.c.0.s8 %v6012
        %v6014 = vlaneseq
        %v6015 = vshrl.u32 %v6014, 7
        %v6016 = vsub.s32 %v6013, %v6015
        %v6017 = vrot.slane %v6009, %v6016
        %v6019 = vunpack.c.l.s4 1983009808
        %v6020 = vunpack.c.0.s8 %v6019
        %v6021 = vlaneseq
        %v6022 = vshrl.u32 %v6021, 7
        %v6023 = vsub.s32 %v6020, %v6022
        %v6024 = vrot.slane %v6010, %v6023
        %v6025 = vcombine.low %v6001, %v6017
        %v6026 = vcombine.high %v6001, %v6017
        %v6028 = vunpack.c.l.s4 1934713408
        %v6029 = vunpack.c.0.s8 %v6028
        %v6030 = vlaneseq
        %v6031 = vshrl.u32 %v6030, 7
        %v6032 = vsub.s32 %v6029, %v6031
        %v6033 = vrot.slane %v6025, %v6032
        %v6035 = vunpack.c.l.s4 1934713408
        %v6036 = vunpack.c.0.s8 %v6035
        %v6037 = vlaneseq
        %v6038 = vshrl.u32 %v6037, 7
        %v6039 = vsub.s32 %v6036, %v6038
        %v6040 = vrot.slane %v6026, %v6039
        %v6041 = vcombine.low %v6008, %v6024
        %v6042 = vcombine.high %v6008, %v6024
        %v6044 = vunpack.c.l.s4 1934713408
        %v6045 = vunpack.c.0.s8 %v6044
        %v6046 = vlaneseq
        %v6047 = vshrl.u32 %v6046, 7
        %v6048 = vsub.s32 %v6045, %v6047
        %v6049 = vrot.slane %v6041, %v6048
        %v6051 = vunpack.c.l.s4 1934713408
        %v6052 = vunpack.c.0.s8 %v6051
        %v6053 = vlaneseq
        %v6054 = vshrl.u32 %v6053, 7
        %v6055 = vsub.s32 %v6052, %v6054
        %v6056 = vrot.slane %v6042, %v6055
        %v6057 = vcombine.high %v6033, 0.0
        %v6058 = vcombine.high %v6040, 0.0
        %v6059 = vcombine.high %v6049, 0.0
        %v6060 = vcombine.high %v6056, 0.0
        %6062 = vrot.lane.b32.xlu0 %v5989, 16
        %v6063 = vpop.permute.xlu0 %6062
        %6066 = vrot.lane.b32.xlu0 %v5972, 32
        %v6067 = vpop.permute.xlu0 %6066
        %6070 = vrot.lane.b32.xlu0 %v5990, 48
        %v6071 = vpop.permute.xlu0 %6070
        %6074 = vrot.lane.b32.xlu0 %v5981, 64
        %v6075 = vpop.permute.xlu0 %6074
        %6078 = vrot.lane.b32.xlu0 %v5991, 80
        %v6079 = vpop.permute.xlu0 %6078
        %6082 = vrot.lane.b32.xlu0 %v5988, 96
        %v6083 = vpop.permute.xlu0 %6082
        %6086 = vrot.lane.b32.xlu0 %v5992, 112
        %v6087 = vpop.permute.xlu0 %6086
        %6090 = vrot.lane.b32.xlu0 %v6057, 16
        %v6091 = vpop.permute.xlu0 %6090
        %6094 = vrot.lane.b32.xlu0 %v6040, 32
        %v6095 = vpop.permute.xlu0 %6094
        %6098 = vrot.lane.b32.xlu0 %v6058, 48
        %v6099 = vpop.permute.xlu0 %6098
        %6102 = vrot.lane.b32.xlu0 %v6049, 64
        %v6103 = vpop.permute.xlu0 %6102
        %6106 = vrot.lane.b32.xlu0 %v6059, 80
        %v6107 = vpop.permute.xlu0 %6106
        %6110 = vrot.lane.b32.xlu0 %v6056, 96
        %v6111 = vpop.permute.xlu0 %6110
        %6114 = vrot.lane.b32.xlu0 %v6060, 112
        %v6115 = vpop.permute.xlu0 %6114
        %v6117 = vsel %vm1116, %v5965, %v6063
        %v6118 = vsel %vm1118, %v6117, %v6067
        %v6119 = vsel %vm1120, %v6118, %v6071
        %v6120 = vsel %vm476, %v6119, %v6075
        %v6121 = vsel %vm1123, %v6120, %v6079
        %v6122 = vsel %vm1125, %v6121, %v6083
        %v6123 = vsel %vm1127, %v6122, %v6087
        %v6124 = vsel %vm1116, %v6033, %v6091
        %v6125 = vsel %vm1118, %v6124, %v6095
        %v6126 = vsel %vm1120, %v6125, %v6099
        %v6127 = vsel %vm476, %v6126, %v6103
        %v6128 = vsel %vm1123, %v6127, %v6107
        %v6129 = vsel %vm1125, %v6128, %v6111
        %v6130 = vsel %vm1127, %v6129, %v6115
        %6139 = vrot.lane.b32.xlu0 %v5917, 127
        %v6140 = vpop.permute.xlu0 %6139
        %6141 = vrot.lane.b32.xlu0 %v5918, 127
        %v6142 = vpop.permute.xlu0 %6141
        %6143 = vrot.lane.b32.xlu0 %v5919, 127
        %v6144 = vpop.permute.xlu0 %6143
        %6145 = vrot.lane.b32.xlu0 %v5920, 127
        %v6146 = vpop.permute.xlu0 %6145
        %6147 = vrot.lane.b32.xlu0 %v5921, 127
        %v6148 = vpop.permute.xlu0 %6147
        %6149 = vrot.lane.b32.xlu0 %v5922, 127
        %v6150 = vpop.permute.xlu0 %6149
        %6151 = vrot.lane.b32.xlu0 %v5923, 127
        %v6152 = vpop.permute.xlu0 %6151
        %6153 = vrot.lane.b32.xlu0 %v5924, 127
        %v6154 = vpop.permute.xlu0 %6153
        %v6163 = vcombine.low %v6140, %v6148
        %v6164 = vcombine.high %v6140, %v6148
        %v6166 = vunpack.c.l.s4 1983009808
        %v6167 = vunpack.c.0.s8 %v6166
        %v6168 = vlaneseq
        %v6169 = vshrl.u32 %v6168, 7
        %v6170 = vsub.s32 %v6167, %v6169
        %v6171 = vrot.slane %v6163, %v6170
        %v6173 = vunpack.c.l.s4 1983009808
        %v6174 = vunpack.c.0.s8 %v6173
        %v6175 = vlaneseq
        %v6176 = vshrl.u32 %v6175, 7
        %v6177 = vsub.s32 %v6174, %v6176
        %v6178 = vrot.slane %v6164, %v6177
        %v6179 = vcombine.low %v6144, %v6152
        %v6180 = vcombine.high %v6144, %v6152
        %v6182 = vunpack.c.l.s4 1983009808
        %v6183 = vunpack.c.0.s8 %v6182
        %v6184 = vlaneseq
        %v6185 = vshrl.u32 %v6184, 7
        %v6186 = vsub.s32 %v6183, %v6185
        %v6187 = vrot.slane %v6179, %v6186
        %v6189 = vunpack.c.l.s4 1983009808
        %v6190 = vunpack.c.0.s8 %v6189
        %v6191 = vlaneseq
        %v6192 = vshrl.u32 %v6191, 7
        %v6193 = vsub.s32 %v6190, %v6192
        %v6194 = vrot.slane %v6180, %v6193
        %v6195 = vcombine.low %v6171, %v6187
        %v6196 = vcombine.high %v6171, %v6187
        %v6198 = vunpack.c.l.s4 1934713408
        %v6199 = vunpack.c.0.s8 %v6198
        %v6200 = vlaneseq
        %v6201 = vshrl.u32 %v6200, 7
        %v6202 = vsub.s32 %v6199, %v6201
        %v6203 = vrot.slane %v6195, %v6202
        %v6205 = vunpack.c.l.s4 1934713408
        %v6206 = vunpack.c.0.s8 %v6205
        %v6207 = vlaneseq
        %v6208 = vshrl.u32 %v6207, 7
        %v6209 = vsub.s32 %v6206, %v6208
        %v6210 = vrot.slane %v6196, %v6209
        %v6211 = vcombine.low %v6178, %v6194
        %v6212 = vcombine.high %v6178, %v6194
        %v6214 = vunpack.c.l.s4 1934713408
        %v6215 = vunpack.c.0.s8 %v6214
        %v6216 = vlaneseq
        %v6217 = vshrl.u32 %v6216, 7
        %v6218 = vsub.s32 %v6215, %v6217
        %v6219 = vrot.slane %v6211, %v6218
        %v6221 = vunpack.c.l.s4 1934713408
        %v6222 = vunpack.c.0.s8 %v6221
        %v6223 = vlaneseq
        %v6224 = vshrl.u32 %v6223, 7
        %v6225 = vsub.s32 %v6222, %v6224
        %v6226 = vrot.slane %v6212, %v6225
        %v6227 = vcombine.high %v6203, 0.0
        %v6228 = vcombine.high %v6210, 0.0
        %v6229 = vcombine.high %v6219, 0.0
        %v6230 = vcombine.high %v6226, 0.0
        %v6231 = vcombine.low %v6142, %v6150
        %v6232 = vcombine.high %v6142, %v6150
        %v6234 = vunpack.c.l.s4 1983009808
        %v6235 = vunpack.c.0.s8 %v6234
        %v6236 = vlaneseq
        %v6237 = vshrl.u32 %v6236, 7
        %v6238 = vsub.s32 %v6235, %v6237
        %v6239 = vrot.slane %v6231, %v6238
        %v6241 = vunpack.c.l.s4 1983009808
        %v6242 = vunpack.c.0.s8 %v6241
        %v6243 = vlaneseq
        %v6244 = vshrl.u32 %v6243, 7
        %v6245 = vsub.s32 %v6242, %v6244
        %v6246 = vrot.slane %v6232, %v6245
        %v6247 = vcombine.low %v6146, %v6154
        %v6248 = vcombine.high %v6146, %v6154
        %v6250 = vunpack.c.l.s4 1983009808
        %v6251 = vunpack.c.0.s8 %v6250
        %v6252 = vlaneseq
        %v6253 = vshrl.u32 %v6252, 7
        %v6254 = vsub.s32 %v6251, %v6253
        %v6255 = vrot.slane %v6247, %v6254
        %v6257 = vunpack.c.l.s4 1983009808
        %v6258 = vunpack.c.0.s8 %v6257
        %v6259 = vlaneseq
        %v6260 = vshrl.u32 %v6259, 7
        %v6261 = vsub.s32 %v6258, %v6260
        %v6262 = vrot.slane %v6248, %v6261
        %v6263 = vcombine.low %v6239, %v6255
        %v6264 = vcombine.high %v6239, %v6255
        %v6266 = vunpack.c.l.s4 1934713408
        %v6267 = vunpack.c.0.s8 %v6266
        %v6268 = vlaneseq
        %v6269 = vshrl.u32 %v6268, 7
        %v6270 = vsub.s32 %v6267, %v6269
        %v6271 = vrot.slane %v6263, %v6270
        %v6273 = vunpack.c.l.s4 1934713408
        %v6274 = vunpack.c.0.s8 %v6273
        %v6275 = vlaneseq
        %v6276 = vshrl.u32 %v6275, 7
        %v6277 = vsub.s32 %v6274, %v6276
        %v6278 = vrot.slane %v6264, %v6277
        %v6279 = vcombine.low %v6246, %v6262
        %v6280 = vcombine.high %v6246, %v6262
        %v6282 = vunpack.c.l.s4 1934713408
        %v6283 = vunpack.c.0.s8 %v6282
        %v6284 = vlaneseq
        %v6285 = vshrl.u32 %v6284, 7
        %v6286 = vsub.s32 %v6283, %v6285
        %v6287 = vrot.slane %v6279, %v6286
        %v6289 = vunpack.c.l.s4 1934713408
        %v6290 = vunpack.c.0.s8 %v6289
        %v6291 = vlaneseq
        %v6292 = vshrl.u32 %v6291, 7
        %v6293 = vsub.s32 %v6290, %v6292
        %v6294 = vrot.slane %v6280, %v6293
        %v6295 = vcombine.high %v6271, 0.0
        %v6296 = vcombine.high %v6278, 0.0
        %v6297 = vcombine.high %v6287, 0.0
        %v6298 = vcombine.high %v6294, 0.0
        %6300 = vrot.lane.b32.xlu0 %v6227, 16
        %v6301 = vpop.permute.xlu0 %6300
        %6304 = vrot.lane.b32.xlu0 %v6210, 32
        %v6305 = vpop.permute.xlu0 %6304
        %6308 = vrot.lane.b32.xlu0 %v6228, 48
        %v6309 = vpop.permute.xlu0 %6308
        %6312 = vrot.lane.b32.xlu0 %v6219, 64
        %v6313 = vpop.permute.xlu0 %6312
        %6316 = vrot.lane.b32.xlu0 %v6229, 80
        %v6317 = vpop.permute.xlu0 %6316
        %6320 = vrot.lane.b32.xlu0 %v6226, 96
        %v6321 = vpop.permute.xlu0 %6320
        %6324 = vrot.lane.b32.xlu0 %v6230, 112
        %v6325 = vpop.permute.xlu0 %6324
        %6328 = vrot.lane.b32.xlu0 %v6295, 16
        %v6329 = vpop.permute.xlu0 %6328
        %6332 = vrot.lane.b32.xlu0 %v6278, 32
        %v6333 = vpop.permute.xlu0 %6332
        %6336 = vrot.lane.b32.xlu0 %v6296, 48
        %v6337 = vpop.permute.xlu0 %6336
        %6340 = vrot.lane.b32.xlu0 %v6287, 64
        %v6341 = vpop.permute.xlu0 %6340
        %6344 = vrot.lane.b32.xlu0 %v6297, 80
        %v6345 = vpop.permute.xlu0 %6344
        %6348 = vrot.lane.b32.xlu0 %v6294, 96
        %v6349 = vpop.permute.xlu0 %6348
        %6352 = vrot.lane.b32.xlu0 %v6298, 112
        %v6353 = vpop.permute.xlu0 %6352
        %v6355 = vsel %vm1116, %v6203, %v6301
        %v6356 = vsel %vm1118, %v6355, %v6305
        %v6357 = vsel %vm1120, %v6356, %v6309
        %v6358 = vsel %vm476, %v6357, %v6313
        %v6359 = vsel %vm1123, %v6358, %v6317
        %v6360 = vsel %vm1125, %v6359, %v6321
        %v6361 = vsel %vm1127, %v6360, %v6325
        %v6362 = vsel %vm1116, %v6271, %v6329
        %v6363 = vsel %vm1118, %v6362, %v6333
        %v6364 = vsel %vm1120, %v6363, %v6337
        %v6365 = vsel %vm476, %v6364, %v6341
        %v6366 = vsel %vm1123, %v6365, %v6345
        %v6367 = vsel %vm1125, %v6366, %v6349
        %v6368 = vsel %vm1127, %v6367, %v6353
        %6369 = vrot.lane.b32.xlu0 %v5917, 126
        %v6370 = vpop.permute.xlu0 %6369
        %6371 = vrot.lane.b32.xlu0 %v5918, 126
        %v6372 = vpop.permute.xlu0 %6371
        %6373 = vrot.lane.b32.xlu0 %v5919, 126
        %v6374 = vpop.permute.xlu0 %6373
        %6375 = vrot.lane.b32.xlu0 %v5920, 126
        %v6376 = vpop.permute.xlu0 %6375
        %6377 = vrot.lane.b32.xlu0 %v5921, 126
        %v6378 = vpop.permute.xlu0 %6377
        %6379 = vrot.lane.b32.xlu0 %v5922, 126
        %v6380 = vpop.permute.xlu0 %6379
        %6381 = vrot.lane.b32.xlu0 %v5923, 126
        %v6382 = vpop.permute.xlu0 %6381
        %6383 = vrot.lane.b32.xlu0 %v5924, 126
        %v6384 = vpop.permute.xlu0 %6383
        %v6393 = vcombine.low %v6370, %v6378
        %v6394 = vcombine.high %v6370, %v6378
        %v6396 = vunpack.c.l.s4 1983009808
        %v6397 = vunpack.c.0.s8 %v6396
        %v6398 = vlaneseq
        %v6399 = vshrl.u32 %v6398, 7
        %v6400 = vsub.s32 %v6397, %v6399
        %v6401 = vrot.slane %v6393, %v6400
        %v6403 = vunpack.c.l.s4 1983009808
        %v6404 = vunpack.c.0.s8 %v6403
        %v6405 = vlaneseq
        %v6406 = vshrl.u32 %v6405, 7
        %v6407 = vsub.s32 %v6404, %v6406
        %v6408 = vrot.slane %v6394, %v6407
        %v6409 = vcombine.low %v6374, %v6382
        %v6410 = vcombine.high %v6374, %v6382
        %v6412 = vunpack.c.l.s4 1983009808
        %v6413 = vunpack.c.0.s8 %v6412
        %v6414 = vlaneseq
        %v6415 = vshrl.u32 %v6414, 7
        %v6416 = vsub.s32 %v6413, %v6415
        %v6417 = vrot.slane %v6409, %v6416
        %v6419 = vunpack.c.l.s4 1983009808
        %v6420 = vunpack.c.0.s8 %v6419
        %v6421 = vlaneseq
        %v6422 = vshrl.u32 %v6421, 7
        %v6423 = vsub.s32 %v6420, %v6422
        %v6424 = vrot.slane %v6410, %v6423
        %v6425 = vcombine.low %v6401, %v6417
        %v6426 = vcombine.high %v6401, %v6417
        %v6428 = vunpack.c.l.s4 1934713408
        %v6429 = vunpack.c.0.s8 %v6428
        %v6430 = vlaneseq
        %v6431 = vshrl.u32 %v6430, 7
        %v6432 = vsub.s32 %v6429, %v6431
        %v6433 = vrot.slane %v6425, %v6432
        %v6435 = vunpack.c.l.s4 1934713408
        %v6436 = vunpack.c.0.s8 %v6435
        %v6437 = vlaneseq
        %v6438 = vshrl.u32 %v6437, 7
        %v6439 = vsub.s32 %v6436, %v6438
        %v6440 = vrot.slane %v6426, %v6439
        %v6441 = vcombine.low %v6408, %v6424
        %v6442 = vcombine.high %v6408, %v6424
        %v6444 = vunpack.c.l.s4 1934713408
        %v6445 = vunpack.c.0.s8 %v6444
        %v6446 = vlaneseq
        %v6447 = vshrl.u32 %v6446, 7
        %v6448 = vsub.s32 %v6445, %v6447
        %v6449 = vrot.slane %v6441, %v6448
        %v6451 = vunpack.c.l.s4 1934713408
        %v6452 = vunpack.c.0.s8 %v6451
        %v6453 = vlaneseq
        %v6454 = vshrl.u32 %v6453, 7
        %v6455 = vsub.s32 %v6452, %v6454
        %v6456 = vrot.slane %v6442, %v6455
        %v6457 = vcombine.high %v6433, 0.0
        %v6458 = vcombine.high %v6440, 0.0
        %v6459 = vcombine.high %v6449, 0.0
        %v6460 = vcombine.high %v6456, 0.0
        %v6461 = vcombine.low %v6372, %v6380
        %v6462 = vcombine.high %v6372, %v6380
        %v6464 = vunpack.c.l.s4 1983009808
        %v6465 = vunpack.c.0.s8 %v6464
        %v6466 = vlaneseq
        %v6467 = vshrl.u32 %v6466, 7
        %v6468 = vsub.s32 %v6465, %v6467
        %v6469 = vrot.slane %v6461, %v6468
        %v6471 = vunpack.c.l.s4 1983009808
        %v6472 = vunpack.c.0.s8 %v6471
        %v6473 = vlaneseq
        %v6474 = vshrl.u32 %v6473, 7
        %v6475 = vsub.s32 %v6472, %v6474
        %v6476 = vrot.slane %v6462, %v6475
        %v6477 = vcombine.low %v6376, %v6384
        %v6478 = vcombine.high %v6376, %v6384
        %v6480 = vunpack.c.l.s4 1983009808
        %v6481 = vunpack.c.0.s8 %v6480
        %v6482 = vlaneseq
        %v6483 = vshrl.u32 %v6482, 7
        %v6484 = vsub.s32 %v6481, %v6483
        %v6485 = vrot.slane %v6477, %v6484
        %v6487 = vunpack.c.l.s4 1983009808
        %v6488 = vunpack.c.0.s8 %v6487
        %v6489 = vlaneseq
        %v6490 = vshrl.u32 %v6489, 7
        %v6491 = vsub.s32 %v6488, %v6490
        %v6492 = vrot.slane %v6478, %v6491
        %v6493 = vcombine.low %v6469, %v6485
        %v6494 = vcombine.high %v6469, %v6485
        %v6496 = vunpack.c.l.s4 1934713408
        %v6497 = vunpack.c.0.s8 %v6496
        %v6498 = vlaneseq
        %v6499 = vshrl.u32 %v6498, 7
        %v6500 = vsub.s32 %v6497, %v6499
        %v6501 = vrot.slane %v6493, %v6500
        %v6503 = vunpack.c.l.s4 1934713408
        %v6504 = vunpack.c.0.s8 %v6503
        %v6505 = vlaneseq
        %v6506 = vshrl.u32 %v6505, 7
        %v6507 = vsub.s32 %v6504, %v6506
        %v6508 = vrot.slane %v6494, %v6507
        %v6509 = vcombine.low %v6476, %v6492
        %v6510 = vcombine.high %v6476, %v6492
        %v6512 = vunpack.c.l.s4 1934713408
        %v6513 = vunpack.c.0.s8 %v6512
        %v6514 = vlaneseq
        %v6515 = vshrl.u32 %v6514, 7
        %v6516 = vsub.s32 %v6513, %v6515
        %v6517 = vrot.slane %v6509, %v6516
        %v6519 = vunpack.c.l.s4 1934713408
        %v6520 = vunpack.c.0.s8 %v6519
        %v6521 = vlaneseq
        %v6522 = vshrl.u32 %v6521, 7
        %v6523 = vsub.s32 %v6520, %v6522
        %v6524 = vrot.slane %v6510, %v6523
        %v6525 = vcombine.high %v6501, 0.0
        %v6526 = vcombine.high %v6508, 0.0
        %v6527 = vcombine.high %v6517, 0.0
        %v6528 = vcombine.high %v6524, 0.0
        %6530 = vrot.lane.b32.xlu0 %v6457, 16
        %v6531 = vpop.permute.xlu0 %6530
        %6534 = vrot.lane.b32.xlu0 %v6440, 32
        %v6535 = vpop.permute.xlu0 %6534
        %6538 = vrot.lane.b32.xlu0 %v6458, 48
        %v6539 = vpop.permute.xlu0 %6538
        %6542 = vrot.lane.b32.xlu0 %v6449, 64
        %v6543 = vpop.permute.xlu0 %6542
        %6546 = vrot.lane.b32.xlu0 %v6459, 80
        %v6547 = vpop.permute.xlu0 %6546
        %6550 = vrot.lane.b32.xlu0 %v6456, 96
        %v6551 = vpop.permute.xlu0 %6550
        %6554 = vrot.lane.b32.xlu0 %v6460, 112
        %v6555 = vpop.permute.xlu0 %6554
        %6558 = vrot.lane.b32.xlu0 %v6525, 16
        %v6559 = vpop.permute.xlu0 %6558
        %6562 = vrot.lane.b32.xlu0 %v6508, 32
        %v6563 = vpop.permute.xlu0 %6562
        %6566 = vrot.lane.b32.xlu0 %v6526, 48
        %v6567 = vpop.permute.xlu0 %6566
        %6570 = vrot.lane.b32.xlu0 %v6517, 64
        %v6571 = vpop.permute.xlu0 %6570
        %6574 = vrot.lane.b32.xlu0 %v6527, 80
        %v6575 = vpop.permute.xlu0 %6574
        %6578 = vrot.lane.b32.xlu0 %v6524, 96
        %v6579 = vpop.permute.xlu0 %6578
        %6582 = vrot.lane.b32.xlu0 %v6528, 112
        %v6583 = vpop.permute.xlu0 %6582
        %v6585 = vsel %vm1116, %v6433, %v6531
        %v6586 = vsel %vm1118, %v6585, %v6535
        %v6587 = vsel %vm1120, %v6586, %v6539
        %v6588 = vsel %vm476, %v6587, %v6543
        %v6589 = vsel %vm1123, %v6588, %v6547
        %v6590 = vsel %vm1125, %v6589, %v6551
        %v6591 = vsel %vm1127, %v6590, %v6555
        %v6592 = vsel %vm1116, %v6501, %v6559
        %v6593 = vsel %vm1118, %v6592, %v6563
        %v6594 = vsel %vm1120, %v6593, %v6567
        %v6595 = vsel %vm476, %v6594, %v6571
        %v6596 = vsel %vm1123, %v6595, %v6575
        %v6597 = vsel %vm1125, %v6596, %v6579
        %v6598 = vsel %vm1127, %v6597, %v6583
        %v6601 = vrot.slane %v4997, 4
        %v6602 = vrot.slane %v5004, 4
        %v6607 = vrot.slane %v5441, 4
        %v6608 = vrot.slane %v5448, 4
        %v6613 = vrot.slane %v5909, 4
        %v6614 = vrot.slane %v5916, 4
        %v6619 = vrot.slane %v6361, 4
        %v6620 = vrot.slane %v6368, 4
        %v6623 = vsel %vm4255, %v4759, %v6601
        %v6624 = vsel %vm4255, %v4766, %v6602
        %v6625 = vsel %vm4255, %v5227, %v6607
        %v6626 = vsel %vm4255, %v5234, %v6608
        %v6627 = vsel %vm4255, %v5679, %v6613
        %v6628 = vsel %vm4255, %v5686, %v6614
        %v6629 = vsel %vm4255, %v6123, %v6619
        %v6630 = vsel %vm4255, %v6130, %v6620
        %v6631 = vpack.c.bf16 %v6625, %v6623
        %v6632 = vpack.c.bf16 %v6626, %v6624
        %v6633 = vpack.c.bf16 %v6629, %v6627
        %v6634 = vpack.c.bf16 %v6630, %v6628
        %v6635 = vpack.c.bf16 %v6591, %v6591
        %v6636 = vpack.c.bf16 %v6598, %v6598
        %v6637 = vld [vmem:[%s6] sm:$0xf]
        %vm6638 = vcmask 293888
        %v6640 = vsel %vm6638, %v6637, 0
        %vm6642 = vcmask 1041408
        %v6644 = vsel %vm6642, %v6635, 0
        %v6647 = vsel %vm6642, %v6636, 0
        %6649 = vmatprep.subr.bf16.mxu0 %v6632
        %6650 = vmatpush1.bf16.msra.mxu0 %v6631
        %6651 = vmatprep.subr.bf16.mxu0 %v6634
        %6652 = vmatpush1.bf16.msra.mxu0 %v6633
        %6653 = vmatprep.subr.bf16.mxu0 %v6647
        %6654 = vmatpush1.bf16.msra.mxu0 %v6644
        %6655 = vmatprep.subr.bf16.mxu0 0
        %6656 = vmatpush1.bf16.msra.mxu0 0
        %6657 = vmatprep.subr.bf16.mxu0 0
        %6658 = vmatpush1.bf16.msra.mxu0 0
        %6659 = vmatprep.subr.bf16.mxu0 0
        %6660 = vmatpush1.bf16.msra.mxu0 0
        %6661 = vmatprep.subr.bf16.mxu0 0
        %6662 = vmatpush1.bf16.msra.mxu0 0
        %6663 = vmatprep.subr.bf16.mxu0 0
        %6664 = vmatpush1.bf16.msra.mxu0 0
        %6665 = vmatprep.subr.bf16.mxu0 0
        %6666 = vmatpush1.bf16.msra.mxu0 0
        %6667 = vmatprep.subr.bf16.mxu0 0
        %6668 = vmatpush1.bf16.msra.mxu0 0
        %6669 = vmatprep.subr.bf16.mxu0 0
        %6670 = vmatpush1.bf16.msra.mxu0 0
        %6671 = vmatprep.subr.bf16.mxu0 0
        %6672 = vmatpush1.bf16.msra.mxu0 0
        %6673 = vmatprep.subr.bf16.mxu0 0
        %6674 = vmatpush1.bf16.msra.mxu0 0
        %6675 = vmatprep.subr.bf16.mxu0 0
        %6676 = vmatpush1.bf16.msra.mxu0 0
        %6677 = vmatprep.subr.bf16.mxu0 0
        %6678 = vmatpush1.bf16.msra.mxu0 0
        %6679 = vmatprep.subr.bf16.mxu0 0
        %6680 = vmatpush1.bf16.msra.mxu0 0
        %6681 = vmatprep.mubr.bf16.mxu0 0
        %6682 = vmatmul.mubr.bf16.gmra.mrb[0].mxu0 %v6640
        %v6683 = vpop.f32.mrb[0].mxu0
        %v6684 = vadd.f32 0.0, %v6683
        %v6685 = vpop.f32.mrb[0].mxu0
        %v6686 = vadd.f32 0.0, %v6685
        %v6687 = vpop.f32.mrb[0].mxu0
        %v6688 = vpop.f32.mrb[0].mxu0
        %6689 = vdwg.mxu0
        %v6690 = vld [vmem:[%s7] sm:$0xff]
        %6692 = vset.pattern.permute.xlu0 0
        %6693 = vperm.xlu0 %6692, %v6690
        %v6694 = vpop.permute.xlu0 %6693
        %v6696 = vmul.f32 %v6684, %v6694
        %v6697 = vmul.f32 %v6686, %v6694
        %v6698 = vld [vmem:[%s8] sm:$0xff]
        %6700 = vset.pattern.permute.xlu0 0
        %6701 = vperm.xlu0 %6700, %v6698
        %v6702 = vpop.permute.xlu0 %6701
        %v6704 = vadd.f32 %v6696, %v6702
        %v6705 = vadd.f32 %v6697, %v6702
        %v6706 = vmax.f32 %v6704, 0.0
        %v6707 = vmax.f32 %v6705, 0.0
        %6708 = vst [vmem:[%s378] sm:$0xff] %v6706
        %6709 = vst [vmem:[%s378 + $0x8] sm:$0xff] %v6707
        %s6710 = sand.u32 %s234, 1
        %s6711 = scalar_lea.sflag [#allocation6], %s6710
        %s6712 = sand.u32 %s234, 1
        %s6713 = smul.addr %s6712, 16
        %s6714 = scalar_lea.vmem [#allocation9], %s6713
        // Predicated region
        $region65: #{tpu_custom_call.1} parent=55 // pred_check
          %p6715 = pneg %p244
        $region66: #{tpu_custom_call.1} parent=55 // pred_check_branch
          %6717 = sbr.rel (%p6715) target = $region68
        $region67: #{tpu_custom_call.1} parent=55 // pred_region
          %s6719 = ssub.s32 256, 256
          %6720 = vsyncadd %s6711, %s6719
          %s6721 = smul.addr %s27, 2
          %s6722 = smul.addr %s6721, 128
          %s6723 = scalar_lea.hbm %s9, %s6722
          %s6725 = sshll.u32 %s6714, 4
          %s6726 = int_to_ptr.vmem [resolvable:$true] %s6725
          %6728 = dma.vmem_to_hbm [thread:$0]  %s6726, 256, %s6723, %s6711
        $region68: #{tpu_custom_call.1} parent=55 // pred_fallthru
          _
      $region56: #{tpu_custom_call.1} parent=5 // pred_fallthru
        _
      %p6729 = scmp.le.s32.totalorder 2, %s22
      // Predicated region
      $region69: #{tpu_custom_call.1} parent=5 // pred_check
        %p6730 = pneg %p6729
      $region70: #{tpu_custom_call.1} parent=5 // pred_check_branch
        %6732 = sbr.rel (%p6730) target = $region72
      $region71: #{tpu_custom_call.1} parent=5 // pred_region
        %s6733 = ssub.s32 %s22, 2
        // Predicated region
        $region73: #{tpu_custom_call.1} parent=71 // pred_check
          %p6734 = pneg %p250
        $region74: #{tpu_custom_call.1} parent=71 // pred_check_branch
          %6736 = sbr.rel (%p6734) target = $region76
        $region75: #{tpu_custom_call.1} parent=71 // pred_region
          %s6737 = sand.u32 %s235, 1
          %s6738 = scalar_lea.sflag [#allocation6], %s6737
          %s6739 = sand.u32 %s235, 1
          %s6740 = smul.addr %s6739, 16
          %s6741 = scalar_lea.vmem [#allocation9], %s6740
          %6742 = dma.done %s6738, 256
        $region76: #{tpu_custom_call.1} parent=71 // pred_fallthru
          _
      $region72: #{tpu_custom_call.1} parent=5 // pred_fallthru
        _
    $region6: #{tpu_custom_call.1} parent=1 // loop_footer
      %s26 = sadd.s32 1, %s22
    $region7: #{tpu_custom_call.1} parent=1 // loop_footer_branch
      %21 = sbr.rel target = $region3
    $region8: #{tpu_custom_call.1} parent=1 // loop_exit
      _
    %6743 = vsyncpa [#allocation5], 1
    %s6744 = scalar_lea.sflag [#allocation5], 1
    %6745 = vsyncpa %s6744, 1
    %6746 = vsyncpa [#allocation8], 1
    %6747 = vsyncpa [#allocation6], 1
    %s6748 = scalar_lea.sflag [#allocation6], 1
    %6749 = vsyncpa %s6748, 1

</llo_original>
